<compile_context>
chip_gen: v7x
topology: tpu7x:2x2x1
jax: 0.10.0
libtpu: 0.0.40
codegen_flags: <defaults>
</compile_context>

<pallas_src>
import functools

import jax
import jax.numpy as jnp
from jax.experimental import pallas as pl
from jax.experimental.pallas import tpu as pltpu


# Matmul-operand precision. bf16 operands + fp32 accumulate is the native MXU
# datapath on v6e/v7x (fine on v5e too). Set to jnp.float32 for exact fp32
# parity with the PyTorch module; all gate math / hidden state stays fp32.
MATMUL_DTYPE = jnp.bfloat16


# -----------------------------------------------------------------------------
# Pallas kernel: one full bidirectional GRU layer (input projection hoisted,
# in-kernel unrolled recurrence over time, both directions fused).
# -----------------------------------------------------------------------------
def _bigru_layer_kernel(x_ref, wif_ref, wib_ref, whf_ref, whb_ref,
                        bif_ref, bib_ref, bhf_ref, bhb_ref,
                        out_ref, *, T, B):
    """Shapes (all blocks = full arrays, resident in VMEM):

    x_ref   : (T*B, D)  f32            time-major; rows t*B..t*B+B-1 = step t
    w*_ref  : (D, 3H) / (H, 3H)  MATMUL_DTYPE  (transposed vs PyTorch; r|z|n)
    b*_ref  : (1, 3H)   f32
    out_ref : (T*B, 2H) f32            fwd hidden in [:, :H], bwd in [:, H:2H]
    """
    H = whf_ref.shape[0]

    # cast to MXU operand dtype in-kernel (saves an XLA pass per layer)
    x = x_ref[...].astype(MATMUL_DTYPE)                       # (T*B, D)

    # ---- hoisted input projection: one big MXU GEMM per direction ----------
    gi_f = jnp.dot(x, wif_ref[...],
                   preferred_element_type=jnp.float32) + bif_ref[...]
    gi_b = jnp.dot(x, wib_ref[...],
                   preferred_element_type=jnp.float32) + bib_ref[...]

    # hoist weight / bias loads (and the bias broadcast) out of the recurrence
    whf = whf_ref[...]
    whb = whb_ref[...]
    bhf = jnp.broadcast_to(bhf_ref[...], (B, 3 * H))
    bhb = jnp.broadcast_to(bhb_ref[...], (B, 3 * H))

    def cell(gi, gh, h):
        # PyTorch GRU cell, gate order r, z, n; gi/gh already include biases.
        # NOTE: sub-128-lane gate slices are fine at H=32; pad/lane-align gates
        # for production H.
        r = jax.nn.sigmoid(gi[:, 0:H] + gh[:, 0:H])
        z = jax.nn.sigmoid(gi[:, H:2 * H] + gh[:, H:2 * H])
        n = jnp.tanh(gi[:, 2 * H:3 * H] + r * gh[:, 2 * H:3 * H])
        return (1.0 - z) * n + z * h

    h_f = jnp.zeros((B, H), jnp.float32)
    h_b = jnp.zeros((B, H), jnp.float32)

    # ---- serial recurrence: only h @ W_hh remains on the critical chain ----
    # Fully unrolled (static T); both directions advance together (independent
    # -> ILP across MXU/EUP/VPU), the backward direction walking time in
    # reverse (no HBM reversal copies).
    for s in range(T):
        tb = T - 1 - s
        gif_s = gi_f[s * B:(s + 1) * B, :]
        gib_s = gi_b[tb * B:(tb + 1) * B, :]

        gh_f = jnp.dot(h_f.astype(MATMUL_DTYPE), whf,
                       preferred_element_type=jnp.float32) + bhf
        gh_b = jnp.dot(h_b.astype(MATMUL_DTYPE), whb,
                       preferred_element_type=jnp.float32) + bhb

        h_f = cell(gif_s, gh_f, h_f)
        h_b = cell(gib_s, gh_b, h_b)

        # static VMEM stores into the single fused output slab; the whole
        # (T*B, 2H) block is written back to HBM once at the end.
        out_ref[s * B:(s + 1) * B, 0:H] = h_f
        out_ref[tb * B:(tb + 1) * B, H:2 * H] = h_b


def _fullspec(shape):
    return pl.BlockSpec(shape, lambda i: (0, 0))


def gru_bidir_layer(x2d, p, T, B):
    """x2d: (T*B, D) f32 time-major -> (T*B, 2H) f32 time-major (fwd ++ bwd)."""
    TB, D = x2d.shape
    H = p["w_hh_f"].shape[0]
    cast = lambda w: w.astype(MATMUL_DTYPE)

    kernel = functools.partial(_bigru_layer_kernel, T=T, B=B)

    return pl.pallas_call(
        kernel,
        out_shape=jax.ShapeDtypeStruct((TB, 2 * H), jnp.float32),
        grid_spec=pltpu.PrefetchScalarGridSpec(
            num_scalar_prefetch=0,
            grid=(1,),
            in_specs=[
                _fullspec((TB, D)),                            # x (time-major)
                _fullspec((D, 3 * H)), _fullspec((D, 3 * H)),  # W_ih fwd/bwd
                _fullspec((H, 3 * H)), _fullspec((H, 3 * H)),  # W_hh fwd/bwd
                _fullspec((1, 3 * H)), _fullspec((1, 3 * H)),  # b_ih fwd/bwd
                _fullspec((1, 3 * H)), _fullspec((1, 3 * H)),  # b_hh fwd/bwd
            ],
            out_specs=_fullspec((TB, 2 * H)),
        ),
        compiler_params=pltpu.CompilerParams(
            dimension_semantics=("arbitrary",)),
    )(x2d,
      cast(p["w_ih_f"]), cast(p["w_ih_b"]),
      cast(p["w_hh_f"]), cast(p["w_hh_b"]),
      p["b_ih_f"], p["b_ih_b"], p["b_hh_f"], p["b_hh_b"])


# -----------------------------------------------------------------------------
# Full forward pass (use_char=False, gru, bidirectional, 2 layers, eval mode)
# -----------------------------------------------------------------------------
def rnns_forward(token_ids, params):
    """token_ids: (B, T) int32 -> logits (B, T, output_dim)."""
    B, T = token_ids.shape
    emb = params["embedding"][token_ids]            # (B, T, E); word dropout=id
    # one transpose in, one transpose out; everything in between is 2-D
    # time-major (T*B, feat) flowing kernel -> kernel with no XLA reshuffles.
    x = jnp.transpose(emb, (1, 0, 2)).reshape(T * B, -1)
    for p in params["gru"]:
        x = gru_bidir_layer(x, p, T, B)             # (T*B, 2H); rnn dropout=id
    out = jnp.transpose(x.reshape(T, B, -1), (1, 0, 2))   # (B, T, 2H)
    # Final 2H -> 5 projection in plain XLA (see header note).
    return out @ params["lin_w"] + params["lin_b"]


# -----------------------------------------------------------------------------
# Deterministic parameter construction (shapes from the module's __init__)
# -----------------------------------------------------------------------------
def make_params(key, vocab_size, embedding_dim, hidden_dim, num_layers,
                output_dim):
    keys = jax.random.split(key, 64)
    ki = iter(keys)
    scale = 1.0 / jnp.sqrt(hidden_dim)

    def u(k, shape):
        return jax.random.uniform(k, shape, jnp.float32, -scale, scale)

    params = {"gru": []}
    params["embedding"] = jax.random.normal(
        next(ki), (vocab_size, embedding_dim), jnp.float32) * 0.1

    in_dim = embedding_dim
    for _ in range(num_layers):
        layer = {}
        for tag in ("f", "b"):
            # PyTorch stores (3H, in_dim)/(3H, H); we keep them transposed so
            # kernels do x @ W directly. Gate order r,z,n matches PyTorch.
            layer[f"w_ih_{tag}"] = u(next(ki), (in_dim, 3 * hidden_dim))
            layer[f"w_hh_{tag}"] = u(next(ki), (hidden_dim, 3 * hidden_dim))
            layer[f"b_ih_{tag}"] = u(next(ki), (1, 3 * hidden_dim))
            layer[f"b_hh_{tag}"] = u(next(ki), (1, 3 * hidden_dim))
        params["gru"].append(layer)
        in_dim = 2 * hidden_dim  # bidirectional

    params["lin_w"] = u(next(ki), (2 * hidden_dim, output_dim))
    params["lin_b"] = u(next(ki), (1, output_dim))
    return params


# -----------------------------------------------------------------------------
# Pure-JAX reference (same bf16-operand / fp32-accumulate matmul convention)
# -----------------------------------------------------------------------------
def _dot_mm(a, b):
    return jnp.dot(a.astype(MATMUL_DTYPE), b.astype(MATMUL_DTYPE),
                   preferred_element_type=jnp.float32)


def _gru_dir_ref(x_tbd, w_ih, w_hh, b_ih, b_hh):
    _, B, _ = x_tbd.shape
    H = w_hh.shape[0]

    def step(h, x_t):
        gi = _dot_mm(x_t, w_ih) + b_ih
        gh = _dot_mm(h, w_hh) + b_hh
        r = jax.nn.sigmoid(gi[:, :H] + gh[:, :H])
        z = jax.nn.sigmoid(gi[:, H:2 * H] + gh[:, H:2 * H])
        n = jnp.tanh(gi[:, 2 * H:] + r * gh[:, 2 * H:])
        h_new = (1.0 - z) * n + z * h
        return h_new, h_new

    _, hs = jax.lax.scan(step, jnp.zeros((B, H), jnp.float32), x_tbd)
    return hs


def rnns_forward_ref(token_ids, params):
    emb = params["embedding"][token_ids]
    x = jnp.transpose(emb, (1, 0, 2))
    for p in params["gru"]:
        hf = _gru_dir_ref(x, p["w_ih_f"], p["w_hh_f"], p["b_ih_f"], p["b_hh_f"])
        hb = _gru_dir_ref(x[::-1], p["w_ih_b"], p["w_hh_b"],
                          p["b_ih_b"], p["b_hh_b"])[::-1]
        x = jnp.concatenate([hf, hb], axis=-1)
    o = jnp.transpose(x, (1, 0, 2))
    return o @ params["lin_w"] + params["lin_b"]


if __name__ == "__main__":
    # small shapes consistent with the module
    VOCAB = 50
    EMB_DIM = 32
    HID_DIM = 32
    NUM_LAYERS = 2
    OUT_DIM = 5          # encoding == 'BIO'
    B, T = 2, 8

    key = jax.random.PRNGKey(0)
    k_params, k_ids = jax.random.split(key)

    params = make_params(k_params, VOCAB, EMB_DIM, HID_DIM, NUM_LAYERS, OUT_DIM)
    token_ids = jax.random.randint(k_ids, (B, T), 0, VOCAB, dtype=jnp.int32)

    logits = jax.block_until_ready(jax.jit(rnns_forward)(token_ids, params))
    assert logits.shape == (B, T, OUT_DIM), logits.shape

    ref = jax.block_until_ready(jax.jit(rnns_forward_ref)(token_ids, params))

    import numpy as np
    np.testing.assert_allclose(np.asarray(logits), np.asarray(ref),
                               rtol=2e-3, atol=2e-3)

    print("KERNEL_OK")
</pallas_src>

<mosaic_0001>
module attributes {stable_mosaic.version = 11 : i64} {
  func.func @_bigru_layer_kernel(%arg0: i32, %arg1: memref<16x32xf32, #tpu.memory_space<vmem>>, %arg2: memref<32x96xbf16, #tpu.memory_space<vmem>>, %arg3: memref<32x96xbf16, #tpu.memory_space<vmem>>, %arg4: memref<32x96xbf16, #tpu.memory_space<vmem>>, %arg5: memref<32x96xbf16, #tpu.memory_space<vmem>>, %arg6: memref<1x96xf32, #tpu.memory_space<vmem>>, %arg7: memref<1x96xf32, #tpu.memory_space<vmem>>, %arg8: memref<1x96xf32, #tpu.memory_space<vmem>>, %arg9: memref<1x96xf32, #tpu.memory_space<vmem>>, %arg10: memref<16x64xf32, #tpu.memory_space<vmem>>) attributes {dimension_semantics = [#tpu.dimension_semantics<arbitrary>], iteration_bounds = array<i64: 1>, scalar_prefetch = 0 : i64, scratch_operands = 0 : i64, tpu.core_type = #tpu.core_type<tc>, window_params = [{pipeline_mode = #tpu.pipeline_mode<synchronous>, transform_indices = @transform_0, window_bounds = array<i64: 16, 32>}, {pipeline_mode = #tpu.pipeline_mode<synchronous>, transform_indices = @transform_1, window_bounds = array<i64: 32, 96>}, {pipeline_mode = #tpu.pipeline_mode<synchronous>, transform_indices = @transform_2, window_bounds = array<i64: 32, 96>}, {pipeline_mode = #tpu.pipeline_mode<synchronous>, transform_indices = @transform_3, window_bounds = array<i64: 32, 96>}, {pipeline_mode = #tpu.pipeline_mode<synchronous>, transform_indices = @transform_4, window_bounds = array<i64: 32, 96>}, {pipeline_mode = #tpu.pipeline_mode<synchronous>, transform_indices = @transform_5, window_bounds = array<i64: 1, 96>}, {pipeline_mode = #tpu.pipeline_mode<synchronous>, transform_indices = @transform_6, window_bounds = array<i64: 1, 96>}, {pipeline_mode = #tpu.pipeline_mode<synchronous>, transform_indices = @transform_7, window_bounds = array<i64: 1, 96>}, {pipeline_mode = #tpu.pipeline_mode<synchronous>, transform_indices = @transform_8, window_bounds = array<i64: 1, 96>}, {pipeline_mode = #tpu.pipeline_mode<synchronous>, transform_indices = @transform_9, window_bounds = array<i64: 16, 64>}]} {
    %c0 = arith.constant 0 : index
    %c0_0 = arith.constant 0 : index
    %0 = vector.load %arg1[%c0, %c0_0] : memref<16x32xf32, #tpu.memory_space<vmem>>, vector<16x32xf32>
    %1 = arith.truncf %0 : vector<16x32xf32> to vector<16x32xbf16>
    %c0_1 = arith.constant 0 : index
    %c0_2 = arith.constant 0 : index
    %2 = vector.load %arg2[%c0_1, %c0_2] : memref<32x96xbf16, #tpu.memory_space<vmem>>, vector<32x96xbf16>
    %cst = arith.constant dense<0.000000e+00> : vector<16x96xf32>
    %3 = tpu.matmul %1, %2, %cst {dimension_numbers = #tpu.dot_dimension_numbers<[1], [0], [0], [1], [0, 0, 1, 1], [], []>} : vector<16x32xbf16>, vector<32x96xbf16>, vector<16x96xf32> -> vector<16x96xf32>
    %c0_3 = arith.constant 0 : index
    %c0_4 = arith.constant 0 : index
    %4 = vector.load %arg6[%c0_3, %c0_4] : memref<1x96xf32, #tpu.memory_space<vmem>>, vector<1x96xf32>
    %5 = vector.broadcast %4 : vector<1x96xf32> to vector<16x96xf32>
    %6 = arith.addf %3, %5 : vector<16x96xf32>
    %c0_5 = arith.constant 0 : index
    %c0_6 = arith.constant 0 : index
    %7 = vector.load %arg3[%c0_5, %c0_6] : memref<32x96xbf16, #tpu.memory_space<vmem>>, vector<32x96xbf16>
    %cst_7 = arith.constant dense<0.000000e+00> : vector<16x96xf32>
    %8 = tpu.matmul %1, %7, %cst_7 {dimension_numbers = #tpu.dot_dimension_numbers<[1], [0], [0], [1], [0, 0, 1, 1], [], []>} : vector<16x32xbf16>, vector<32x96xbf16>, vector<16x96xf32> -> vector<16x96xf32>
    %c0_8 = arith.constant 0 : index
    %c0_9 = arith.constant 0 : index
    %9 = vector.load %arg7[%c0_8, %c0_9] : memref<1x96xf32, #tpu.memory_space<vmem>>, vector<1x96xf32>
    %10 = vector.broadcast %9 : vector<1x96xf32> to vector<16x96xf32>
    %11 = arith.addf %8, %10 : vector<16x96xf32>
    %c0_10 = arith.constant 0 : index
    %c0_11 = arith.constant 0 : index
    %12 = vector.load %arg4[%c0_10, %c0_11] : memref<32x96xbf16, #tpu.memory_space<vmem>>, vector<32x96xbf16>
    %c0_12 = arith.constant 0 : index
    %c0_13 = arith.constant 0 : index
    %13 = vector.load %arg5[%c0_12, %c0_13] : memref<32x96xbf16, #tpu.memory_space<vmem>>, vector<32x96xbf16>
    %c0_14 = arith.constant 0 : index
    %c0_15 = arith.constant 0 : index
    %14 = vector.load %arg8[%c0_14, %c0_15] : memref<1x96xf32, #tpu.memory_space<vmem>>, vector<1x96xf32>
    %15 = vector.shape_cast %14 : vector<1x96xf32> to vector<1x96xf32>
    %16 = vector.broadcast %15 : vector<1x96xf32> to vector<2x96xf32>
    %c0_16 = arith.constant 0 : index
    %c0_17 = arith.constant 0 : index
    %17 = vector.load %arg9[%c0_16, %c0_17] : memref<1x96xf32, #tpu.memory_space<vmem>>, vector<1x96xf32>
    %18 = vector.shape_cast %17 : vector<1x96xf32> to vector<1x96xf32>
    %19 = vector.broadcast %18 : vector<1x96xf32> to vector<2x96xf32>
    %cst_18 = arith.constant 0.000000e+00 : f32
    %20 = vector.broadcast %cst_18 : f32 to vector<2x32xf32>
    %cst_19 = arith.constant 0.000000e+00 : f32
    %21 = vector.broadcast %cst_19 : f32 to vector<2x32xf32>
    %22 = vector.extract_strided_slice %6 {offsets = [0, 0], sizes = [2, 96], strides = [1, 1]} : vector<16x96xf32> to vector<2x96xf32>
    %23 = vector.extract_strided_slice %11 {offsets = [14, 0], sizes = [2, 96], strides = [1, 1]} : vector<16x96xf32> to vector<2x96xf32>
    %24 = arith.truncf %20 : vector<2x32xf32> to vector<2x32xbf16>
    %cst_20 = arith.constant dense<0.000000e+00> : vector<2x96xf32>
    %25 = tpu.matmul %24, %12, %cst_20 {dimension_numbers = #tpu.dot_dimension_numbers<[1], [0], [0], [1], [0, 0, 1, 1], [], []>} : vector<2x32xbf16>, vector<32x96xbf16>, vector<2x96xf32> -> vector<2x96xf32>
    %26 = arith.addf %25, %16 : vector<2x96xf32>
    %27 = arith.truncf %21 : vector<2x32xf32> to vector<2x32xbf16>
    %cst_21 = arith.constant dense<0.000000e+00> : vector<2x96xf32>
    %28 = tpu.matmul %27, %13, %cst_21 {dimension_numbers = #tpu.dot_dimension_numbers<[1], [0], [0], [1], [0, 0, 1, 1], [], []>} : vector<2x32xbf16>, vector<32x96xbf16>, vector<2x96xf32> -> vector<2x96xf32>
    %29 = arith.addf %28, %19 : vector<2x96xf32>
    %30 = vector.extract_strided_slice %22 {offsets = [0, 0], sizes = [2, 32], strides = [1, 1]} : vector<2x96xf32> to vector<2x32xf32>
    %31 = vector.extract_strided_slice %26 {offsets = [0, 0], sizes = [2, 32], strides = [1, 1]} : vector<2x96xf32> to vector<2x32xf32>
    %32 = arith.addf %30, %31 : vector<2x32xf32>
    %33 = arith.negf %32 : vector<2x32xf32>
    %34 = math.exp %33 : vector<2x32xf32>
    %cst_22 = arith.constant 1.000000e+00 : f32
    %35 = vector.broadcast %cst_22 : f32 to vector<2x32xf32>
    %36 = arith.addf %35, %34 : vector<2x32xf32>
    %37 = arith.divf %35, %36 : vector<2x32xf32>
    %38 = vector.extract_strided_slice %22 {offsets = [0, 32], sizes = [2, 32], strides = [1, 1]} : vector<2x96xf32> to vector<2x32xf32>
    %39 = vector.extract_strided_slice %26 {offsets = [0, 32], sizes = [2, 32], strides = [1, 1]} : vector<2x96xf32> to vector<2x32xf32>
    %40 = arith.addf %38, %39 : vector<2x32xf32>
    %41 = arith.negf %40 : vector<2x32xf32>
    %42 = math.exp %41 : vector<2x32xf32>
    %cst_23 = arith.constant 1.000000e+00 : f32
    %43 = vector.broadcast %cst_23 : f32 to vector<2x32xf32>
    %44 = arith.addf %43, %42 : vector<2x32xf32>
    %45 = arith.divf %43, %44 : vector<2x32xf32>
    %46 = vector.extract_strided_slice %22 {offsets = [0, 64], sizes = [2, 32], strides = [1, 1]} : vector<2x96xf32> to vector<2x32xf32>
    %47 = vector.extract_strided_slice %26 {offsets = [0, 64], sizes = [2, 32], strides = [1, 1]} : vector<2x96xf32> to vector<2x32xf32>
    %48 = arith.mulf %37, %47 : vector<2x32xf32>
    %49 = arith.addf %46, %48 : vector<2x32xf32>
    %50 = math.tanh %49 : vector<2x32xf32>
    %cst_24 = arith.constant 1.000000e+00 : f32
    %51 = vector.broadcast %cst_24 : f32 to vector<2x32xf32>
    %52 = arith.subf %51, %45 : vector<2x32xf32>
    %53 = arith.mulf %52, %50 : vector<2x32xf32>
    %54 = arith.mulf %45, %20 : vector<2x32xf32>
    %55 = arith.addf %53, %54 : vector<2x32xf32>
    %56 = vector.extract_strided_slice %23 {offsets = [0, 0], sizes = [2, 32], strides = [1, 1]} : vector<2x96xf32> to vector<2x32xf32>
    %57 = vector.extract_strided_slice %29 {offsets = [0, 0], sizes = [2, 32], strides = [1, 1]} : vector<2x96xf32> to vector<2x32xf32>
    %58 = arith.addf %56, %57 : vector<2x32xf32>
    %59 = arith.negf %58 : vector<2x32xf32>
    %60 = math.exp %59 : vector<2x32xf32>
    %cst_25 = arith.constant 1.000000e+00 : f32
    %61 = vector.broadcast %cst_25 : f32 to vector<2x32xf32>
    %62 = arith.addf %61, %60 : vector<2x32xf32>
    %63 = arith.divf %61, %62 : vector<2x32xf32>
    %64 = vector.extract_strided_slice %23 {offsets = [0, 32], sizes = [2, 32], strides = [1, 1]} : vector<2x96xf32> to vector<2x32xf32>
    %65 = vector.extract_strided_slice %29 {offsets = [0, 32], sizes = [2, 32], strides = [1, 1]} : vector<2x96xf32> to vector<2x32xf32>
    %66 = arith.addf %64, %65 : vector<2x32xf32>
    %67 = arith.negf %66 : vector<2x32xf32>
    %68 = math.exp %67 : vector<2x32xf32>
    %cst_26 = arith.constant 1.000000e+00 : f32
    %69 = vector.broadcast %cst_26 : f32 to vector<2x32xf32>
    %70 = arith.addf %69, %68 : vector<2x32xf32>
    %71 = arith.divf %69, %70 : vector<2x32xf32>
    %72 = vector.extract_strided_slice %23 {offsets = [0, 64], sizes = [2, 32], strides = [1, 1]} : vector<2x96xf32> to vector<2x32xf32>
    %73 = vector.extract_strided_slice %29 {offsets = [0, 64], sizes = [2, 32], strides = [1, 1]} : vector<2x96xf32> to vector<2x32xf32>
    %74 = arith.mulf %63, %73 : vector<2x32xf32>
    %75 = arith.addf %72, %74 : vector<2x32xf32>
    %76 = math.tanh %75 : vector<2x32xf32>
    %cst_27 = arith.constant 1.000000e+00 : f32
    %77 = vector.broadcast %cst_27 : f32 to vector<2x32xf32>
    %78 = arith.subf %77, %71 : vector<2x32xf32>
    %79 = arith.mulf %78, %76 : vector<2x32xf32>
    %80 = arith.mulf %71, %21 : vector<2x32xf32>
    %81 = arith.addf %79, %80 : vector<2x32xf32>
    %c0_28 = arith.constant 0 : index
    %c0_29 = arith.constant 0 : index
    %82 = vector.load %arg10[%c0_28, %c0_29] : memref<16x64xf32, #tpu.memory_space<vmem>>, vector<2x32xf32>
    tpu.vector_store %arg10[%c0_28, %c0_29], %55 {strides = array<i32>} : memref<16x64xf32, #tpu.memory_space<vmem>>, vector<2x32xf32>,
    %c14 = arith.constant 14 : index
    %c32 = arith.constant 32 : index
    %83 = vector.load %arg10[%c14, %c32] : memref<16x64xf32, #tpu.memory_space<vmem>>, vector<2x32xf32>
    tpu.vector_store %arg10[%c14, %c32], %81 {strides = array<i32>} : memref<16x64xf32, #tpu.memory_space<vmem>>, vector<2x32xf32>,
    %84 = vector.extract_strided_slice %6 {offsets = [2, 0], sizes = [2, 96], strides = [1, 1]} : vector<16x96xf32> to vector<2x96xf32>
    %85 = vector.extract_strided_slice %11 {offsets = [12, 0], sizes = [2, 96], strides = [1, 1]} : vector<16x96xf32> to vector<2x96xf32>
    %86 = arith.truncf %55 : vector<2x32xf32> to vector<2x32xbf16>
    %cst_30 = arith.constant dense<0.000000e+00> : vector<2x96xf32>
    %87 = tpu.matmul %86, %12, %cst_30 {dimension_numbers = #tpu.dot_dimension_numbers<[1], [0], [0], [1], [0, 0, 1, 1], [], []>} : vector<2x32xbf16>, vector<32x96xbf16>, vector<2x96xf32> -> vector<2x96xf32>
    %88 = arith.addf %87, %16 : vector<2x96xf32>
    %89 = arith.truncf %81 : vector<2x32xf32> to vector<2x32xbf16>
    %cst_31 = arith.constant dense<0.000000e+00> : vector<2x96xf32>
    %90 = tpu.matmul %89, %13, %cst_31 {dimension_numbers = #tpu.dot_dimension_numbers<[1], [0], [0], [1], [0, 0, 1, 1], [], []>} : vector<2x32xbf16>, vector<32x96xbf16>, vector<2x96xf32> -> vector<2x96xf32>
    %91 = arith.addf %90, %19 : vector<2x96xf32>
    %92 = vector.extract_strided_slice %84 {offsets = [0, 0], sizes = [2, 32], strides = [1, 1]} : vector<2x96xf32> to vector<2x32xf32>
    %93 = vector.extract_strided_slice %88 {offsets = [0, 0], sizes = [2, 32], strides = [1, 1]} : vector<2x96xf32> to vector<2x32xf32>
    %94 = arith.addf %92, %93 : vector<2x32xf32>
    %95 = arith.negf %94 : vector<2x32xf32>
    %96 = math.exp %95 : vector<2x32xf32>
    %cst_32 = arith.constant 1.000000e+00 : f32
    %97 = vector.broadcast %cst_32 : f32 to vector<2x32xf32>
    %98 = arith.addf %97, %96 : vector<2x32xf32>
    %99 = arith.divf %97, %98 : vector<2x32xf32>
    %100 = vector.extract_strided_slice %84 {offsets = [0, 32], sizes = [2, 32], strides = [1, 1]} : vector<2x96xf32> to vector<2x32xf32>
    %101 = vector.extract_strided_slice %88 {offsets = [0, 32], sizes = [2, 32], strides = [1, 1]} : vector<2x96xf32> to vector<2x32xf32>
    %102 = arith.addf %100, %101 : vector<2x32xf32>
    %103 = arith.negf %102 : vector<2x32xf32>
    %104 = math.exp %103 : vector<2x32xf32>
    %cst_33 = arith.constant 1.000000e+00 : f32
    %105 = vector.broadcast %cst_33 : f32 to vector<2x32xf32>
    %106 = arith.addf %105, %104 : vector<2x32xf32>
    %107 = arith.divf %105, %106 : vector<2x32xf32>
    %108 = vector.extract_strided_slice %84 {offsets = [0, 64], sizes = [2, 32], strides = [1, 1]} : vector<2x96xf32> to vector<2x32xf32>
    %109 = vector.extract_strided_slice %88 {offsets = [0, 64], sizes = [2, 32], strides = [1, 1]} : vector<2x96xf32> to vector<2x32xf32>
    %110 = arith.mulf %99, %109 : vector<2x32xf32>
    %111 = arith.addf %108, %110 : vector<2x32xf32>
    %112 = math.tanh %111 : vector<2x32xf32>
    %cst_34 = arith.constant 1.000000e+00 : f32
    %113 = vector.broadcast %cst_34 : f32 to vector<2x32xf32>
    %114 = arith.subf %113, %107 : vector<2x32xf32>
    %115 = arith.mulf %114, %112 : vector<2x32xf32>
    %116 = arith.mulf %107, %55 : vector<2x32xf32>
    %117 = arith.addf %115, %116 : vector<2x32xf32>
    %118 = vector.extract_strided_slice %85 {offsets = [0, 0], sizes = [2, 32], strides = [1, 1]} : vector<2x96xf32> to vector<2x32xf32>
    %119 = vector.extract_strided_slice %91 {offsets = [0, 0], sizes = [2, 32], strides = [1, 1]} : vector<2x96xf32> to vector<2x32xf32>
    %120 = arith.addf %118, %119 : vector<2x32xf32>
    %121 = arith.negf %120 : vector<2x32xf32>
    %122 = math.exp %121 : vector<2x32xf32>
    %cst_35 = arith.constant 1.000000e+00 : f32
    %123 = vector.broadcast %cst_35 : f32 to vector<2x32xf32>
    %124 = arith.addf %123, %122 : vector<2x32xf32>
    %125 = arith.divf %123, %124 : vector<2x32xf32>
    %126 = vector.extract_strided_slice %85 {offsets = [0, 32], sizes = [2, 32], strides = [1, 1]} : vector<2x96xf32> to vector<2x32xf32>
    %127 = vector.extract_strided_slice %91 {offsets = [0, 32], sizes = [2, 32], strides = [1, 1]} : vector<2x96xf32> to vector<2x32xf32>
    %128 = arith.addf %126, %127 : vector<2x32xf32>
    %129 = arith.negf %128 : vector<2x32xf32>
    %130 = math.exp %129 : vector<2x32xf32>
    %cst_36 = arith.constant 1.000000e+00 : f32
    %131 = vector.broadcast %cst_36 : f32 to vector<2x32xf32>
    %132 = arith.addf %131, %130 : vector<2x32xf32>
    %133 = arith.divf %131, %132 : vector<2x32xf32>
    %134 = vector.extract_strided_slice %85 {offsets = [0, 64], sizes = [2, 32], strides = [1, 1]} : vector<2x96xf32> to vector<2x32xf32>
    %135 = vector.extract_strided_slice %91 {offsets = [0, 64], sizes = [2, 32], strides = [1, 1]} : vector<2x96xf32> to vector<2x32xf32>
    %136 = arith.mulf %125, %135 : vector<2x32xf32>
    %137 = arith.addf %134, %136 : vector<2x32xf32>
    %138 = math.tanh %137 : vector<2x32xf32>
    %cst_37 = arith.constant 1.000000e+00 : f32
    %139 = vector.broadcast %cst_37 : f32 to vector<2x32xf32>
    %140 = arith.subf %139, %133 : vector<2x32xf32>
    %141 = arith.mulf %140, %138 : vector<2x32xf32>
    %142 = arith.mulf %133, %81 : vector<2x32xf32>
    %143 = arith.addf %141, %142 : vector<2x32xf32>
    %c2 = arith.constant 2 : index
    %c0_38 = arith.constant 0 : index
    %144 = vector.load %arg10[%c2, %c0_38] : memref<16x64xf32, #tpu.memory_space<vmem>>, vector<2x32xf32>
    tpu.vector_store %arg10[%c2, %c0_38], %117 {strides = array<i32>} : memref<16x64xf32, #tpu.memory_space<vmem>>, vector<2x32xf32>,
    %c12 = arith.constant 12 : index
    %c32_39 = arith.constant 32 : index
    %145 = vector.load %arg10[%c12, %c32_39] : memref<16x64xf32, #tpu.memory_space<vmem>>, vector<2x32xf32>
    tpu.vector_store %arg10[%c12, %c32_39], %143 {strides = array<i32>} : memref<16x64xf32, #tpu.memory_space<vmem>>, vector<2x32xf32>,
    %146 = vector.extract_strided_slice %6 {offsets = [4, 0], sizes = [2, 96], strides = [1, 1]} : vector<16x96xf32> to vector<2x96xf32>
    %147 = vector.extract_strided_slice %11 {offsets = [10, 0], sizes = [2, 96], strides = [1, 1]} : vector<16x96xf32> to vector<2x96xf32>
    %148 = arith.truncf %117 : vector<2x32xf32> to vector<2x32xbf16>
    %cst_40 = arith.constant dense<0.000000e+00> : vector<2x96xf32>
    %149 = tpu.matmul %148, %12, %cst_40 {dimension_numbers = #tpu.dot_dimension_numbers<[1], [0], [0], [1], [0, 0, 1, 1], [], []>} : vector<2x32xbf16>, vector<32x96xbf16>, vector<2x96xf32> -> vector<2x96xf32>
    %150 = arith.addf %149, %16 : vector<2x96xf32>
    %151 = arith.truncf %143 : vector<2x32xf32> to vector<2x32xbf16>
    %cst_41 = arith.constant dense<0.000000e+00> : vector<2x96xf32>
    %152 = tpu.matmul %151, %13, %cst_41 {dimension_numbers = #tpu.dot_dimension_numbers<[1], [0], [0], [1], [0, 0, 1, 1], [], []>} : vector<2x32xbf16>, vector<32x96xbf16>, vector<2x96xf32> -> vector<2x96xf32>
    %153 = arith.addf %152, %19 : vector<2x96xf32>
    %154 = vector.extract_strided_slice %146 {offsets = [0, 0], sizes = [2, 32], strides = [1, 1]} : vector<2x96xf32> to vector<2x32xf32>
    %155 = vector.extract_strided_slice %150 {offsets = [0, 0], sizes = [2, 32], strides = [1, 1]} : vector<2x96xf32> to vector<2x32xf32>
    %156 = arith.addf %154, %155 : vector<2x32xf32>
    %157 = arith.negf %156 : vector<2x32xf32>
    %158 = math.exp %157 : vector<2x32xf32>
    %cst_42 = arith.constant 1.000000e+00 : f32
    %159 = vector.broadcast %cst_42 : f32 to vector<2x32xf32>
    %160 = arith.addf %159, %158 : vector<2x32xf32>
    %161 = arith.divf %159, %160 : vector<2x32xf32>
    %162 = vector.extract_strided_slice %146 {offsets = [0, 32], sizes = [2, 32], strides = [1, 1]} : vector<2x96xf32> to vector<2x32xf32>
    %163 = vector.extract_strided_slice %150 {offsets = [0, 32], sizes = [2, 32], strides = [1, 1]} : vector<2x96xf32> to vector<2x32xf32>
    %164 = arith.addf %162, %163 : vector<2x32xf32>
    %165 = arith.negf %164 : vector<2x32xf32>
    %166 = math.exp %165 : vector<2x32xf32>
    %cst_43 = arith.constant 1.000000e+00 : f32
    %167 = vector.broadcast %cst_43 : f32 to vector<2x32xf32>
    %168 = arith.addf %167, %166 : vector<2x32xf32>
    %169 = arith.divf %167, %168 : vector<2x32xf32>
    %170 = vector.extract_strided_slice %146 {offsets = [0, 64], sizes = [2, 32], strides = [1, 1]} : vector<2x96xf32> to vector<2x32xf32>
    %171 = vector.extract_strided_slice %150 {offsets = [0, 64], sizes = [2, 32], strides = [1, 1]} : vector<2x96xf32> to vector<2x32xf32>
    %172 = arith.mulf %161, %171 : vector<2x32xf32>
    %173 = arith.addf %170, %172 : vector<2x32xf32>
    %174 = math.tanh %173 : vector<2x32xf32>
    %cst_44 = arith.constant 1.000000e+00 : f32
    %175 = vector.broadcast %cst_44 : f32 to vector<2x32xf32>
    %176 = arith.subf %175, %169 : vector<2x32xf32>
    %177 = arith.mulf %176, %174 : vector<2x32xf32>
    %178 = arith.mulf %169, %117 : vector<2x32xf32>
    %179 = arith.addf %177, %178 : vector<2x32xf32>
    %180 = vector.extract_strided_slice %147 {offsets = [0, 0], sizes = [2, 32], strides = [1, 1]} : vector<2x96xf32> to vector<2x32xf32>
    %181 = vector.extract_strided_slice %153 {offsets = [0, 0], sizes = [2, 32], strides = [1, 1]} : vector<2x96xf32> to vector<2x32xf32>
    %182 = arith.addf %180, %181 : vector<2x32xf32>
    %183 = arith.negf %182 : vector<2x32xf32>
    %184 = math.exp %183 : vector<2x32xf32>
    %cst_45 = arith.constant 1.000000e+00 : f32
    %185 = vector.broadcast %cst_45 : f32 to vector<2x32xf32>
    %186 = arith.addf %185, %184 : vector<2x32xf32>
    %187 = arith.divf %185, %186 : vector<2x32xf32>
    %188 = vector.extract_strided_slice %147 {offsets = [0, 32], sizes = [2, 32], strides = [1, 1]} : vector<2x96xf32> to vector<2x32xf32>
    %189 = vector.extract_strided_slice %153 {offsets = [0, 32], sizes = [2, 32], strides = [1, 1]} : vector<2x96xf32> to vector<2x32xf32>
    %190 = arith.addf %188, %189 : vector<2x32xf32>
    %191 = arith.negf %190 : vector<2x32xf32>
    %192 = math.exp %191 : vector<2x32xf32>
    %cst_46 = arith.constant 1.000000e+00 : f32
    %193 = vector.broadcast %cst_46 : f32 to vector<2x32xf32>
    %194 = arith.addf %193, %192 : vector<2x32xf32>
    %195 = arith.divf %193, %194 : vector<2x32xf32>
    %196 = vector.extract_strided_slice %147 {offsets = [0, 64], sizes = [2, 32], strides = [1, 1]} : vector<2x96xf32> to vector<2x32xf32>
    %197 = vector.extract_strided_slice %153 {offsets = [0, 64], sizes = [2, 32], strides = [1, 1]} : vector<2x96xf32> to vector<2x32xf32>
    %198 = arith.mulf %187, %197 : vector<2x32xf32>
    %199 = arith.addf %196, %198 : vector<2x32xf32>
    %200 = math.tanh %199 : vector<2x32xf32>
    %cst_47 = arith.constant 1.000000e+00 : f32
    %201 = vector.broadcast %cst_47 : f32 to vector<2x32xf32>
    %202 = arith.subf %201, %195 : vector<2x32xf32>
    %203 = arith.mulf %202, %200 : vector<2x32xf32>
    %204 = arith.mulf %195, %143 : vector<2x32xf32>
    %205 = arith.addf %203, %204 : vector<2x32xf32>
    %c4 = arith.constant 4 : index
    %c0_48 = arith.constant 0 : index
    %206 = vector.load %arg10[%c4, %c0_48] : memref<16x64xf32, #tpu.memory_space<vmem>>, vector<2x32xf32>
    tpu.vector_store %arg10[%c4, %c0_48], %179 {strides = array<i32>} : memref<16x64xf32, #tpu.memory_space<vmem>>, vector<2x32xf32>,
    %c10 = arith.constant 10 : index
    %c32_49 = arith.constant 32 : index
    %207 = vector.load %arg10[%c10, %c32_49] : memref<16x64xf32, #tpu.memory_space<vmem>>, vector<2x32xf32>
    tpu.vector_store %arg10[%c10, %c32_49], %205 {strides = array<i32>} : memref<16x64xf32, #tpu.memory_space<vmem>>, vector<2x32xf32>,
    %208 = vector.extract_strided_slice %6 {offsets = [6, 0], sizes = [2, 96], strides = [1, 1]} : vector<16x96xf32> to vector<2x96xf32>
    %209 = vector.extract_strided_slice %11 {offsets = [8, 0], sizes = [2, 96], strides = [1, 1]} : vector<16x96xf32> to vector<2x96xf32>
    %210 = arith.truncf %179 : vector<2x32xf32> to vector<2x32xbf16>
    %cst_50 = arith.constant dense<0.000000e+00> : vector<2x96xf32>
    %211 = tpu.matmul %210, %12, %cst_50 {dimension_numbers = #tpu.dot_dimension_numbers<[1], [0], [0], [1], [0, 0, 1, 1], [], []>} : vector<2x32xbf16>, vector<32x96xbf16>, vector<2x96xf32> -> vector<2x96xf32>
    %212 = arith.addf %211, %16 : vector<2x96xf32>
    %213 = arith.truncf %205 : vector<2x32xf32> to vector<2x32xbf16>
    %cst_51 = arith.constant dense<0.000000e+00> : vector<2x96xf32>
    %214 = tpu.matmul %213, %13, %cst_51 {dimension_numbers = #tpu.dot_dimension_numbers<[1], [0], [0], [1], [0, 0, 1, 1], [], []>} : vector<2x32xbf16>, vector<32x96xbf16>, vector<2x96xf32> -> vector<2x96xf32>
    %215 = arith.addf %214, %19 : vector<2x96xf32>
    %216 = vector.extract_strided_slice %208 {offsets = [0, 0], sizes = [2, 32], strides = [1, 1]} : vector<2x96xf32> to vector<2x32xf32>
    %217 = vector.extract_strided_slice %212 {offsets = [0, 0], sizes = [2, 32], strides = [1, 1]} : vector<2x96xf32> to vector<2x32xf32>
    %218 = arith.addf %216, %217 : vector<2x32xf32>
    %219 = arith.negf %218 : vector<2x32xf32>
    %220 = math.exp %219 : vector<2x32xf32>
    %cst_52 = arith.constant 1.000000e+00 : f32
    %221 = vector.broadcast %cst_52 : f32 to vector<2x32xf32>
    %222 = arith.addf %221, %220 : vector<2x32xf32>
    %223 = arith.divf %221, %222 : vector<2x32xf32>
    %224 = vector.extract_strided_slice %208 {offsets = [0, 32], sizes = [2, 32], strides = [1, 1]} : vector<2x96xf32> to vector<2x32xf32>
    %225 = vector.extract_strided_slice %212 {offsets = [0, 32], sizes = [2, 32], strides = [1, 1]} : vector<2x96xf32> to vector<2x32xf32>
    %226 = arith.addf %224, %225 : vector<2x32xf32>
    %227 = arith.negf %226 : vector<2x32xf32>
    %228 = math.exp %227 : vector<2x32xf32>
    %cst_53 = arith.constant 1.000000e+00 : f32
    %229 = vector.broadcast %cst_53 : f32 to vector<2x32xf32>
    %230 = arith.addf %229, %228 : vector<2x32xf32>
    %231 = arith.divf %229, %230 : vector<2x32xf32>
    %232 = vector.extract_strided_slice %208 {offsets = [0, 64], sizes = [2, 32], strides = [1, 1]} : vector<2x96xf32> to vector<2x32xf32>
    %233 = vector.extract_strided_slice %212 {offsets = [0, 64], sizes = [2, 32], strides = [1, 1]} : vector<2x96xf32> to vector<2x32xf32>
    %234 = arith.mulf %223, %233 : vector<2x32xf32>
    %235 = arith.addf %232, %234 : vector<2x32xf32>
    %236 = math.tanh %235 : vector<2x32xf32>
    %cst_54 = arith.constant 1.000000e+00 : f32
    %237 = vector.broadcast %cst_54 : f32 to vector<2x32xf32>
    %238 = arith.subf %237, %231 : vector<2x32xf32>
    %239 = arith.mulf %238, %236 : vector<2x32xf32>
    %240 = arith.mulf %231, %179 : vector<2x32xf32>
    %241 = arith.addf %239, %240 : vector<2x32xf32>
    %242 = vector.extract_strided_slice %209 {offsets = [0, 0], sizes = [2, 32], strides = [1, 1]} : vector<2x96xf32> to vector<2x32xf32>
    %243 = vector.extract_strided_slice %215 {offsets = [0, 0], sizes = [2, 32], strides = [1, 1]} : vector<2x96xf32> to vector<2x32xf32>
    %244 = arith.addf %242, %243 : vector<2x32xf32>
    %245 = arith.negf %244 : vector<2x32xf32>
    %246 = math.exp %245 : vector<2x32xf32>
    %cst_55 = arith.constant 1.000000e+00 : f32
    %247 = vector.broadcast %cst_55 : f32 to vector<2x32xf32>
    %248 = arith.addf %247, %246 : vector<2x32xf32>
    %249 = arith.divf %247, %248 : vector<2x32xf32>
    %250 = vector.extract_strided_slice %209 {offsets = [0, 32], sizes = [2, 32], strides = [1, 1]} : vector<2x96xf32> to vector<2x32xf32>
    %251 = vector.extract_strided_slice %215 {offsets = [0, 32], sizes = [2, 32], strides = [1, 1]} : vector<2x96xf32> to vector<2x32xf32>
    %252 = arith.addf %250, %251 : vector<2x32xf32>
    %253 = arith.negf %252 : vector<2x32xf32>
    %254 = math.exp %253 : vector<2x32xf32>
    %cst_56 = arith.constant 1.000000e+00 : f32
    %255 = vector.broadcast %cst_56 : f32 to vector<2x32xf32>
    %256 = arith.addf %255, %254 : vector<2x32xf32>
    %257 = arith.divf %255, %256 : vector<2x32xf32>
    %258 = vector.extract_strided_slice %209 {offsets = [0, 64], sizes = [2, 32], strides = [1, 1]} : vector<2x96xf32> to vector<2x32xf32>
    %259 = vector.extract_strided_slice %215 {offsets = [0, 64], sizes = [2, 32], strides = [1, 1]} : vector<2x96xf32> to vector<2x32xf32>
    %260 = arith.mulf %249, %259 : vector<2x32xf32>
    %261 = arith.addf %258, %260 : vector<2x32xf32>
    %262 = math.tanh %261 : vector<2x32xf32>
    %cst_57 = arith.constant 1.000000e+00 : f32
    %263 = vector.broadcast %cst_57 : f32 to vector<2x32xf32>
    %264 = arith.subf %263, %257 : vector<2x32xf32>
    %265 = arith.mulf %264, %262 : vector<2x32xf32>
    %266 = arith.mulf %257, %205 : vector<2x32xf32>
    %267 = arith.addf %265, %266 : vector<2x32xf32>
    %c6 = arith.constant 6 : index
    %c0_58 = arith.constant 0 : index
    %268 = vector.load %arg10[%c6, %c0_58] : memref<16x64xf32, #tpu.memory_space<vmem>>, vector<2x32xf32>
    tpu.vector_store %arg10[%c6, %c0_58], %241 {strides = array<i32>} : memref<16x64xf32, #tpu.memory_space<vmem>>, vector<2x32xf32>,
    %c8 = arith.constant 8 : index
    %c32_59 = arith.constant 32 : index
    %269 = vector.load %arg10[%c8, %c32_59] : memref<16x64xf32, #tpu.memory_space<vmem>>, vector<2x32xf32>
    tpu.vector_store %arg10[%c8, %c32_59], %267 {strides = array<i32>} : memref<16x64xf32, #tpu.memory_space<vmem>>, vector<2x32xf32>,
    %270 = vector.extract_strided_slice %6 {offsets = [8, 0], sizes = [2, 96], strides = [1, 1]} : vector<16x96xf32> to vector<2x96xf32>
    %271 = vector.extract_strided_slice %11 {offsets = [6, 0], sizes = [2, 96], strides = [1, 1]} : vector<16x96xf32> to vector<2x96xf32>
    %272 = arith.truncf %241 : vector<2x32xf32> to vector<2x32xbf16>
    %cst_60 = arith.constant dense<0.000000e+00> : vector<2x96xf32>
    %273 = tpu.matmul %272, %12, %cst_60 {dimension_numbers = #tpu.dot_dimension_numbers<[1], [0], [0], [1], [0, 0, 1, 1], [], []>} : vector<2x32xbf16>, vector<32x96xbf16>, vector<2x96xf32> -> vector<2x96xf32>
    %274 = arith.addf %273, %16 : vector<2x96xf32>
    %275 = arith.truncf %267 : vector<2x32xf32> to vector<2x32xbf16>
    %cst_61 = arith.constant dense<0.000000e+00> : vector<2x96xf32>
    %276 = tpu.matmul %275, %13, %cst_61 {dimension_numbers = #tpu.dot_dimension_numbers<[1], [0], [0], [1], [0, 0, 1, 1], [], []>} : vector<2x32xbf16>, vector<32x96xbf16>, vector<2x96xf32> -> vector<2x96xf32>
    %277 = arith.addf %276, %19 : vector<2x96xf32>
    %278 = vector.extract_strided_slice %270 {offsets = [0, 0], sizes = [2, 32], strides = [1, 1]} : vector<2x96xf32> to vector<2x32xf32>
    %279 = vector.extract_strided_slice %274 {offsets = [0, 0], sizes = [2, 32], strides = [1, 1]} : vector<2x96xf32> to vector<2x32xf32>
    %280 = arith.addf %278, %279 : vector<2x32xf32>
    %281 = arith.negf %280 : vector<2x32xf32>
    %282 = math.exp %281 : vector<2x32xf32>
    %cst_62 = arith.constant 1.000000e+00 : f32
    %283 = vector.broadcast %cst_62 : f32 to vector<2x32xf32>
    %284 = arith.addf %283, %282 : vector<2x32xf32>
    %285 = arith.divf %283, %284 : vector<2x32xf32>
    %286 = vector.extract_strided_slice %270 {offsets = [0, 32], sizes = [2, 32], strides = [1, 1]} : vector<2x96xf32> to vector<2x32xf32>
    %287 = vector.extract_strided_slice %274 {offsets = [0, 32], sizes = [2, 32], strides = [1, 1]} : vector<2x96xf32> to vector<2x32xf32>
    %288 = arith.addf %286, %287 : vector<2x32xf32>
    %289 = arith.negf %288 : vector<2x32xf32>
    %290 = math.exp %289 : vector<2x32xf32>
    %cst_63 = arith.constant 1.000000e+00 : f32
    %291 = vector.broadcast %cst_63 : f32 to vector<2x32xf32>
    %292 = arith.addf %291, %290 : vector<2x32xf32>
    %293 = arith.divf %291, %292 : vector<2x32xf32>
    %294 = vector.extract_strided_slice %270 {offsets = [0, 64], sizes = [2, 32], strides = [1, 1]} : vector<2x96xf32> to vector<2x32xf32>
    %295 = vector.extract_strided_slice %274 {offsets = [0, 64], sizes = [2, 32], strides = [1, 1]} : vector<2x96xf32> to vector<2x32xf32>
    %296 = arith.mulf %285, %295 : vector<2x32xf32>
    %297 = arith.addf %294, %296 : vector<2x32xf32>
    %298 = math.tanh %297 : vector<2x32xf32>
    %cst_64 = arith.constant 1.000000e+00 : f32
    %299 = vector.broadcast %cst_64 : f32 to vector<2x32xf32>
    %300 = arith.subf %299, %293 : vector<2x32xf32>
    %301 = arith.mulf %300, %298 : vector<2x32xf32>
    %302 = arith.mulf %293, %241 : vector<2x32xf32>
    %303 = arith.addf %301, %302 : vector<2x32xf32>
    %304 = vector.extract_strided_slice %271 {offsets = [0, 0], sizes = [2, 32], strides = [1, 1]} : vector<2x96xf32> to vector<2x32xf32>
    %305 = vector.extract_strided_slice %277 {offsets = [0, 0], sizes = [2, 32], strides = [1, 1]} : vector<2x96xf32> to vector<2x32xf32>
    %306 = arith.addf %304, %305 : vector<2x32xf32>
    %307 = arith.negf %306 : vector<2x32xf32>
    %308 = math.exp %307 : vector<2x32xf32>
    %cst_65 = arith.constant 1.000000e+00 : f32
    %309 = vector.broadcast %cst_65 : f32 to vector<2x32xf32>
    %310 = arith.addf %309, %308 : vector<2x32xf32>
    %311 = arith.divf %309, %310 : vector<2x32xf32>
    %312 = vector.extract_strided_slice %271 {offsets = [0, 32], sizes = [2, 32], strides = [1, 1]} : vector<2x96xf32> to vector<2x32xf32>
    %313 = vector.extract_strided_slice %277 {offsets = [0, 32], sizes = [2, 32], strides = [1, 1]} : vector<2x96xf32> to vector<2x32xf32>
    %314 = arith.addf %312, %313 : vector<2x32xf32>
    %315 = arith.negf %314 : vector<2x32xf32>
    %316 = math.exp %315 : vector<2x32xf32>
    %cst_66 = arith.constant 1.000000e+00 : f32
    %317 = vector.broadcast %cst_66 : f32 to vector<2x32xf32>
    %318 = arith.addf %317, %316 : vector<2x32xf32>
    %319 = arith.divf %317, %318 : vector<2x32xf32>
    %320 = vector.extract_strided_slice %271 {offsets = [0, 64], sizes = [2, 32], strides = [1, 1]} : vector<2x96xf32> to vector<2x32xf32>
    %321 = vector.extract_strided_slice %277 {offsets = [0, 64], sizes = [2, 32], strides = [1, 1]} : vector<2x96xf32> to vector<2x32xf32>
    %322 = arith.mulf %311, %321 : vector<2x32xf32>
    %323 = arith.addf %320, %322 : vector<2x32xf32>
    %324 = math.tanh %323 : vector<2x32xf32>
    %cst_67 = arith.constant 1.000000e+00 : f32
    %325 = vector.broadcast %cst_67 : f32 to vector<2x32xf32>
    %326 = arith.subf %325, %319 : vector<2x32xf32>
    %327 = arith.mulf %326, %324 : vector<2x32xf32>
    %328 = arith.mulf %319, %267 : vector<2x32xf32>
    %329 = arith.addf %327, %328 : vector<2x32xf32>
    %c8_68 = arith.constant 8 : index
    %c0_69 = arith.constant 0 : index
    %330 = vector.load %arg10[%c8_68, %c0_69] : memref<16x64xf32, #tpu.memory_space<vmem>>, vector<2x32xf32>
    tpu.vector_store %arg10[%c8_68, %c0_69], %303 {strides = array<i32>} : memref<16x64xf32, #tpu.memory_space<vmem>>, vector<2x32xf32>,
    %c6_70 = arith.constant 6 : index
    %c32_71 = arith.constant 32 : index
    %331 = vector.load %arg10[%c6_70, %c32_71] : memref<16x64xf32, #tpu.memory_space<vmem>>, vector<2x32xf32>
    tpu.vector_store %arg10[%c6_70, %c32_71], %329 {strides = array<i32>} : memref<16x64xf32, #tpu.memory_space<vmem>>, vector<2x32xf32>,
    %332 = vector.extract_strided_slice %6 {offsets = [10, 0], sizes = [2, 96], strides = [1, 1]} : vector<16x96xf32> to vector<2x96xf32>
    %333 = vector.extract_strided_slice %11 {offsets = [4, 0], sizes = [2, 96], strides = [1, 1]} : vector<16x96xf32> to vector<2x96xf32>
    %334 = arith.truncf %303 : vector<2x32xf32> to vector<2x32xbf16>
    %cst_72 = arith.constant dense<0.000000e+00> : vector<2x96xf32>
    %335 = tpu.matmul %334, %12, %cst_72 {dimension_numbers = #tpu.dot_dimension_numbers<[1], [0], [0], [1], [0, 0, 1, 1], [], []>} : vector<2x32xbf16>, vector<32x96xbf16>, vector<2x96xf32> -> vector<2x96xf32>
    %336 = arith.addf %335, %16 : vector<2x96xf32>
    %337 = arith.truncf %329 : vector<2x32xf32> to vector<2x32xbf16>
    %cst_73 = arith.constant dense<0.000000e+00> : vector<2x96xf32>
    %338 = tpu.matmul %337, %13, %cst_73 {dimension_numbers = #tpu.dot_dimension_numbers<[1], [0], [0], [1], [0, 0, 1, 1], [], []>} : vector<2x32xbf16>, vector<32x96xbf16>, vector<2x96xf32> -> vector<2x96xf32>
    %339 = arith.addf %338, %19 : vector<2x96xf32>
    %340 = vector.extract_strided_slice %332 {offsets = [0, 0], sizes = [2, 32], strides = [1, 1]} : vector<2x96xf32> to vector<2x32xf32>
    %341 = vector.extract_strided_slice %336 {offsets = [0, 0], sizes = [2, 32], strides = [1, 1]} : vector<2x96xf32> to vector<2x32xf32>
    %342 = arith.addf %340, %341 : vector<2x32xf32>
    %343 = arith.negf %342 : vector<2x32xf32>
    %344 = math.exp %343 : vector<2x32xf32>
    %cst_74 = arith.constant 1.000000e+00 : f32
    %345 = vector.broadcast %cst_74 : f32 to vector<2x32xf32>
    %346 = arith.addf %345, %344 : vector<2x32xf32>
    %347 = arith.divf %345, %346 : vector<2x32xf32>
    %348 = vector.extract_strided_slice %332 {offsets = [0, 32], sizes = [2, 32], strides = [1, 1]} : vector<2x96xf32> to vector<2x32xf32>
    %349 = vector.extract_strided_slice %336 {offsets = [0, 32], sizes = [2, 32], strides = [1, 1]} : vector<2x96xf32> to vector<2x32xf32>
    %350 = arith.addf %348, %349 : vector<2x32xf32>
    %351 = arith.negf %350 : vector<2x32xf32>
    %352 = math.exp %351 : vector<2x32xf32>
    %cst_75 = arith.constant 1.000000e+00 : f32
    %353 = vector.broadcast %cst_75 : f32 to vector<2x32xf32>
    %354 = arith.addf %353, %352 : vector<2x32xf32>
    %355 = arith.divf %353, %354 : vector<2x32xf32>
    %356 = vector.extract_strided_slice %332 {offsets = [0, 64], sizes = [2, 32], strides = [1, 1]} : vector<2x96xf32> to vector<2x32xf32>
    %357 = vector.extract_strided_slice %336 {offsets = [0, 64], sizes = [2, 32], strides = [1, 1]} : vector<2x96xf32> to vector<2x32xf32>
    %358 = arith.mulf %347, %357 : vector<2x32xf32>
    %359 = arith.addf %356, %358 : vector<2x32xf32>
    %360 = math.tanh %359 : vector<2x32xf32>
    %cst_76 = arith.constant 1.000000e+00 : f32
    %361 = vector.broadcast %cst_76 : f32 to vector<2x32xf32>
    %362 = arith.subf %361, %355 : vector<2x32xf32>
    %363 = arith.mulf %362, %360 : vector<2x32xf32>
    %364 = arith.mulf %355, %303 : vector<2x32xf32>
    %365 = arith.addf %363, %364 : vector<2x32xf32>
    %366 = vector.extract_strided_slice %333 {offsets = [0, 0], sizes = [2, 32], strides = [1, 1]} : vector<2x96xf32> to vector<2x32xf32>
    %367 = vector.extract_strided_slice %339 {offsets = [0, 0], sizes = [2, 32], strides = [1, 1]} : vector<2x96xf32> to vector<2x32xf32>
    %368 = arith.addf %366, %367 : vector<2x32xf32>
    %369 = arith.negf %368 : vector<2x32xf32>
    %370 = math.exp %369 : vector<2x32xf32>
    %cst_77 = arith.constant 1.000000e+00 : f32
    %371 = vector.broadcast %cst_77 : f32 to vector<2x32xf32>
    %372 = arith.addf %371, %370 : vector<2x32xf32>
    %373 = arith.divf %371, %372 : vector<2x32xf32>
    %374 = vector.extract_strided_slice %333 {offsets = [0, 32], sizes = [2, 32], strides = [1, 1]} : vector<2x96xf32> to vector<2x32xf32>
    %375 = vector.extract_strided_slice %339 {offsets = [0, 32], sizes = [2, 32], strides = [1, 1]} : vector<2x96xf32> to vector<2x32xf32>
    %376 = arith.addf %374, %375 : vector<2x32xf32>
    %377 = arith.negf %376 : vector<2x32xf32>
    %378 = math.exp %377 : vector<2x32xf32>
    %cst_78 = arith.constant 1.000000e+00 : f32
    %379 = vector.broadcast %cst_78 : f32 to vector<2x32xf32>
    %380 = arith.addf %379, %378 : vector<2x32xf32>
    %381 = arith.divf %379, %380 : vector<2x32xf32>
    %382 = vector.extract_strided_slice %333 {offsets = [0, 64], sizes = [2, 32], strides = [1, 1]} : vector<2x96xf32> to vector<2x32xf32>
    %383 = vector.extract_strided_slice %339 {offsets = [0, 64], sizes = [2, 32], strides = [1, 1]} : vector<2x96xf32> to vector<2x32xf32>
    %384 = arith.mulf %373, %383 : vector<2x32xf32>
    %385 = arith.addf %382, %384 : vector<2x32xf32>
    %386 = math.tanh %385 : vector<2x32xf32>
    %cst_79 = arith.constant 1.000000e+00 : f32
    %387 = vector.broadcast %cst_79 : f32 to vector<2x32xf32>
    %388 = arith.subf %387, %381 : vector<2x32xf32>
    %389 = arith.mulf %388, %386 : vector<2x32xf32>
    %390 = arith.mulf %381, %329 : vector<2x32xf32>
    %391 = arith.addf %389, %390 : vector<2x32xf32>
    %c10_80 = arith.constant 10 : index
    %c0_81 = arith.constant 0 : index
    %392 = vector.load %arg10[%c10_80, %c0_81] : memref<16x64xf32, #tpu.memory_space<vmem>>, vector<2x32xf32>
    tpu.vector_store %arg10[%c10_80, %c0_81], %365 {strides = array<i32>} : memref<16x64xf32, #tpu.memory_space<vmem>>, vector<2x32xf32>,
    %c4_82 = arith.constant 4 : index
    %c32_83 = arith.constant 32 : index
    %393 = vector.load %arg10[%c4_82, %c32_83] : memref<16x64xf32, #tpu.memory_space<vmem>>, vector<2x32xf32>
    tpu.vector_store %arg10[%c4_82, %c32_83], %391 {strides = array<i32>} : memref<16x64xf32, #tpu.memory_space<vmem>>, vector<2x32xf32>,
    %394 = vector.extract_strided_slice %6 {offsets = [12, 0], sizes = [2, 96], strides = [1, 1]} : vector<16x96xf32> to vector<2x96xf32>
    %395 = vector.extract_strided_slice %11 {offsets = [2, 0], sizes = [2, 96], strides = [1, 1]} : vector<16x96xf32> to vector<2x96xf32>
    %396 = arith.truncf %365 : vector<2x32xf32> to vector<2x32xbf16>
    %cst_84 = arith.constant dense<0.000000e+00> : vector<2x96xf32>
    %397 = tpu.matmul %396, %12, %cst_84 {dimension_numbers = #tpu.dot_dimension_numbers<[1], [0], [0], [1], [0, 0, 1, 1], [], []>} : vector<2x32xbf16>, vector<32x96xbf16>, vector<2x96xf32> -> vector<2x96xf32>
    %398 = arith.addf %397, %16 : vector<2x96xf32>
    %399 = arith.truncf %391 : vector<2x32xf32> to vector<2x32xbf16>
    %cst_85 = arith.constant dense<0.000000e+00> : vector<2x96xf32>
    %400 = tpu.matmul %399, %13, %cst_85 {dimension_numbers = #tpu.dot_dimension_numbers<[1], [0], [0], [1], [0, 0, 1, 1], [], []>} : vector<2x32xbf16>, vector<32x96xbf16>, vector<2x96xf32> -> vector<2x96xf32>
    %401 = arith.addf %400, %19 : vector<2x96xf32>
    %402 = vector.extract_strided_slice %394 {offsets = [0, 0], sizes = [2, 32], strides = [1, 1]} : vector<2x96xf32> to vector<2x32xf32>
    %403 = vector.extract_strided_slice %398 {offsets = [0, 0], sizes = [2, 32], strides = [1, 1]} : vector<2x96xf32> to vector<2x32xf32>
    %404 = arith.addf %402, %403 : vector<2x32xf32>
    %405 = arith.negf %404 : vector<2x32xf32>
    %406 = math.exp %405 : vector<2x32xf32>
    %cst_86 = arith.constant 1.000000e+00 : f32
    %407 = vector.broadcast %cst_86 : f32 to vector<2x32xf32>
    %408 = arith.addf %407, %406 : vector<2x32xf32>
    %409 = arith.divf %407, %408 : vector<2x32xf32>
    %410 = vector.extract_strided_slice %394 {offsets = [0, 32], sizes = [2, 32], strides = [1, 1]} : vector<2x96xf32> to vector<2x32xf32>
    %411 = vector.extract_strided_slice %398 {offsets = [0, 32], sizes = [2, 32], strides = [1, 1]} : vector<2x96xf32> to vector<2x32xf32>
    %412 = arith.addf %410, %411 : vector<2x32xf32>
    %413 = arith.negf %412 : vector<2x32xf32>
    %414 = math.exp %413 : vector<2x32xf32>
    %cst_87 = arith.constant 1.000000e+00 : f32
    %415 = vector.broadcast %cst_87 : f32 to vector<2x32xf32>
    %416 = arith.addf %415, %414 : vector<2x32xf32>
    %417 = arith.divf %415, %416 : vector<2x32xf32>
    %418 = vector.extract_strided_slice %394 {offsets = [0, 64], sizes = [2, 32], strides = [1, 1]} : vector<2x96xf32> to vector<2x32xf32>
    %419 = vector.extract_strided_slice %398 {offsets = [0, 64], sizes = [2, 32], strides = [1, 1]} : vector<2x96xf32> to vector<2x32xf32>
    %420 = arith.mulf %409, %419 : vector<2x32xf32>
    %421 = arith.addf %418, %420 : vector<2x32xf32>
    %422 = math.tanh %421 : vector<2x32xf32>
    %cst_88 = arith.constant 1.000000e+00 : f32
    %423 = vector.broadcast %cst_88 : f32 to vector<2x32xf32>
    %424 = arith.subf %423, %417 : vector<2x32xf32>
    %425 = arith.mulf %424, %422 : vector<2x32xf32>
    %426 = arith.mulf %417, %365 : vector<2x32xf32>
    %427 = arith.addf %425, %426 : vector<2x32xf32>
    %428 = vector.extract_strided_slice %395 {offsets = [0, 0], sizes = [2, 32], strides = [1, 1]} : vector<2x96xf32> to vector<2x32xf32>
    %429 = vector.extract_strided_slice %401 {offsets = [0, 0], sizes = [2, 32], strides = [1, 1]} : vector<2x96xf32> to vector<2x32xf32>
    %430 = arith.addf %428, %429 : vector<2x32xf32>
    %431 = arith.negf %430 : vector<2x32xf32>
    %432 = math.exp %431 : vector<2x32xf32>
    %cst_89 = arith.constant 1.000000e+00 : f32
    %433 = vector.broadcast %cst_89 : f32 to vector<2x32xf32>
    %434 = arith.addf %433, %432 : vector<2x32xf32>
    %435 = arith.divf %433, %434 : vector<2x32xf32>
    %436 = vector.extract_strided_slice %395 {offsets = [0, 32], sizes = [2, 32], strides = [1, 1]} : vector<2x96xf32> to vector<2x32xf32>
    %437 = vector.extract_strided_slice %401 {offsets = [0, 32], sizes = [2, 32], strides = [1, 1]} : vector<2x96xf32> to vector<2x32xf32>
    %438 = arith.addf %436, %437 : vector<2x32xf32>
    %439 = arith.negf %438 : vector<2x32xf32>
    %440 = math.exp %439 : vector<2x32xf32>
    %cst_90 = arith.constant 1.000000e+00 : f32
    %441 = vector.broadcast %cst_90 : f32 to vector<2x32xf32>
    %442 = arith.addf %441, %440 : vector<2x32xf32>
    %443 = arith.divf %441, %442 : vector<2x32xf32>
    %444 = vector.extract_strided_slice %395 {offsets = [0, 64], sizes = [2, 32], strides = [1, 1]} : vector<2x96xf32> to vector<2x32xf32>
    %445 = vector.extract_strided_slice %401 {offsets = [0, 64], sizes = [2, 32], strides = [1, 1]} : vector<2x96xf32> to vector<2x32xf32>
    %446 = arith.mulf %435, %445 : vector<2x32xf32>
    %447 = arith.addf %444, %446 : vector<2x32xf32>
    %448 = math.tanh %447 : vector<2x32xf32>
    %cst_91 = arith.constant 1.000000e+00 : f32
    %449 = vector.broadcast %cst_91 : f32 to vector<2x32xf32>
    %450 = arith.subf %449, %443 : vector<2x32xf32>
    %451 = arith.mulf %450, %448 : vector<2x32xf32>
    %452 = arith.mulf %443, %391 : vector<2x32xf32>
    %453 = arith.addf %451, %452 : vector<2x32xf32>
    %c12_92 = arith.constant 12 : index
    %c0_93 = arith.constant 0 : index
    %454 = vector.load %arg10[%c12_92, %c0_93] : memref<16x64xf32, #tpu.memory_space<vmem>>, vector<2x32xf32>
    tpu.vector_store %arg10[%c12_92, %c0_93], %427 {strides = array<i32>} : memref<16x64xf32, #tpu.memory_space<vmem>>, vector<2x32xf32>,
    %c2_94 = arith.constant 2 : index
    %c32_95 = arith.constant 32 : index
    %455 = vector.load %arg10[%c2_94, %c32_95] : memref<16x64xf32, #tpu.memory_space<vmem>>, vector<2x32xf32>
    tpu.vector_store %arg10[%c2_94, %c32_95], %453 {strides = array<i32>} : memref<16x64xf32, #tpu.memory_space<vmem>>, vector<2x32xf32>,
    %456 = vector.extract_strided_slice %6 {offsets = [14, 0], sizes = [2, 96], strides = [1, 1]} : vector<16x96xf32> to vector<2x96xf32>
    %457 = vector.extract_strided_slice %11 {offsets = [0, 0], sizes = [2, 96], strides = [1, 1]} : vector<16x96xf32> to vector<2x96xf32>
    %458 = arith.truncf %427 : vector<2x32xf32> to vector<2x32xbf16>
    %cst_96 = arith.constant dense<0.000000e+00> : vector<2x96xf32>
    %459 = tpu.matmul %458, %12, %cst_96 {dimension_numbers = #tpu.dot_dimension_numbers<[1], [0], [0], [1], [0, 0, 1, 1], [], []>} : vector<2x32xbf16>, vector<32x96xbf16>, vector<2x96xf32> -> vector<2x96xf32>
    %460 = arith.addf %459, %16 : vector<2x96xf32>
    %461 = arith.truncf %453 : vector<2x32xf32> to vector<2x32xbf16>
    %cst_97 = arith.constant dense<0.000000e+00> : vector<2x96xf32>
    %462 = tpu.matmul %461, %13, %cst_97 {dimension_numbers = #tpu.dot_dimension_numbers<[1], [0], [0], [1], [0, 0, 1, 1], [], []>} : vector<2x32xbf16>, vector<32x96xbf16>, vector<2x96xf32> -> vector<2x96xf32>
    %463 = arith.addf %462, %19 : vector<2x96xf32>
    %464 = vector.extract_strided_slice %456 {offsets = [0, 0], sizes = [2, 32], strides = [1, 1]} : vector<2x96xf32> to vector<2x32xf32>
    %465 = vector.extract_strided_slice %460 {offsets = [0, 0], sizes = [2, 32], strides = [1, 1]} : vector<2x96xf32> to vector<2x32xf32>
    %466 = arith.addf %464, %465 : vector<2x32xf32>
    %467 = arith.negf %466 : vector<2x32xf32>
    %468 = math.exp %467 : vector<2x32xf32>
    %cst_98 = arith.constant 1.000000e+00 : f32
    %469 = vector.broadcast %cst_98 : f32 to vector<2x32xf32>
    %470 = arith.addf %469, %468 : vector<2x32xf32>
    %471 = arith.divf %469, %470 : vector<2x32xf32>
    %472 = vector.extract_strided_slice %456 {offsets = [0, 32], sizes = [2, 32], strides = [1, 1]} : vector<2x96xf32> to vector<2x32xf32>
    %473 = vector.extract_strided_slice %460 {offsets = [0, 32], sizes = [2, 32], strides = [1, 1]} : vector<2x96xf32> to vector<2x32xf32>
    %474 = arith.addf %472, %473 : vector<2x32xf32>
    %475 = arith.negf %474 : vector<2x32xf32>
    %476 = math.exp %475 : vector<2x32xf32>
    %cst_99 = arith.constant 1.000000e+00 : f32
    %477 = vector.broadcast %cst_99 : f32 to vector<2x32xf32>
    %478 = arith.addf %477, %476 : vector<2x32xf32>
    %479 = arith.divf %477, %478 : vector<2x32xf32>
    %480 = vector.extract_strided_slice %456 {offsets = [0, 64], sizes = [2, 32], strides = [1, 1]} : vector<2x96xf32> to vector<2x32xf32>
    %481 = vector.extract_strided_slice %460 {offsets = [0, 64], sizes = [2, 32], strides = [1, 1]} : vector<2x96xf32> to vector<2x32xf32>
    %482 = arith.mulf %471, %481 : vector<2x32xf32>
    %483 = arith.addf %480, %482 : vector<2x32xf32>
    %484 = math.tanh %483 : vector<2x32xf32>
    %cst_100 = arith.constant 1.000000e+00 : f32
    %485 = vector.broadcast %cst_100 : f32 to vector<2x32xf32>
    %486 = arith.subf %485, %479 : vector<2x32xf32>
    %487 = arith.mulf %486, %484 : vector<2x32xf32>
    %488 = arith.mulf %479, %427 : vector<2x32xf32>
    %489 = arith.addf %487, %488 : vector<2x32xf32>
    %490 = vector.extract_strided_slice %457 {offsets = [0, 0], sizes = [2, 32], strides = [1, 1]} : vector<2x96xf32> to vector<2x32xf32>
    %491 = vector.extract_strided_slice %463 {offsets = [0, 0], sizes = [2, 32], strides = [1, 1]} : vector<2x96xf32> to vector<2x32xf32>
    %492 = arith.addf %490, %491 : vector<2x32xf32>
    %493 = arith.negf %492 : vector<2x32xf32>
    %494 = math.exp %493 : vector<2x32xf32>
    %cst_101 = arith.constant 1.000000e+00 : f32
    %495 = vector.broadcast %cst_101 : f32 to vector<2x32xf32>
    %496 = arith.addf %495, %494 : vector<2x32xf32>
    %497 = arith.divf %495, %496 : vector<2x32xf32>
    %498 = vector.extract_strided_slice %457 {offsets = [0, 32], sizes = [2, 32], strides = [1, 1]} : vector<2x96xf32> to vector<2x32xf32>
    %499 = vector.extract_strided_slice %463 {offsets = [0, 32], sizes = [2, 32], strides = [1, 1]} : vector<2x96xf32> to vector<2x32xf32>
    %500 = arith.addf %498, %499 : vector<2x32xf32>
    %501 = arith.negf %500 : vector<2x32xf32>
    %502 = math.exp %501 : vector<2x32xf32>
    %cst_102 = arith.constant 1.000000e+00 : f32
    %503 = vector.broadcast %cst_102 : f32 to vector<2x32xf32>
    %504 = arith.addf %503, %502 : vector<2x32xf32>
    %505 = arith.divf %503, %504 : vector<2x32xf32>
    %506 = vector.extract_strided_slice %457 {offsets = [0, 64], sizes = [2, 32], strides = [1, 1]} : vector<2x96xf32> to vector<2x32xf32>
    %507 = vector.extract_strided_slice %463 {offsets = [0, 64], sizes = [2, 32], strides = [1, 1]} : vector<2x96xf32> to vector<2x32xf32>
    %508 = arith.mulf %497, %507 : vector<2x32xf32>
    %509 = arith.addf %506, %508 : vector<2x32xf32>
    %510 = math.tanh %509 : vector<2x32xf32>
    %cst_103 = arith.constant 1.000000e+00 : f32
    %511 = vector.broadcast %cst_103 : f32 to vector<2x32xf32>
    %512 = arith.subf %511, %505 : vector<2x32xf32>
    %513 = arith.mulf %512, %510 : vector<2x32xf32>
    %514 = arith.mulf %505, %453 : vector<2x32xf32>
    %515 = arith.addf %513, %514 : vector<2x32xf32>
    %c14_104 = arith.constant 14 : index
    %c0_105 = arith.constant 0 : index
    %516 = vector.load %arg10[%c14_104, %c0_105] : memref<16x64xf32, #tpu.memory_space<vmem>>, vector<2x32xf32>
    tpu.vector_store %arg10[%c14_104, %c0_105], %489 {strides = array<i32>} : memref<16x64xf32, #tpu.memory_space<vmem>>, vector<2x32xf32>,
    %c0_106 = arith.constant 0 : index
    %c32_107 = arith.constant 32 : index
    %517 = vector.load %arg10[%c0_106, %c32_107] : memref<16x64xf32, #tpu.memory_space<vmem>>, vector<2x32xf32>
    tpu.vector_store %arg10[%c0_106, %c32_107], %515 {strides = array<i32>} : memref<16x64xf32, #tpu.memory_space<vmem>>, vector<2x32xf32>,
    return
  }
  func.func @transform_0(%arg0: i32) -> (i32, i32) {
    %c0_i32 = arith.constant 0 : i32
    %c0_i32_0 = arith.constant 0 : i32
    %c0_i32_1 = arith.constant 0 : i32
    return %c0_i32, %c0_i32_0 : i32, i32
  }
  func.func @transform_1(%arg0: i32) -> (i32, i32) {
    %c0_i32 = arith.constant 0 : i32
    %c0_i32_0 = arith.constant 0 : i32
    %c0_i32_1 = arith.constant 0 : i32
    return %c0_i32, %c0_i32_0 : i32, i32
  }
  func.func @transform_2(%arg0: i32) -> (i32, i32) {
    %c0_i32 = arith.constant 0 : i32
    %c0_i32_0 = arith.constant 0 : i32
    %c0_i32_1 = arith.constant 0 : i32
    return %c0_i32, %c0_i32_0 : i32, i32
  }
  func.func @transform_3(%arg0: i32) -> (i32, i32) {
    %c0_i32 = arith.constant 0 : i32
    %c0_i32_0 = arith.constant 0 : i32
    %c0_i32_1 = arith.constant 0 : i32
    return %c0_i32, %c0_i32_0 : i32, i32
  }
  func.func @transform_4(%arg0: i32) -> (i32, i32) {
    %c0_i32 = arith.constant 0 : i32
    %c0_i32_0 = arith.constant 0 : i32
    %c0_i32_1 = arith.constant 0 : i32
    return %c0_i32, %c0_i32_0 : i32, i32
  }
  func.func @transform_5(%arg0: i32) -> (i32, i32) {
    %c0_i32 = arith.constant 0 : i32
    %c0_i32_0 = arith.constant 0 : i32
    %c0_i32_1 = arith.constant 0 : i32
    return %c0_i32, %c0_i32_0 : i32, i32
  }
  func.func @transform_6(%arg0: i32) -> (i32, i32) {
    %c0_i32 = arith.constant 0 : i32
    %c0_i32_0 = arith.constant 0 : i32
    %c0_i32_1 = arith.constant 0 : i32
    return %c0_i32, %c0_i32_0 : i32, i32
  }
  func.func @transform_7(%arg0: i32) -> (i32, i32) {
    %c0_i32 = arith.constant 0 : i32
    %c0_i32_0 = arith.constant 0 : i32
    %c0_i32_1 = arith.constant 0 : i32
    return %c0_i32, %c0_i32_0 : i32, i32
  }
  func.func @transform_8(%arg0: i32) -> (i32, i32) {
    %c0_i32 = arith.constant 0 : i32
    %c0_i32_0 = arith.constant 0 : i32
    %c0_i32_1 = arith.constant 0 : i32
    return %c0_i32, %c0_i32_0 : i32, i32
  }
  func.func @transform_9(%arg0: i32) -> (i32, i32) {
    %c0_i32 = arith.constant 0 : i32
    %c0_i32_0 = arith.constant 0 : i32
    %c0_i32_1 = arith.constant 0 : i32
    return %c0_i32, %c0_i32_0 : i32, i32
  }
}

module attributes {stable_mosaic.version = 11 : i64} {
  func.func @_bigru_layer_kernel(%arg0: i32, %arg1: memref<16x64xf32, #tpu.memory_space<vmem>>, %arg2: memref<64x96xbf16, #tpu.memory_space<vmem>>, %arg3: memref<64x96xbf16, #tpu.memory_space<vmem>>, %arg4: memref<32x96xbf16, #tpu.memory_space<vmem>>, %arg5: memref<32x96xbf16, #tpu.memory_space<vmem>>, %arg6: memref<1x96xf32, #tpu.memory_space<vmem>>, %arg7: memref<1x96xf32, #tpu.memory_space<vmem>>, %arg8: memref<1x96xf32, #tpu.memory_space<vmem>>, %arg9: memref<1x96xf32, #tpu.memory_space<vmem>>, %arg10: memref<16x64xf32, #tpu.memory_space<vmem>>) attributes {dimension_semantics = [#tpu.dimension_semantics<arbitrary>], iteration_bounds = array<i64: 1>, scalar_prefetch = 0 : i64, scratch_operands = 0 : i64, tpu.core_type = #tpu.core_type<tc>, window_params = [{pipeline_mode = #tpu.pipeline_mode<synchronous>, transform_indices = @transform_0, window_bounds = array<i64: 16, 64>}, {pipeline_mode = #tpu.pipeline_mode<synchronous>, transform_indices = @transform_1, window_bounds = array<i64: 64, 96>}, {pipeline_mode = #tpu.pipeline_mode<synchronous>, transform_indices = @transform_2, window_bounds = array<i64: 64, 96>}, {pipeline_mode = #tpu.pipeline_mode<synchronous>, transform_indices = @transform_3, window_bounds = array<i64: 32, 96>}, {pipeline_mode = #tpu.pipeline_mode<synchronous>, transform_indices = @transform_4, window_bounds = array<i64: 32, 96>}, {pipeline_mode = #tpu.pipeline_mode<synchronous>, transform_indices = @transform_5, window_bounds = array<i64: 1, 96>}, {pipeline_mode = #tpu.pipeline_mode<synchronous>, transform_indices = @transform_6, window_bounds = array<i64: 1, 96>}, {pipeline_mode = #tpu.pipeline_mode<synchronous>, transform_indices = @transform_7, window_bounds = array<i64: 1, 96>}, {pipeline_mode = #tpu.pipeline_mode<synchronous>, transform_indices = @transform_8, window_bounds = array<i64: 1, 96>}, {pipeline_mode = #tpu.pipeline_mode<synchronous>, transform_indices = @transform_9, window_bounds = array<i64: 16, 64>}]} {
    %c0 = arith.constant 0 : index
    %c0_0 = arith.constant 0 : index
    %0 = vector.load %arg1[%c0, %c0_0] : memref<16x64xf32, #tpu.memory_space<vmem>>, vector<16x64xf32>
    %1 = arith.truncf %0 : vector<16x64xf32> to vector<16x64xbf16>
    %c0_1 = arith.constant 0 : index
    %c0_2 = arith.constant 0 : index
    %2 = vector.load %arg2[%c0_1, %c0_2] : memref<64x96xbf16, #tpu.memory_space<vmem>>, vector<64x96xbf16>
    %cst = arith.constant dense<0.000000e+00> : vector<16x96xf32>
    %3 = tpu.matmul %1, %2, %cst {dimension_numbers = #tpu.dot_dimension_numbers<[1], [0], [0], [1], [0, 0, 1, 1], [], []>} : vector<16x64xbf16>, vector<64x96xbf16>, vector<16x96xf32> -> vector<16x96xf32>
    %c0_3 = arith.constant 0 : index
    %c0_4 = arith.constant 0 : index
    %4 = vector.load %arg6[%c0_3, %c0_4] : memref<1x96xf32, #tpu.memory_space<vmem>>, vector<1x96xf32>
    %5 = vector.broadcast %4 : vector<1x96xf32> to vector<16x96xf32>
    %6 = arith.addf %3, %5 : vector<16x96xf32>
    %c0_5 = arith.constant 0 : index
    %c0_6 = arith.constant 0 : index
    %7 = vector.load %arg3[%c0_5, %c0_6] : memref<64x96xbf16, #tpu.memory_space<vmem>>, vector<64x96xbf16>
    %cst_7 = arith.constant dense<0.000000e+00> : vector<16x96xf32>
    %8 = tpu.matmul %1, %7, %cst_7 {dimension_numbers = #tpu.dot_dimension_numbers<[1], [0], [0], [1], [0, 0, 1, 1], [], []>} : vector<16x64xbf16>, vector<64x96xbf16>, vector<16x96xf32> -> vector<16x96xf32>
    %c0_8 = arith.constant 0 : index
    %c0_9 = arith.constant 0 : index
    %9 = vector.load %arg7[%c0_8, %c0_9] : memref<1x96xf32, #tpu.memory_space<vmem>>, vector<1x96xf32>
    %10 = vector.broadcast %9 : vector<1x96xf32> to vector<16x96xf32>
    %11 = arith.addf %8, %10 : vector<16x96xf32>
    %c0_10 = arith.constant 0 : index
    %c0_11 = arith.constant 0 : index
    %12 = vector.load %arg4[%c0_10, %c0_11] : memref<32x96xbf16, #tpu.memory_space<vmem>>, vector<32x96xbf16>
    %c0_12 = arith.constant 0 : index
    %c0_13 = arith.constant 0 : index
    %13 = vector.load %arg5[%c0_12, %c0_13] : memref<32x96xbf16, #tpu.memory_space<vmem>>, vector<32x96xbf16>
    %c0_14 = arith.constant 0 : index
    %c0_15 = arith.constant 0 : index
    %14 = vector.load %arg8[%c0_14, %c0_15] : memref<1x96xf32, #tpu.memory_space<vmem>>, vector<1x96xf32>
    %15 = vector.shape_cast %14 : vector<1x96xf32> to vector<1x96xf32>
    %16 = vector.broadcast %15 : vector<1x96xf32> to vector<2x96xf32>
    %c0_16 = arith.constant 0 : index
    %c0_17 = arith.constant 0 : index
    %17 = vector.load %arg9[%c0_16, %c0_17] : memref<1x96xf32, #tpu.memory_space<vmem>>, vector<1x96xf32>
    %18 = vector.shape_cast %17 : vector<1x96xf32> to vector<1x96xf32>
    %19 = vector.broadcast %18 : vector<1x96xf32> to vector<2x96xf32>
    %cst_18 = arith.constant 0.000000e+00 : f32
    %20 = vector.broadcast %cst_18 : f32 to vector<2x32xf32>
    %cst_19 = arith.constant 0.000000e+00 : f32
    %21 = vector.broadcast %cst_19 : f32 to vector<2x32xf32>
    %22 = vector.extract_strided_slice %6 {offsets = [0, 0], sizes = [2, 96], strides = [1, 1]} : vector<16x96xf32> to vector<2x96xf32>
    %23 = vector.extract_strided_slice %11 {offsets = [14, 0], sizes = [2, 96], strides = [1, 1]} : vector<16x96xf32> to vector<2x96xf32>
    %24 = arith.truncf %20 : vector<2x32xf32> to vector<2x32xbf16>
    %cst_20 = arith.constant dense<0.000000e+00> : vector<2x96xf32>
    %25 = tpu.matmul %24, %12, %cst_20 {dimension_numbers = #tpu.dot_dimension_numbers<[1], [0], [0], [1], [0, 0, 1, 1], [], []>} : vector<2x32xbf16>, vector<32x96xbf16>, vector<2x96xf32> -> vector<2x96xf32>
    %26 = arith.addf %25, %16 : vector<2x96xf32>
    %27 = arith.truncf %21 : vector<2x32xf32> to vector<2x32xbf16>
    %cst_21 = arith.constant dense<0.000000e+00> : vector<2x96xf32>
    %28 = tpu.matmul %27, %13, %cst_21 {dimension_numbers = #tpu.dot_dimension_numbers<[1], [0], [0], [1], [0, 0, 1, 1], [], []>} : vector<2x32xbf16>, vector<32x96xbf16>, vector<2x96xf32> -> vector<2x96xf32>
    %29 = arith.addf %28, %19 : vector<2x96xf32>
    %30 = vector.extract_strided_slice %22 {offsets = [0, 0], sizes = [2, 32], strides = [1, 1]} : vector<2x96xf32> to vector<2x32xf32>
    %31 = vector.extract_strided_slice %26 {offsets = [0, 0], sizes = [2, 32], strides = [1, 1]} : vector<2x96xf32> to vector<2x32xf32>
    %32 = arith.addf %30, %31 : vector<2x32xf32>
    %33 = arith.negf %32 : vector<2x32xf32>
    %34 = math.exp %33 : vector<2x32xf32>
    %cst_22 = arith.constant 1.000000e+00 : f32
    %35 = vector.broadcast %cst_22 : f32 to vector<2x32xf32>
    %36 = arith.addf %35, %34 : vector<2x32xf32>
    %37 = arith.divf %35, %36 : vector<2x32xf32>
    %38 = vector.extract_strided_slice %22 {offsets = [0, 32], sizes = [2, 32], strides = [1, 1]} : vector<2x96xf32> to vector<2x32xf32>
    %39 = vector.extract_strided_slice %26 {offsets = [0, 32], sizes = [2, 32], strides = [1, 1]} : vector<2x96xf32> to vector<2x32xf32>
    %40 = arith.addf %38, %39 : vector<2x32xf32>
    %41 = arith.negf %40 : vector<2x32xf32>
    %42 = math.exp %41 : vector<2x32xf32>
    %cst_23 = arith.constant 1.000000e+00 : f32
    %43 = vector.broadcast %cst_23 : f32 to vector<2x32xf32>
    %44 = arith.addf %43, %42 : vector<2x32xf32>
    %45 = arith.divf %43, %44 : vector<2x32xf32>
    %46 = vector.extract_strided_slice %22 {offsets = [0, 64], sizes = [2, 32], strides = [1, 1]} : vector<2x96xf32> to vector<2x32xf32>
    %47 = vector.extract_strided_slice %26 {offsets = [0, 64], sizes = [2, 32], strides = [1, 1]} : vector<2x96xf32> to vector<2x32xf32>
    %48 = arith.mulf %37, %47 : vector<2x32xf32>
    %49 = arith.addf %46, %48 : vector<2x32xf32>
    %50 = math.tanh %49 : vector<2x32xf32>
    %cst_24 = arith.constant 1.000000e+00 : f32
    %51 = vector.broadcast %cst_24 : f32 to vector<2x32xf32>
    %52 = arith.subf %51, %45 : vector<2x32xf32>
    %53 = arith.mulf %52, %50 : vector<2x32xf32>
    %54 = arith.mulf %45, %20 : vector<2x32xf32>
    %55 = arith.addf %53, %54 : vector<2x32xf32>
    %56 = vector.extract_strided_slice %23 {offsets = [0, 0], sizes = [2, 32], strides = [1, 1]} : vector<2x96xf32> to vector<2x32xf32>
    %57 = vector.extract_strided_slice %29 {offsets = [0, 0], sizes = [2, 32], strides = [1, 1]} : vector<2x96xf32> to vector<2x32xf32>
    %58 = arith.addf %56, %57 : vector<2x32xf32>
    %59 = arith.negf %58 : vector<2x32xf32>
    %60 = math.exp %59 : vector<2x32xf32>
    %cst_25 = arith.constant 1.000000e+00 : f32
    %61 = vector.broadcast %cst_25 : f32 to vector<2x32xf32>
    %62 = arith.addf %61, %60 : vector<2x32xf32>
    %63 = arith.divf %61, %62 : vector<2x32xf32>
    %64 = vector.extract_strided_slice %23 {offsets = [0, 32], sizes = [2, 32], strides = [1, 1]} : vector<2x96xf32> to vector<2x32xf32>
    %65 = vector.extract_strided_slice %29 {offsets = [0, 32], sizes = [2, 32], strides = [1, 1]} : vector<2x96xf32> to vector<2x32xf32>
    %66 = arith.addf %64, %65 : vector<2x32xf32>
    %67 = arith.negf %66 : vector<2x32xf32>
    %68 = math.exp %67 : vector<2x32xf32>
    %cst_26 = arith.constant 1.000000e+00 : f32
    %69 = vector.broadcast %cst_26 : f32 to vector<2x32xf32>
    %70 = arith.addf %69, %68 : vector<2x32xf32>
    %71 = arith.divf %69, %70 : vector<2x32xf32>
    %72 = vector.extract_strided_slice %23 {offsets = [0, 64], sizes = [2, 32], strides = [1, 1]} : vector<2x96xf32> to vector<2x32xf32>
    %73 = vector.extract_strided_slice %29 {offsets = [0, 64], sizes = [2, 32], strides = [1, 1]} : vector<2x96xf32> to vector<2x32xf32>
    %74 = arith.mulf %63, %73 : vector<2x32xf32>
    %75 = arith.addf %72, %74 : vector<2x32xf32>
    %76 = math.tanh %75 : vector<2x32xf32>
    %cst_27 = arith.constant 1.000000e+00 : f32
    %77 = vector.broadcast %cst_27 : f32 to vector<2x32xf32>
    %78 = arith.subf %77, %71 : vector<2x32xf32>
    %79 = arith.mulf %78, %76 : vector<2x32xf32>
    %80 = arith.mulf %71, %21 : vector<2x32xf32>
    %81 = arith.addf %79, %80 : vector<2x32xf32>
    %c0_28 = arith.constant 0 : index
    %c0_29 = arith.constant 0 : index
    %82 = vector.load %arg10[%c0_28, %c0_29] : memref<16x64xf32, #tpu.memory_space<vmem>>, vector<2x32xf32>
    tpu.vector_store %arg10[%c0_28, %c0_29], %55 {strides = array<i32>} : memref<16x64xf32, #tpu.memory_space<vmem>>, vector<2x32xf32>,
    %c14 = arith.constant 14 : index
    %c32 = arith.constant 32 : index
    %83 = vector.load %arg10[%c14, %c32] : memref<16x64xf32, #tpu.memory_space<vmem>>, vector<2x32xf32>
    tpu.vector_store %arg10[%c14, %c32], %81 {strides = array<i32>} : memref<16x64xf32, #tpu.memory_space<vmem>>, vector<2x32xf32>,
    %84 = vector.extract_strided_slice %6 {offsets = [2, 0], sizes = [2, 96], strides = [1, 1]} : vector<16x96xf32> to vector<2x96xf32>
    %85 = vector.extract_strided_slice %11 {offsets = [12, 0], sizes = [2, 96], strides = [1, 1]} : vector<16x96xf32> to vector<2x96xf32>
    %86 = arith.truncf %55 : vector<2x32xf32> to vector<2x32xbf16>
    %cst_30 = arith.constant dense<0.000000e+00> : vector<2x96xf32>
    %87 = tpu.matmul %86, %12, %cst_30 {dimension_numbers = #tpu.dot_dimension_numbers<[1], [0], [0], [1], [0, 0, 1, 1], [], []>} : vector<2x32xbf16>, vector<32x96xbf16>, vector<2x96xf32> -> vector<2x96xf32>
    %88 = arith.addf %87, %16 : vector<2x96xf32>
    %89 = arith.truncf %81 : vector<2x32xf32> to vector<2x32xbf16>
    %cst_31 = arith.constant dense<0.000000e+00> : vector<2x96xf32>
    %90 = tpu.matmul %89, %13, %cst_31 {dimension_numbers = #tpu.dot_dimension_numbers<[1], [0], [0], [1], [0, 0, 1, 1], [], []>} : vector<2x32xbf16>, vector<32x96xbf16>, vector<2x96xf32> -> vector<2x96xf32>
    %91 = arith.addf %90, %19 : vector<2x96xf32>
    %92 = vector.extract_strided_slice %84 {offsets = [0, 0], sizes = [2, 32], strides = [1, 1]} : vector<2x96xf32> to vector<2x32xf32>
    %93 = vector.extract_strided_slice %88 {offsets = [0, 0], sizes = [2, 32], strides = [1, 1]} : vector<2x96xf32> to vector<2x32xf32>
    %94 = arith.addf %92, %93 : vector<2x32xf32>
    %95 = arith.negf %94 : vector<2x32xf32>
    %96 = math.exp %95 : vector<2x32xf32>
    %cst_32 = arith.constant 1.000000e+00 : f32
    %97 = vector.broadcast %cst_32 : f32 to vector<2x32xf32>
    %98 = arith.addf %97, %96 : vector<2x32xf32>
    %99 = arith.divf %97, %98 : vector<2x32xf32>
    %100 = vector.extract_strided_slice %84 {offsets = [0, 32], sizes = [2, 32], strides = [1, 1]} : vector<2x96xf32> to vector<2x32xf32>
    %101 = vector.extract_strided_slice %88 {offsets = [0, 32], sizes = [2, 32], strides = [1, 1]} : vector<2x96xf32> to vector<2x32xf32>
    %102 = arith.addf %100, %101 : vector<2x32xf32>
    %103 = arith.negf %102 : vector<2x32xf32>
    %104 = math.exp %103 : vector<2x32xf32>
    %cst_33 = arith.constant 1.000000e+00 : f32
    %105 = vector.broadcast %cst_33 : f32 to vector<2x32xf32>
    %106 = arith.addf %105, %104 : vector<2x32xf32>
    %107 = arith.divf %105, %106 : vector<2x32xf32>
    %108 = vector.extract_strided_slice %84 {offsets = [0, 64], sizes = [2, 32], strides = [1, 1]} : vector<2x96xf32> to vector<2x32xf32>
    %109 = vector.extract_strided_slice %88 {offsets = [0, 64], sizes = [2, 32], strides = [1, 1]} : vector<2x96xf32> to vector<2x32xf32>
    %110 = arith.mulf %99, %109 : vector<2x32xf32>
    %111 = arith.addf %108, %110 : vector<2x32xf32>
    %112 = math.tanh %111 : vector<2x32xf32>
    %cst_34 = arith.constant 1.000000e+00 : f32
    %113 = vector.broadcast %cst_34 : f32 to vector<2x32xf32>
    %114 = arith.subf %113, %107 : vector<2x32xf32>
    %115 = arith.mulf %114, %112 : vector<2x32xf32>
    %116 = arith.mulf %107, %55 : vector<2x32xf32>
    %117 = arith.addf %115, %116 : vector<2x32xf32>
    %118 = vector.extract_strided_slice %85 {offsets = [0, 0], sizes = [2, 32], strides = [1, 1]} : vector<2x96xf32> to vector<2x32xf32>
    %119 = vector.extract_strided_slice %91 {offsets = [0, 0], sizes = [2, 32], strides = [1, 1]} : vector<2x96xf32> to vector<2x32xf32>
    %120 = arith.addf %118, %119 : vector<2x32xf32>
    %121 = arith.negf %120 : vector<2x32xf32>
    %122 = math.exp %121 : vector<2x32xf32>
    %cst_35 = arith.constant 1.000000e+00 : f32
    %123 = vector.broadcast %cst_35 : f32 to vector<2x32xf32>
    %124 = arith.addf %123, %122 : vector<2x32xf32>
    %125 = arith.divf %123, %124 : vector<2x32xf32>
    %126 = vector.extract_strided_slice %85 {offsets = [0, 32], sizes = [2, 32], strides = [1, 1]} : vector<2x96xf32> to vector<2x32xf32>
    %127 = vector.extract_strided_slice %91 {offsets = [0, 32], sizes = [2, 32], strides = [1, 1]} : vector<2x96xf32> to vector<2x32xf32>
    %128 = arith.addf %126, %127 : vector<2x32xf32>
    %129 = arith.negf %128 : vector<2x32xf32>
    %130 = math.exp %129 : vector<2x32xf32>
    %cst_36 = arith.constant 1.000000e+00 : f32
    %131 = vector.broadcast %cst_36 : f32 to vector<2x32xf32>
    %132 = arith.addf %131, %130 : vector<2x32xf32>
    %133 = arith.divf %131, %132 : vector<2x32xf32>
    %134 = vector.extract_strided_slice %85 {offsets = [0, 64], sizes = [2, 32], strides = [1, 1]} : vector<2x96xf32> to vector<2x32xf32>
    %135 = vector.extract_strided_slice %91 {offsets = [0, 64], sizes = [2, 32], strides = [1, 1]} : vector<2x96xf32> to vector<2x32xf32>
    %136 = arith.mulf %125, %135 : vector<2x32xf32>
    %137 = arith.addf %134, %136 : vector<2x32xf32>
    %138 = math.tanh %137 : vector<2x32xf32>
    %cst_37 = arith.constant 1.000000e+00 : f32
    %139 = vector.broadcast %cst_37 : f32 to vector<2x32xf32>
    %140 = arith.subf %139, %133 : vector<2x32xf32>
    %141 = arith.mulf %140, %138 : vector<2x32xf32>
    %142 = arith.mulf %133, %81 : vector<2x32xf32>
    %143 = arith.addf %141, %142 : vector<2x32xf32>
    %c2 = arith.constant 2 : index
    %c0_38 = arith.constant 0 : index
    %144 = vector.load %arg10[%c2, %c0_38] : memref<16x64xf32, #tpu.memory_space<vmem>>, vector<2x32xf32>
    tpu.vector_store %arg10[%c2, %c0_38], %117 {strides = array<i32>} : memref<16x64xf32, #tpu.memory_space<vmem>>, vector<2x32xf32>,
    %c12 = arith.constant 12 : index
    %c32_39 = arith.constant 32 : index
    %145 = vector.load %arg10[%c12, %c32_39] : memref<16x64xf32, #tpu.memory_space<vmem>>, vector<2x32xf32>
    tpu.vector_store %arg10[%c12, %c32_39], %143 {strides = array<i32>} : memref<16x64xf32, #tpu.memory_space<vmem>>, vector<2x32xf32>,
    %146 = vector.extract_strided_slice %6 {offsets = [4, 0], sizes = [2, 96], strides = [1, 1]} : vector<16x96xf32> to vector<2x96xf32>
    %147 = vector.extract_strided_slice %11 {offsets = [10, 0], sizes = [2, 96], strides = [1, 1]} : vector<16x96xf32> to vector<2x96xf32>
    %148 = arith.truncf %117 : vector<2x32xf32> to vector<2x32xbf16>
    %cst_40 = arith.constant dense<0.000000e+00> : vector<2x96xf32>
    %149 = tpu.matmul %148, %12, %cst_40 {dimension_numbers = #tpu.dot_dimension_numbers<[1], [0], [0], [1], [0, 0, 1, 1], [], []>} : vector<2x32xbf16>, vector<32x96xbf16>, vector<2x96xf32> -> vector<2x96xf32>
    %150 = arith.addf %149, %16 : vector<2x96xf32>
    %151 = arith.truncf %143 : vector<2x32xf32> to vector<2x32xbf16>
    %cst_41 = arith.constant dense<0.000000e+00> : vector<2x96xf32>
    %152 = tpu.matmul %151, %13, %cst_41 {dimension_numbers = #tpu.dot_dimension_numbers<[1], [0], [0], [1], [0, 0, 1, 1], [], []>} : vector<2x32xbf16>, vector<32x96xbf16>, vector<2x96xf32> -> vector<2x96xf32>
    %153 = arith.addf %152, %19 : vector<2x96xf32>
    %154 = vector.extract_strided_slice %146 {offsets = [0, 0], sizes = [2, 32], strides = [1, 1]} : vector<2x96xf32> to vector<2x32xf32>
    %155 = vector.extract_strided_slice %150 {offsets = [0, 0], sizes = [2, 32], strides = [1, 1]} : vector<2x96xf32> to vector<2x32xf32>
    %156 = arith.addf %154, %155 : vector<2x32xf32>
    %157 = arith.negf %156 : vector<2x32xf32>
    %158 = math.exp %157 : vector<2x32xf32>
    %cst_42 = arith.constant 1.000000e+00 : f32
    %159 = vector.broadcast %cst_42 : f32 to vector<2x32xf32>
    %160 = arith.addf %159, %158 : vector<2x32xf32>
    %161 = arith.divf %159, %160 : vector<2x32xf32>
    %162 = vector.extract_strided_slice %146 {offsets = [0, 32], sizes = [2, 32], strides = [1, 1]} : vector<2x96xf32> to vector<2x32xf32>
    %163 = vector.extract_strided_slice %150 {offsets = [0, 32], sizes = [2, 32], strides = [1, 1]} : vector<2x96xf32> to vector<2x32xf32>
    %164 = arith.addf %162, %163 : vector<2x32xf32>
    %165 = arith.negf %164 : vector<2x32xf32>
    %166 = math.exp %165 : vector<2x32xf32>
    %cst_43 = arith.constant 1.000000e+00 : f32
    %167 = vector.broadcast %cst_43 : f32 to vector<2x32xf32>
    %168 = arith.addf %167, %166 : vector<2x32xf32>
    %169 = arith.divf %167, %168 : vector<2x32xf32>
    %170 = vector.extract_strided_slice %146 {offsets = [0, 64], sizes = [2, 32], strides = [1, 1]} : vector<2x96xf32> to vector<2x32xf32>
    %171 = vector.extract_strided_slice %150 {offsets = [0, 64], sizes = [2, 32], strides = [1, 1]} : vector<2x96xf32> to vector<2x32xf32>
    %172 = arith.mulf %161, %171 : vector<2x32xf32>
    %173 = arith.addf %170, %172 : vector<2x32xf32>
    %174 = math.tanh %173 : vector<2x32xf32>
    %cst_44 = arith.constant 1.000000e+00 : f32
    %175 = vector.broadcast %cst_44 : f32 to vector<2x32xf32>
    %176 = arith.subf %175, %169 : vector<2x32xf32>
    %177 = arith.mulf %176, %174 : vector<2x32xf32>
    %178 = arith.mulf %169, %117 : vector<2x32xf32>
    %179 = arith.addf %177, %178 : vector<2x32xf32>
    %180 = vector.extract_strided_slice %147 {offsets = [0, 0], sizes = [2, 32], strides = [1, 1]} : vector<2x96xf32> to vector<2x32xf32>
    %181 = vector.extract_strided_slice %153 {offsets = [0, 0], sizes = [2, 32], strides = [1, 1]} : vector<2x96xf32> to vector<2x32xf32>
    %182 = arith.addf %180, %181 : vector<2x32xf32>
    %183 = arith.negf %182 : vector<2x32xf32>
    %184 = math.exp %183 : vector<2x32xf32>
    %cst_45 = arith.constant 1.000000e+00 : f32
    %185 = vector.broadcast %cst_45 : f32 to vector<2x32xf32>
    %186 = arith.addf %185, %184 : vector<2x32xf32>
    %187 = arith.divf %185, %186 : vector<2x32xf32>
    %188 = vector.extract_strided_slice %147 {offsets = [0, 32], sizes = [2, 32], strides = [1, 1]} : vector<2x96xf32> to vector<2x32xf32>
    %189 = vector.extract_strided_slice %153 {offsets = [0, 32], sizes = [2, 32], strides = [1, 1]} : vector<2x96xf32> to vector<2x32xf32>
    %190 = arith.addf %188, %189 : vector<2x32xf32>
    %191 = arith.negf %190 : vector<2x32xf32>
    %192 = math.exp %191 : vector<2x32xf32>
    %cst_46 = arith.constant 1.000000e+00 : f32
    %193 = vector.broadcast %cst_46 : f32 to vector<2x32xf32>
    %194 = arith.addf %193, %192 : vector<2x32xf32>
    %195 = arith.divf %193, %194 : vector<2x32xf32>
    %196 = vector.extract_strided_slice %147 {offsets = [0, 64], sizes = [2, 32], strides = [1, 1]} : vector<2x96xf32> to vector<2x32xf32>
    %197 = vector.extract_strided_slice %153 {offsets = [0, 64], sizes = [2, 32], strides = [1, 1]} : vector<2x96xf32> to vector<2x32xf32>
    %198 = arith.mulf %187, %197 : vector<2x32xf32>
    %199 = arith.addf %196, %198 : vector<2x32xf32>
    %200 = math.tanh %199 : vector<2x32xf32>
    %cst_47 = arith.constant 1.000000e+00 : f32
    %201 = vector.broadcast %cst_47 : f32 to vector<2x32xf32>
    %202 = arith.subf %201, %195 : vector<2x32xf32>
    %203 = arith.mulf %202, %200 : vector<2x32xf32>
    %204 = arith.mulf %195, %143 : vector<2x32xf32>
    %205 = arith.addf %203, %204 : vector<2x32xf32>
    %c4 = arith.constant 4 : index
    %c0_48 = arith.constant 0 : index
    %206 = vector.load %arg10[%c4, %c0_48] : memref<16x64xf32, #tpu.memory_space<vmem>>, vector<2x32xf32>
    tpu.vector_store %arg10[%c4, %c0_48], %179 {strides = array<i32>} : memref<16x64xf32, #tpu.memory_space<vmem>>, vector<2x32xf32>,
    %c10 = arith.constant 10 : index
    %c32_49 = arith.constant 32 : index
    %207 = vector.load %arg10[%c10, %c32_49] : memref<16x64xf32, #tpu.memory_space<vmem>>, vector<2x32xf32>
    tpu.vector_store %arg10[%c10, %c32_49], %205 {strides = array<i32>} : memref<16x64xf32, #tpu.memory_space<vmem>>, vector<2x32xf32>,
    %208 = vector.extract_strided_slice %6 {offsets = [6, 0], sizes = [2, 96], strides = [1, 1]} : vector<16x96xf32> to vector<2x96xf32>
    %209 = vector.extract_strided_slice %11 {offsets = [8, 0], sizes = [2, 96], strides = [1, 1]} : vector<16x96xf32> to vector<2x96xf32>
    %210 = arith.truncf %179 : vector<2x32xf32> to vector<2x32xbf16>
    %cst_50 = arith.constant dense<0.000000e+00> : vector<2x96xf32>
    %211 = tpu.matmul %210, %12, %cst_50 {dimension_numbers = #tpu.dot_dimension_numbers<[1], [0], [0], [1], [0, 0, 1, 1], [], []>} : vector<2x32xbf16>, vector<32x96xbf16>, vector<2x96xf32> -> vector<2x96xf32>
    %212 = arith.addf %211, %16 : vector<2x96xf32>
    %213 = arith.truncf %205 : vector<2x32xf32> to vector<2x32xbf16>
    %cst_51 = arith.constant dense<0.000000e+00> : vector<2x96xf32>
    %214 = tpu.matmul %213, %13, %cst_51 {dimension_numbers = #tpu.dot_dimension_numbers<[1], [0], [0], [1], [0, 0, 1, 1], [], []>} : vector<2x32xbf16>, vector<32x96xbf16>, vector<2x96xf32> -> vector<2x96xf32>
    %215 = arith.addf %214, %19 : vector<2x96xf32>
    %216 = vector.extract_strided_slice %208 {offsets = [0, 0], sizes = [2, 32], strides = [1, 1]} : vector<2x96xf32> to vector<2x32xf32>
    %217 = vector.extract_strided_slice %212 {offsets = [0, 0], sizes = [2, 32], strides = [1, 1]} : vector<2x96xf32> to vector<2x32xf32>
    %218 = arith.addf %216, %217 : vector<2x32xf32>
    %219 = arith.negf %218 : vector<2x32xf32>
    %220 = math.exp %219 : vector<2x32xf32>
    %cst_52 = arith.constant 1.000000e+00 : f32
    %221 = vector.broadcast %cst_52 : f32 to vector<2x32xf32>
    %222 = arith.addf %221, %220 : vector<2x32xf32>
    %223 = arith.divf %221, %222 : vector<2x32xf32>
    %224 = vector.extract_strided_slice %208 {offsets = [0, 32], sizes = [2, 32], strides = [1, 1]} : vector<2x96xf32> to vector<2x32xf32>
    %225 = vector.extract_strided_slice %212 {offsets = [0, 32], sizes = [2, 32], strides = [1, 1]} : vector<2x96xf32> to vector<2x32xf32>
    %226 = arith.addf %224, %225 : vector<2x32xf32>
    %227 = arith.negf %226 : vector<2x32xf32>
    %228 = math.exp %227 : vector<2x32xf32>
    %cst_53 = arith.constant 1.000000e+00 : f32
    %229 = vector.broadcast %cst_53 : f32 to vector<2x32xf32>
    %230 = arith.addf %229, %228 : vector<2x32xf32>
    %231 = arith.divf %229, %230 : vector<2x32xf32>
    %232 = vector.extract_strided_slice %208 {offsets = [0, 64], sizes = [2, 32], strides = [1, 1]} : vector<2x96xf32> to vector<2x32xf32>
    %233 = vector.extract_strided_slice %212 {offsets = [0, 64], sizes = [2, 32], strides = [1, 1]} : vector<2x96xf32> to vector<2x32xf32>
    %234 = arith.mulf %223, %233 : vector<2x32xf32>
    %235 = arith.addf %232, %234 : vector<2x32xf32>
    %236 = math.tanh %235 : vector<2x32xf32>
    %cst_54 = arith.constant 1.000000e+00 : f32
    %237 = vector.broadcast %cst_54 : f32 to vector<2x32xf32>
    %238 = arith.subf %237, %231 : vector<2x32xf32>
    %239 = arith.mulf %238, %236 : vector<2x32xf32>
    %240 = arith.mulf %231, %179 : vector<2x32xf32>
    %241 = arith.addf %239, %240 : vector<2x32xf32>
    %242 = vector.extract_strided_slice %209 {offsets = [0, 0], sizes = [2, 32], strides = [1, 1]} : vector<2x96xf32> to vector<2x32xf32>
    %243 = vector.extract_strided_slice %215 {offsets = [0, 0], sizes = [2, 32], strides = [1, 1]} : vector<2x96xf32> to vector<2x32xf32>
    %244 = arith.addf %242, %243 : vector<2x32xf32>
    %245 = arith.negf %244 : vector<2x32xf32>
    %246 = math.exp %245 : vector<2x32xf32>
    %cst_55 = arith.constant 1.000000e+00 : f32
    %247 = vector.broadcast %cst_55 : f32 to vector<2x32xf32>
    %248 = arith.addf %247, %246 : vector<2x32xf32>
    %249 = arith.divf %247, %248 : vector<2x32xf32>
    %250 = vector.extract_strided_slice %209 {offsets = [0, 32], sizes = [2, 32], strides = [1, 1]} : vector<2x96xf32> to vector<2x32xf32>
    %251 = vector.extract_strided_slice %215 {offsets = [0, 32], sizes = [2, 32], strides = [1, 1]} : vector<2x96xf32> to vector<2x32xf32>
    %252 = arith.addf %250, %251 : vector<2x32xf32>
    %253 = arith.negf %252 : vector<2x32xf32>
    %254 = math.exp %253 : vector<2x32xf32>
    %cst_56 = arith.constant 1.000000e+00 : f32
    %255 = vector.broadcast %cst_56 : f32 to vector<2x32xf32>
    %256 = arith.addf %255, %254 : vector<2x32xf32>
    %257 = arith.divf %255, %256 : vector<2x32xf32>
    %258 = vector.extract_strided_slice %209 {offsets = [0, 64], sizes = [2, 32], strides = [1, 1]} : vector<2x96xf32> to vector<2x32xf32>
    %259 = vector.extract_strided_slice %215 {offsets = [0, 64], sizes = [2, 32], strides = [1, 1]} : vector<2x96xf32> to vector<2x32xf32>
    %260 = arith.mulf %249, %259 : vector<2x32xf32>
    %261 = arith.addf %258, %260 : vector<2x32xf32>
    %262 = math.tanh %261 : vector<2x32xf32>
    %cst_57 = arith.constant 1.000000e+00 : f32
    %263 = vector.broadcast %cst_57 : f32 to vector<2x32xf32>
    %264 = arith.subf %263, %257 : vector<2x32xf32>
    %265 = arith.mulf %264, %262 : vector<2x32xf32>
    %266 = arith.mulf %257, %205 : vector<2x32xf32>
    %267 = arith.addf %265, %266 : vector<2x32xf32>
    %c6 = arith.constant 6 : index
    %c0_58 = arith.constant 0 : index
    %268 = vector.load %arg10[%c6, %c0_58] : memref<16x64xf32, #tpu.memory_space<vmem>>, vector<2x32xf32>
    tpu.vector_store %arg10[%c6, %c0_58], %241 {strides = array<i32>} : memref<16x64xf32, #tpu.memory_space<vmem>>, vector<2x32xf32>,
    %c8 = arith.constant 8 : index
    %c32_59 = arith.constant 32 : index
    %269 = vector.load %arg10[%c8, %c32_59] : memref<16x64xf32, #tpu.memory_space<vmem>>, vector<2x32xf32>
    tpu.vector_store %arg10[%c8, %c32_59], %267 {strides = array<i32>} : memref<16x64xf32, #tpu.memory_space<vmem>>, vector<2x32xf32>,
    %270 = vector.extract_strided_slice %6 {offsets = [8, 0], sizes = [2, 96], strides = [1, 1]} : vector<16x96xf32> to vector<2x96xf32>
    %271 = vector.extract_strided_slice %11 {offsets = [6, 0], sizes = [2, 96], strides = [1, 1]} : vector<16x96xf32> to vector<2x96xf32>
    %272 = arith.truncf %241 : vector<2x32xf32> to vector<2x32xbf16>
    %cst_60 = arith.constant dense<0.000000e+00> : vector<2x96xf32>
    %273 = tpu.matmul %272, %12, %cst_60 {dimension_numbers = #tpu.dot_dimension_numbers<[1], [0], [0], [1], [0, 0, 1, 1], [], []>} : vector<2x32xbf16>, vector<32x96xbf16>, vector<2x96xf32> -> vector<2x96xf32>
    %274 = arith.addf %273, %16 : vector<2x96xf32>
    %275 = arith.truncf %267 : vector<2x32xf32> to vector<2x32xbf16>
    %cst_61 = arith.constant dense<0.000000e+00> : vector<2x96xf32>
    %276 = tpu.matmul %275, %13, %cst_61 {dimension_numbers = #tpu.dot_dimension_numbers<[1], [0], [0], [1], [0, 0, 1, 1], [], []>} : vector<2x32xbf16>, vector<32x96xbf16>, vector<2x96xf32> -> vector<2x96xf32>
    %277 = arith.addf %276, %19 : vector<2x96xf32>
    %278 = vector.extract_strided_slice %270 {offsets = [0, 0], sizes = [2, 32], strides = [1, 1]} : vector<2x96xf32> to vector<2x32xf32>
    %279 = vector.extract_strided_slice %274 {offsets = [0, 0], sizes = [2, 32], strides = [1, 1]} : vector<2x96xf32> to vector<2x32xf32>
    %280 = arith.addf %278, %279 : vector<2x32xf32>
    %281 = arith.negf %280 : vector<2x32xf32>
    %282 = math.exp %281 : vector<2x32xf32>
    %cst_62 = arith.constant 1.000000e+00 : f32
    %283 = vector.broadcast %cst_62 : f32 to vector<2x32xf32>
    %284 = arith.addf %283, %282 : vector<2x32xf32>
    %285 = arith.divf %283, %284 : vector<2x32xf32>
    %286 = vector.extract_strided_slice %270 {offsets = [0, 32], sizes = [2, 32], strides = [1, 1]} : vector<2x96xf32> to vector<2x32xf32>
    %287 = vector.extract_strided_slice %274 {offsets = [0, 32], sizes = [2, 32], strides = [1, 1]} : vector<2x96xf32> to vector<2x32xf32>
    %288 = arith.addf %286, %287 : vector<2x32xf32>
    %289 = arith.negf %288 : vector<2x32xf32>
    %290 = math.exp %289 : vector<2x32xf32>
    %cst_63 = arith.constant 1.000000e+00 : f32
    %291 = vector.broadcast %cst_63 : f32 to vector<2x32xf32>
    %292 = arith.addf %291, %290 : vector<2x32xf32>
    %293 = arith.divf %291, %292 : vector<2x32xf32>
    %294 = vector.extract_strided_slice %270 {offsets = [0, 64], sizes = [2, 32], strides = [1, 1]} : vector<2x96xf32> to vector<2x32xf32>
    %295 = vector.extract_strided_slice %274 {offsets = [0, 64], sizes = [2, 32], strides = [1, 1]} : vector<2x96xf32> to vector<2x32xf32>
    %296 = arith.mulf %285, %295 : vector<2x32xf32>
    %297 = arith.addf %294, %296 : vector<2x32xf32>
    %298 = math.tanh %297 : vector<2x32xf32>
    %cst_64 = arith.constant 1.000000e+00 : f32
    %299 = vector.broadcast %cst_64 : f32 to vector<2x32xf32>
    %300 = arith.subf %299, %293 : vector<2x32xf32>
    %301 = arith.mulf %300, %298 : vector<2x32xf32>
    %302 = arith.mulf %293, %241 : vector<2x32xf32>
    %303 = arith.addf %301, %302 : vector<2x32xf32>
    %304 = vector.extract_strided_slice %271 {offsets = [0, 0], sizes = [2, 32], strides = [1, 1]} : vector<2x96xf32> to vector<2x32xf32>
    %305 = vector.extract_strided_slice %277 {offsets = [0, 0], sizes = [2, 32], strides = [1, 1]} : vector<2x96xf32> to vector<2x32xf32>
    %306 = arith.addf %304, %305 : vector<2x32xf32>
    %307 = arith.negf %306 : vector<2x32xf32>
    %308 = math.exp %307 : vector<2x32xf32>
    %cst_65 = arith.constant 1.000000e+00 : f32
    %309 = vector.broadcast %cst_65 : f32 to vector<2x32xf32>
    %310 = arith.addf %309, %308 : vector<2x32xf32>
    %311 = arith.divf %309, %310 : vector<2x32xf32>
    %312 = vector.extract_strided_slice %271 {offsets = [0, 32], sizes = [2, 32], strides = [1, 1]} : vector<2x96xf32> to vector<2x32xf32>
    %313 = vector.extract_strided_slice %277 {offsets = [0, 32], sizes = [2, 32], strides = [1, 1]} : vector<2x96xf32> to vector<2x32xf32>
    %314 = arith.addf %312, %313 : vector<2x32xf32>
    %315 = arith.negf %314 : vector<2x32xf32>
    %316 = math.exp %315 : vector<2x32xf32>
    %cst_66 = arith.constant 1.000000e+00 : f32
    %317 = vector.broadcast %cst_66 : f32 to vector<2x32xf32>
    %318 = arith.addf %317, %316 : vector<2x32xf32>
    %319 = arith.divf %317, %318 : vector<2x32xf32>
    %320 = vector.extract_strided_slice %271 {offsets = [0, 64], sizes = [2, 32], strides = [1, 1]} : vector<2x96xf32> to vector<2x32xf32>
    %321 = vector.extract_strided_slice %277 {offsets = [0, 64], sizes = [2, 32], strides = [1, 1]} : vector<2x96xf32> to vector<2x32xf32>
    %322 = arith.mulf %311, %321 : vector<2x32xf32>
    %323 = arith.addf %320, %322 : vector<2x32xf32>
    %324 = math.tanh %323 : vector<2x32xf32>
    %cst_67 = arith.constant 1.000000e+00 : f32
    %325 = vector.broadcast %cst_67 : f32 to vector<2x32xf32>
    %326 = arith.subf %325, %319 : vector<2x32xf32>
    %327 = arith.mulf %326, %324 : vector<2x32xf32>
    %328 = arith.mulf %319, %267 : vector<2x32xf32>
    %329 = arith.addf %327, %328 : vector<2x32xf32>
    %c8_68 = arith.constant 8 : index
    %c0_69 = arith.constant 0 : index
    %330 = vector.load %arg10[%c8_68, %c0_69] : memref<16x64xf32, #tpu.memory_space<vmem>>, vector<2x32xf32>
    tpu.vector_store %arg10[%c8_68, %c0_69], %303 {strides = array<i32>} : memref<16x64xf32, #tpu.memory_space<vmem>>, vector<2x32xf32>,
    %c6_70 = arith.constant 6 : index
    %c32_71 = arith.constant 32 : index
    %331 = vector.load %arg10[%c6_70, %c32_71] : memref<16x64xf32, #tpu.memory_space<vmem>>, vector<2x32xf32>
    tpu.vector_store %arg10[%c6_70, %c32_71], %329 {strides = array<i32>} : memref<16x64xf32, #tpu.memory_space<vmem>>, vector<2x32xf32>,
    %332 = vector.extract_strided_slice %6 {offsets = [10, 0], sizes = [2, 96], strides = [1, 1]} : vector<16x96xf32> to vector<2x96xf32>
    %333 = vector.extract_strided_slice %11 {offsets = [4, 0], sizes = [2, 96], strides = [1, 1]} : vector<16x96xf32> to vector<2x96xf32>
    %334 = arith.truncf %303 : vector<2x32xf32> to vector<2x32xbf16>
    %cst_72 = arith.constant dense<0.000000e+00> : vector<2x96xf32>
    %335 = tpu.matmul %334, %12, %cst_72 {dimension_numbers = #tpu.dot_dimension_numbers<[1], [0], [0], [1], [0, 0, 1, 1], [], []>} : vector<2x32xbf16>, vector<32x96xbf16>, vector<2x96xf32> -> vector<2x96xf32>
    %336 = arith.addf %335, %16 : vector<2x96xf32>
    %337 = arith.truncf %329 : vector<2x32xf32> to vector<2x32xbf16>
    %cst_73 = arith.constant dense<0.000000e+00> : vector<2x96xf32>
    %338 = tpu.matmul %337, %13, %cst_73 {dimension_numbers = #tpu.dot_dimension_numbers<[1], [0], [0], [1], [0, 0, 1, 1], [], []>} : vector<2x32xbf16>, vector<32x96xbf16>, vector<2x96xf32> -> vector<2x96xf32>
    %339 = arith.addf %338, %19 : vector<2x96xf32>
    %340 = vector.extract_strided_slice %332 {offsets = [0, 0], sizes = [2, 32], strides = [1, 1]} : vector<2x96xf32> to vector<2x32xf32>
    %341 = vector.extract_strided_slice %336 {offsets = [0, 0], sizes = [2, 32], strides = [1, 1]} : vector<2x96xf32> to vector<2x32xf32>
    %342 = arith.addf %340, %341 : vector<2x32xf32>
    %343 = arith.negf %342 : vector<2x32xf32>
    %344 = math.exp %343 : vector<2x32xf32>
    %cst_74 = arith.constant 1.000000e+00 : f32
    %345 = vector.broadcast %cst_74 : f32 to vector<2x32xf32>
    %346 = arith.addf %345, %344 : vector<2x32xf32>
    %347 = arith.divf %345, %346 : vector<2x32xf32>
    %348 = vector.extract_strided_slice %332 {offsets = [0, 32], sizes = [2, 32], strides = [1, 1]} : vector<2x96xf32> to vector<2x32xf32>
    %349 = vector.extract_strided_slice %336 {offsets = [0, 32], sizes = [2, 32], strides = [1, 1]} : vector<2x96xf32> to vector<2x32xf32>
    %350 = arith.addf %348, %349 : vector<2x32xf32>
    %351 = arith.negf %350 : vector<2x32xf32>
    %352 = math.exp %351 : vector<2x32xf32>
    %cst_75 = arith.constant 1.000000e+00 : f32
    %353 = vector.broadcast %cst_75 : f32 to vector<2x32xf32>
    %354 = arith.addf %353, %352 : vector<2x32xf32>
    %355 = arith.divf %353, %354 : vector<2x32xf32>
    %356 = vector.extract_strided_slice %332 {offsets = [0, 64], sizes = [2, 32], strides = [1, 1]} : vector<2x96xf32> to vector<2x32xf32>
    %357 = vector.extract_strided_slice %336 {offsets = [0, 64], sizes = [2, 32], strides = [1, 1]} : vector<2x96xf32> to vector<2x32xf32>
    %358 = arith.mulf %347, %357 : vector<2x32xf32>
    %359 = arith.addf %356, %358 : vector<2x32xf32>
    %360 = math.tanh %359 : vector<2x32xf32>
    %cst_76 = arith.constant 1.000000e+00 : f32
    %361 = vector.broadcast %cst_76 : f32 to vector<2x32xf32>
    %362 = arith.subf %361, %355 : vector<2x32xf32>
    %363 = arith.mulf %362, %360 : vector<2x32xf32>
    %364 = arith.mulf %355, %303 : vector<2x32xf32>
    %365 = arith.addf %363, %364 : vector<2x32xf32>
    %366 = vector.extract_strided_slice %333 {offsets = [0, 0], sizes = [2, 32], strides = [1, 1]} : vector<2x96xf32> to vector<2x32xf32>
    %367 = vector.extract_strided_slice %339 {offsets = [0, 0], sizes = [2, 32], strides = [1, 1]} : vector<2x96xf32> to vector<2x32xf32>
    %368 = arith.addf %366, %367 : vector<2x32xf32>
    %369 = arith.negf %368 : vector<2x32xf32>
    %370 = math.exp %369 : vector<2x32xf32>
    %cst_77 = arith.constant 1.000000e+00 : f32
    %371 = vector.broadcast %cst_77 : f32 to vector<2x32xf32>
    %372 = arith.addf %371, %370 : vector<2x32xf32>
    %373 = arith.divf %371, %372 : vector<2x32xf32>
    %374 = vector.extract_strided_slice %333 {offsets = [0, 32], sizes = [2, 32], strides = [1, 1]} : vector<2x96xf32> to vector<2x32xf32>
    %375 = vector.extract_strided_slice %339 {offsets = [0, 32], sizes = [2, 32], strides = [1, 1]} : vector<2x96xf32> to vector<2x32xf32>
    %376 = arith.addf %374, %375 : vector<2x32xf32>
    %377 = arith.negf %376 : vector<2x32xf32>
    %378 = math.exp %377 : vector<2x32xf32>
    %cst_78 = arith.constant 1.000000e+00 : f32
    %379 = vector.broadcast %cst_78 : f32 to vector<2x32xf32>
    %380 = arith.addf %379, %378 : vector<2x32xf32>
    %381 = arith.divf %379, %380 : vector<2x32xf32>
    %382 = vector.extract_strided_slice %333 {offsets = [0, 64], sizes = [2, 32], strides = [1, 1]} : vector<2x96xf32> to vector<2x32xf32>
    %383 = vector.extract_strided_slice %339 {offsets = [0, 64], sizes = [2, 32], strides = [1, 1]} : vector<2x96xf32> to vector<2x32xf32>
    %384 = arith.mulf %373, %383 : vector<2x32xf32>
    %385 = arith.addf %382, %384 : vector<2x32xf32>
    %386 = math.tanh %385 : vector<2x32xf32>
    %cst_79 = arith.constant 1.000000e+00 : f32
    %387 = vector.broadcast %cst_79 : f32 to vector<2x32xf32>
    %388 = arith.subf %387, %381 : vector<2x32xf32>
    %389 = arith.mulf %388, %386 : vector<2x32xf32>
    %390 = arith.mulf %381, %329 : vector<2x32xf32>
    %391 = arith.addf %389, %390 : vector<2x32xf32>
    %c10_80 = arith.constant 10 : index
    %c0_81 = arith.constant 0 : index
    %392 = vector.load %arg10[%c10_80, %c0_81] : memref<16x64xf32, #tpu.memory_space<vmem>>, vector<2x32xf32>
    tpu.vector_store %arg10[%c10_80, %c0_81], %365 {strides = array<i32>} : memref<16x64xf32, #tpu.memory_space<vmem>>, vector<2x32xf32>,
    %c4_82 = arith.constant 4 : index
    %c32_83 = arith.constant 32 : index
    %393 = vector.load %arg10[%c4_82, %c32_83] : memref<16x64xf32, #tpu.memory_space<vmem>>, vector<2x32xf32>
    tpu.vector_store %arg10[%c4_82, %c32_83], %391 {strides = array<i32>} : memref<16x64xf32, #tpu.memory_space<vmem>>, vector<2x32xf32>,
    %394 = vector.extract_strided_slice %6 {offsets = [12, 0], sizes = [2, 96], strides = [1, 1]} : vector<16x96xf32> to vector<2x96xf32>
    %395 = vector.extract_strided_slice %11 {offsets = [2, 0], sizes = [2, 96], strides = [1, 1]} : vector<16x96xf32> to vector<2x96xf32>
    %396 = arith.truncf %365 : vector<2x32xf32> to vector<2x32xbf16>
    %cst_84 = arith.constant dense<0.000000e+00> : vector<2x96xf32>
    %397 = tpu.matmul %396, %12, %cst_84 {dimension_numbers = #tpu.dot_dimension_numbers<[1], [0], [0], [1], [0, 0, 1, 1], [], []>} : vector<2x32xbf16>, vector<32x96xbf16>, vector<2x96xf32> -> vector<2x96xf32>
    %398 = arith.addf %397, %16 : vector<2x96xf32>
    %399 = arith.truncf %391 : vector<2x32xf32> to vector<2x32xbf16>
    %cst_85 = arith.constant dense<0.000000e+00> : vector<2x96xf32>
    %400 = tpu.matmul %399, %13, %cst_85 {dimension_numbers = #tpu.dot_dimension_numbers<[1], [0], [0], [1], [0, 0, 1, 1], [], []>} : vector<2x32xbf16>, vector<32x96xbf16>, vector<2x96xf32> -> vector<2x96xf32>
    %401 = arith.addf %400, %19 : vector<2x96xf32>
    %402 = vector.extract_strided_slice %394 {offsets = [0, 0], sizes = [2, 32], strides = [1, 1]} : vector<2x96xf32> to vector<2x32xf32>
    %403 = vector.extract_strided_slice %398 {offsets = [0, 0], sizes = [2, 32], strides = [1, 1]} : vector<2x96xf32> to vector<2x32xf32>
    %404 = arith.addf %402, %403 : vector<2x32xf32>
    %405 = arith.negf %404 : vector<2x32xf32>
    %406 = math.exp %405 : vector<2x32xf32>
    %cst_86 = arith.constant 1.000000e+00 : f32
    %407 = vector.broadcast %cst_86 : f32 to vector<2x32xf32>
    %408 = arith.addf %407, %406 : vector<2x32xf32>
    %409 = arith.divf %407, %408 : vector<2x32xf32>
    %410 = vector.extract_strided_slice %394 {offsets = [0, 32], sizes = [2, 32], strides = [1, 1]} : vector<2x96xf32> to vector<2x32xf32>
    %411 = vector.extract_strided_slice %398 {offsets = [0, 32], sizes = [2, 32], strides = [1, 1]} : vector<2x96xf32> to vector<2x32xf32>
    %412 = arith.addf %410, %411 : vector<2x32xf32>
    %413 = arith.negf %412 : vector<2x32xf32>
    %414 = math.exp %413 : vector<2x32xf32>
    %cst_87 = arith.constant 1.000000e+00 : f32
    %415 = vector.broadcast %cst_87 : f32 to vector<2x32xf32>
    %416 = arith.addf %415, %414 : vector<2x32xf32>
    %417 = arith.divf %415, %416 : vector<2x32xf32>
    %418 = vector.extract_strided_slice %394 {offsets = [0, 64], sizes = [2, 32], strides = [1, 1]} : vector<2x96xf32> to vector<2x32xf32>
    %419 = vector.extract_strided_slice %398 {offsets = [0, 64], sizes = [2, 32], strides = [1, 1]} : vector<2x96xf32> to vector<2x32xf32>
    %420 = arith.mulf %409, %419 : vector<2x32xf32>
    %421 = arith.addf %418, %420 : vector<2x32xf32>
    %422 = math.tanh %421 : vector<2x32xf32>
    %cst_88 = arith.constant 1.000000e+00 : f32
    %423 = vector.broadcast %cst_88 : f32 to vector<2x32xf32>
    %424 = arith.subf %423, %417 : vector<2x32xf32>
    %425 = arith.mulf %424, %422 : vector<2x32xf32>
    %426 = arith.mulf %417, %365 : vector<2x32xf32>
    %427 = arith.addf %425, %426 : vector<2x32xf32>
    %428 = vector.extract_strided_slice %395 {offsets = [0, 0], sizes = [2, 32], strides = [1, 1]} : vector<2x96xf32> to vector<2x32xf32>
    %429 = vector.extract_strided_slice %401 {offsets = [0, 0], sizes = [2, 32], strides = [1, 1]} : vector<2x96xf32> to vector<2x32xf32>
    %430 = arith.addf %428, %429 : vector<2x32xf32>
    %431 = arith.negf %430 : vector<2x32xf32>
    %432 = math.exp %431 : vector<2x32xf32>
    %cst_89 = arith.constant 1.000000e+00 : f32
    %433 = vector.broadcast %cst_89 : f32 to vector<2x32xf32>
    %434 = arith.addf %433, %432 : vector<2x32xf32>
    %435 = arith.divf %433, %434 : vector<2x32xf32>
    %436 = vector.extract_strided_slice %395 {offsets = [0, 32], sizes = [2, 32], strides = [1, 1]} : vector<2x96xf32> to vector<2x32xf32>
    %437 = vector.extract_strided_slice %401 {offsets = [0, 32], sizes = [2, 32], strides = [1, 1]} : vector<2x96xf32> to vector<2x32xf32>
    %438 = arith.addf %436, %437 : vector<2x32xf32>
    %439 = arith.negf %438 : vector<2x32xf32>
    %440 = math.exp %439 : vector<2x32xf32>
    %cst_90 = arith.constant 1.000000e+00 : f32
    %441 = vector.broadcast %cst_90 : f32 to vector<2x32xf32>
    %442 = arith.addf %441, %440 : vector<2x32xf32>
    %443 = arith.divf %441, %442 : vector<2x32xf32>
    %444 = vector.extract_strided_slice %395 {offsets = [0, 64], sizes = [2, 32], strides = [1, 1]} : vector<2x96xf32> to vector<2x32xf32>
    %445 = vector.extract_strided_slice %401 {offsets = [0, 64], sizes = [2, 32], strides = [1, 1]} : vector<2x96xf32> to vector<2x32xf32>
    %446 = arith.mulf %435, %445 : vector<2x32xf32>
    %447 = arith.addf %444, %446 : vector<2x32xf32>
    %448 = math.tanh %447 : vector<2x32xf32>
    %cst_91 = arith.constant 1.000000e+00 : f32
    %449 = vector.broadcast %cst_91 : f32 to vector<2x32xf32>
    %450 = arith.subf %449, %443 : vector<2x32xf32>
    %451 = arith.mulf %450, %448 : vector<2x32xf32>
    %452 = arith.mulf %443, %391 : vector<2x32xf32>
    %453 = arith.addf %451, %452 : vector<2x32xf32>
    %c12_92 = arith.constant 12 : index
    %c0_93 = arith.constant 0 : index
    %454 = vector.load %arg10[%c12_92, %c0_93] : memref<16x64xf32, #tpu.memory_space<vmem>>, vector<2x32xf32>
    tpu.vector_store %arg10[%c12_92, %c0_93], %427 {strides = array<i32>} : memref<16x64xf32, #tpu.memory_space<vmem>>, vector<2x32xf32>,
    %c2_94 = arith.constant 2 : index
    %c32_95 = arith.constant 32 : index
    %455 = vector.load %arg10[%c2_94, %c32_95] : memref<16x64xf32, #tpu.memory_space<vmem>>, vector<2x32xf32>
    tpu.vector_store %arg10[%c2_94, %c32_95], %453 {strides = array<i32>} : memref<16x64xf32, #tpu.memory_space<vmem>>, vector<2x32xf32>,
    %456 = vector.extract_strided_slice %6 {offsets = [14, 0], sizes = [2, 96], strides = [1, 1]} : vector<16x96xf32> to vector<2x96xf32>
    %457 = vector.extract_strided_slice %11 {offsets = [0, 0], sizes = [2, 96], strides = [1, 1]} : vector<16x96xf32> to vector<2x96xf32>
    %458 = arith.truncf %427 : vector<2x32xf32> to vector<2x32xbf16>
    %cst_96 = arith.constant dense<0.000000e+00> : vector<2x96xf32>
    %459 = tpu.matmul %458, %12, %cst_96 {dimension_numbers = #tpu.dot_dimension_numbers<[1], [0], [0], [1], [0, 0, 1, 1], [], []>} : vector<2x32xbf16>, vector<32x96xbf16>, vector<2x96xf32> -> vector<2x96xf32>
    %460 = arith.addf %459, %16 : vector<2x96xf32>
    %461 = arith.truncf %453 : vector<2x32xf32> to vector<2x32xbf16>
    %cst_97 = arith.constant dense<0.000000e+00> : vector<2x96xf32>
    %462 = tpu.matmul %461, %13, %cst_97 {dimension_numbers = #tpu.dot_dimension_numbers<[1], [0], [0], [1], [0, 0, 1, 1], [], []>} : vector<2x32xbf16>, vector<32x96xbf16>, vector<2x96xf32> -> vector<2x96xf32>
    %463 = arith.addf %462, %19 : vector<2x96xf32>
    %464 = vector.extract_strided_slice %456 {offsets = [0, 0], sizes = [2, 32], strides = [1, 1]} : vector<2x96xf32> to vector<2x32xf32>
    %465 = vector.extract_strided_slice %460 {offsets = [0, 0], sizes = [2, 32], strides = [1, 1]} : vector<2x96xf32> to vector<2x32xf32>
    %466 = arith.addf %464, %465 : vector<2x32xf32>
    %467 = arith.negf %466 : vector<2x32xf32>
    %468 = math.exp %467 : vector<2x32xf32>
    %cst_98 = arith.constant 1.000000e+00 : f32
    %469 = vector.broadcast %cst_98 : f32 to vector<2x32xf32>
    %470 = arith.addf %469, %468 : vector<2x32xf32>
    %471 = arith.divf %469, %470 : vector<2x32xf32>
    %472 = vector.extract_strided_slice %456 {offsets = [0, 32], sizes = [2, 32], strides = [1, 1]} : vector<2x96xf32> to vector<2x32xf32>
    %473 = vector.extract_strided_slice %460 {offsets = [0, 32], sizes = [2, 32], strides = [1, 1]} : vector<2x96xf32> to vector<2x32xf32>
    %474 = arith.addf %472, %473 : vector<2x32xf32>
    %475 = arith.negf %474 : vector<2x32xf32>
    %476 = math.exp %475 : vector<2x32xf32>
    %cst_99 = arith.constant 1.000000e+00 : f32
    %477 = vector.broadcast %cst_99 : f32 to vector<2x32xf32>
    %478 = arith.addf %477, %476 : vector<2x32xf32>
    %479 = arith.divf %477, %478 : vector<2x32xf32>
    %480 = vector.extract_strided_slice %456 {offsets = [0, 64], sizes = [2, 32], strides = [1, 1]} : vector<2x96xf32> to vector<2x32xf32>
    %481 = vector.extract_strided_slice %460 {offsets = [0, 64], sizes = [2, 32], strides = [1, 1]} : vector<2x96xf32> to vector<2x32xf32>
    %482 = arith.mulf %471, %481 : vector<2x32xf32>
    %483 = arith.addf %480, %482 : vector<2x32xf32>
    %484 = math.tanh %483 : vector<2x32xf32>
    %cst_100 = arith.constant 1.000000e+00 : f32
    %485 = vector.broadcast %cst_100 : f32 to vector<2x32xf32>
    %486 = arith.subf %485, %479 : vector<2x32xf32>
    %487 = arith.mulf %486, %484 : vector<2x32xf32>
    %488 = arith.mulf %479, %427 : vector<2x32xf32>
    %489 = arith.addf %487, %488 : vector<2x32xf32>
    %490 = vector.extract_strided_slice %457 {offsets = [0, 0], sizes = [2, 32], strides = [1, 1]} : vector<2x96xf32> to vector<2x32xf32>
    %491 = vector.extract_strided_slice %463 {offsets = [0, 0], sizes = [2, 32], strides = [1, 1]} : vector<2x96xf32> to vector<2x32xf32>
    %492 = arith.addf %490, %491 : vector<2x32xf32>
    %493 = arith.negf %492 : vector<2x32xf32>
    %494 = math.exp %493 : vector<2x32xf32>
    %cst_101 = arith.constant 1.000000e+00 : f32
    %495 = vector.broadcast %cst_101 : f32 to vector<2x32xf32>
    %496 = arith.addf %495, %494 : vector<2x32xf32>
    %497 = arith.divf %495, %496 : vector<2x32xf32>
    %498 = vector.extract_strided_slice %457 {offsets = [0, 32], sizes = [2, 32], strides = [1, 1]} : vector<2x96xf32> to vector<2x32xf32>
    %499 = vector.extract_strided_slice %463 {offsets = [0, 32], sizes = [2, 32], strides = [1, 1]} : vector<2x96xf32> to vector<2x32xf32>
    %500 = arith.addf %498, %499 : vector<2x32xf32>
    %501 = arith.negf %500 : vector<2x32xf32>
    %502 = math.exp %501 : vector<2x32xf32>
    %cst_102 = arith.constant 1.000000e+00 : f32
    %503 = vector.broadcast %cst_102 : f32 to vector<2x32xf32>
    %504 = arith.addf %503, %502 : vector<2x32xf32>
    %505 = arith.divf %503, %504 : vector<2x32xf32>
    %506 = vector.extract_strided_slice %457 {offsets = [0, 64], sizes = [2, 32], strides = [1, 1]} : vector<2x96xf32> to vector<2x32xf32>
    %507 = vector.extract_strided_slice %463 {offsets = [0, 64], sizes = [2, 32], strides = [1, 1]} : vector<2x96xf32> to vector<2x32xf32>
    %508 = arith.mulf %497, %507 : vector<2x32xf32>
    %509 = arith.addf %506, %508 : vector<2x32xf32>
    %510 = math.tanh %509 : vector<2x32xf32>
    %cst_103 = arith.constant 1.000000e+00 : f32
    %511 = vector.broadcast %cst_103 : f32 to vector<2x32xf32>
    %512 = arith.subf %511, %505 : vector<2x32xf32>
    %513 = arith.mulf %512, %510 : vector<2x32xf32>
    %514 = arith.mulf %505, %453 : vector<2x32xf32>
    %515 = arith.addf %513, %514 : vector<2x32xf32>
    %c14_104 = arith.constant 14 : index
    %c0_105 = arith.constant 0 : index
    %516 = vector.load %arg10[%c14_104, %c0_105] : memref<16x64xf32, #tpu.memory_space<vmem>>, vector<2x32xf32>
    tpu.vector_store %arg10[%c14_104, %c0_105], %489 {strides = array<i32>} : memref<16x64xf32, #tpu.memory_space<vmem>>, vector<2x32xf32>,
    %c0_106 = arith.constant 0 : index
    %c32_107 = arith.constant 32 : index
    %517 = vector.load %arg10[%c0_106, %c32_107] : memref<16x64xf32, #tpu.memory_space<vmem>>, vector<2x32xf32>
    tpu.vector_store %arg10[%c0_106, %c32_107], %515 {strides = array<i32>} : memref<16x64xf32, #tpu.memory_space<vmem>>, vector<2x32xf32>,
    return
  }
  func.func @transform_0(%arg0: i32) -> (i32, i32) {
    %c0_i32 = arith.constant 0 : i32
    %c0_i32_0 = arith.constant 0 : i32
    %c0_i32_1 = arith.constant 0 : i32
    return %c0_i32, %c0_i32_0 : i32, i32
  }
  func.func @transform_1(%arg0: i32) -> (i32, i32) {
    %c0_i32 = arith.constant 0 : i32
    %c0_i32_0 = arith.constant 0 : i32
    %c0_i32_1 = arith.constant 0 : i32
    return %c0_i32, %c0_i32_0 : i32, i32
  }
  func.func @transform_2(%arg0: i32) -> (i32, i32) {
    %c0_i32 = arith.constant 0 : i32
    %c0_i32_0 = arith.constant 0 : i32
    %c0_i32_1 = arith.constant 0 : i32
    return %c0_i32, %c0_i32_0 : i32, i32
  }
  func.func @transform_3(%arg0: i32) -> (i32, i32) {
    %c0_i32 = arith.constant 0 : i32
    %c0_i32_0 = arith.constant 0 : i32
    %c0_i32_1 = arith.constant 0 : i32
    return %c0_i32, %c0_i32_0 : i32, i32
  }
  func.func @transform_4(%arg0: i32) -> (i32, i32) {
    %c0_i32 = arith.constant 0 : i32
    %c0_i32_0 = arith.constant 0 : i32
    %c0_i32_1 = arith.constant 0 : i32
    return %c0_i32, %c0_i32_0 : i32, i32
  }
  func.func @transform_5(%arg0: i32) -> (i32, i32) {
    %c0_i32 = arith.constant 0 : i32
    %c0_i32_0 = arith.constant 0 : i32
    %c0_i32_1 = arith.constant 0 : i32
    return %c0_i32, %c0_i32_0 : i32, i32
  }
  func.func @transform_6(%arg0: i32) -> (i32, i32) {
    %c0_i32 = arith.constant 0 : i32
    %c0_i32_0 = arith.constant 0 : i32
    %c0_i32_1 = arith.constant 0 : i32
    return %c0_i32, %c0_i32_0 : i32, i32
  }
  func.func @transform_7(%arg0: i32) -> (i32, i32) {
    %c0_i32 = arith.constant 0 : i32
    %c0_i32_0 = arith.constant 0 : i32
    %c0_i32_1 = arith.constant 0 : i32
    return %c0_i32, %c0_i32_0 : i32, i32
  }
  func.func @transform_8(%arg0: i32) -> (i32, i32) {
    %c0_i32 = arith.constant 0 : i32
    %c0_i32_0 = arith.constant 0 : i32
    %c0_i32_1 = arith.constant 0 : i32
    return %c0_i32, %c0_i32_0 : i32, i32
  }
  func.func @transform_9(%arg0: i32) -> (i32, i32) {
    %c0_i32 = arith.constant 0 : i32
    %c0_i32_0 = arith.constant 0 : i32
    %c0_i32_1 = arith.constant 0 : i32
    return %c0_i32, %c0_i32_0 : i32, i32
  }
}

</mosaic_0001>

<llo_original>
// kernel: rnns_forward.2
$region0: #{rnns_forward.2}
  #allocation0 [shape = 'u32[]', space=smem, size = 0x4, offset = 0x4, fixed_abs, tag = 'smem constant byte address 0x4 - core index']
  #allocation1 [shape = 'u32[144,128]{1,0:T(1,128)}', space=vmem, size = 0x12000, scoped, tag = 'internal scratch']
  %s0 = inlined_call_operand.vmem [shape: f32[16,32], index: 0, kind: input, shape index: {}]
  %s1 = inlined_call_operand.vmem [shape: bf16[32,96], index: 1, kind: input, shape index: {}]
  %s2 = inlined_call_operand.vmem [shape: bf16[32,96], index: 2, kind: input, shape index: {}]
  %s3 = inlined_call_operand.vmem [shape: bf16[32,96], index: 3, kind: input, shape index: {}]
  %s4 = inlined_call_operand.vmem [shape: bf16[32,96], index: 4, kind: input, shape index: {}]
  %s5 = inlined_call_operand.vmem [shape: f32[1,96], index: 5, kind: input, shape index: {}]
  %s6 = inlined_call_operand.vmem [shape: f32[1,96], index: 6, kind: input, shape index: {}]
  %s7 = inlined_call_operand.vmem [shape: f32[1,96], index: 7, kind: input, shape index: {}]
  %s8 = inlined_call_operand.vmem [shape: f32[1,96], index: 8, kind: input, shape index: {}]
  %s9 = inlined_call_operand.vmem [shape: f32[16,64], index: 9, kind: output, shape index: {}]
  %s10 = sld [smem:[#allocation0]]
  $region46: #{rnns_forward.2} parent=0
    _
  %s12 = ssub.s32 1, %s10
  %s13 = scalar_select 0, %s12, %s10
  // Predicated region
  $region2: #{rnns_forward.2} parent=0 // pred_check
    _
  $region3: #{rnns_forward.2} parent=0 // pred_check_branch
    %15 = sbr.rel (0) target = $region5
  $region4: #{rnns_forward.2} parent=0 // pred_region
    _
  $region5: #{rnns_forward.2} parent=0 // pred_fallthru
    _
  // Predicated region
  $region6: #{rnns_forward.2} parent=0 // pred_check
    _
  $region7: #{rnns_forward.2} parent=0 // pred_check_branch
    %17 = sbr.rel (0) target = $region9
  $region8: #{rnns_forward.2} parent=0 // pred_region
    _
  $region9: #{rnns_forward.2} parent=0 // pred_fallthru
    _
  // Predicated region
  $region10: #{rnns_forward.2} parent=0 // pred_check
    _
  $region11: #{rnns_forward.2} parent=0 // pred_check_branch
    %19 = sbr.rel (0) target = $region13
  $region12: #{rnns_forward.2} parent=0 // pred_region
    _
  $region13: #{rnns_forward.2} parent=0 // pred_fallthru
    _
  // Predicated region
  $region14: #{rnns_forward.2} parent=0 // pred_check
    _
  $region15: #{rnns_forward.2} parent=0 // pred_check_branch
    %21 = sbr.rel (0) target = $region17
  $region16: #{rnns_forward.2} parent=0 // pred_region
    _
  $region17: #{rnns_forward.2} parent=0 // pred_fallthru
    _
  // Predicated region
  $region18: #{rnns_forward.2} parent=0 // pred_check
    _
  $region19: #{rnns_forward.2} parent=0 // pred_check_branch
    %23 = sbr.rel (0) target = $region21
  $region20: #{rnns_forward.2} parent=0 // pred_region
    _
  $region21: #{rnns_forward.2} parent=0 // pred_fallthru
    _
  // Predicated region
  $region22: #{rnns_forward.2} parent=0 // pred_check
    _
  $region23: #{rnns_forward.2} parent=0 // pred_check_branch
    %25 = sbr.rel (0) target = $region25
  $region24: #{rnns_forward.2} parent=0 // pred_region
    _
  $region25: #{rnns_forward.2} parent=0 // pred_fallthru
    _
  // Predicated region
  $region26: #{rnns_forward.2} parent=0 // pred_check
    _
  $region27: #{rnns_forward.2} parent=0 // pred_check_branch
    %27 = sbr.rel (0) target = $region29
  $region28: #{rnns_forward.2} parent=0 // pred_region
    _
  $region29: #{rnns_forward.2} parent=0 // pred_fallthru
    _
  // Predicated region
  $region30: #{rnns_forward.2} parent=0 // pred_check
    _
  $region31: #{rnns_forward.2} parent=0 // pred_check_branch
    %29 = sbr.rel (0) target = $region33
  $region32: #{rnns_forward.2} parent=0 // pred_region
    _
  $region33: #{rnns_forward.2} parent=0 // pred_fallthru
    _
  // Predicated region
  $region34: #{rnns_forward.2} parent=0 // pred_check
    _
  $region35: #{rnns_forward.2} parent=0 // pred_check_branch
    %31 = sbr.rel (0) target = $region37
  $region36: #{rnns_forward.2} parent=0 // pred_region
    _
  $region37: #{rnns_forward.2} parent=0 // pred_fallthru
    _
  %v33 = vld [vmem:[%s0] sm:$0xff]
  %v34 = vld [vmem:[%s0 + $0x8] sm:$0xff]
  %v35 = vpack.c.bf16 %v34, %v33
  %v36 = vld [vmem:[%s1] sm:$0xf]
  %v37 = vld [vmem:[%s1 + $0x4] sm:$0xf]
  %v38 = vld [vmem:[%s1 + $0x8] sm:$0xf]
  %v39 = vld [vmem:[%s1 + $0xc] sm:$0xf]
  %v40 = vld [vmem:[%s5] sm:$0x1]
  %v42 = vlaneseq
  %v43 = vshrl.u32 %v42, 7
  %v44 = vsub.s32 0, %v43
  %v45 = vrot.slane %v40, %v44
  %v51 = vunpack.c.l.b16 %v36
  %v52 = vunpack.c.l.b16 %v37
  %v53 = vunpack.c.l.b16 %v38
  %v54 = vunpack.c.l.b16 %v39
  %v55 = vpack.c.b16 %v52, %v51
  %v56 = vpack.c.b16 %v54, %v53
  %vm59 = vcmask 261120
  %v61 = vsel %vm59, %v35, 0
  %63 = vmatprep.subr.bf16.mxu0 0
  %64 = vmatpush1.bf16.msra.mxu0 %v55
  %65 = vmatprep.subr.bf16.mxu0 0
  %66 = vmatpush1.bf16.msra.mxu0 %v56
  %67 = vmatprep.subr.bf16.mxu0 0
  %68 = vmatpush1.bf16.msra.mxu0 0
  %69 = vmatprep.subr.bf16.mxu0 0
  %70 = vmatpush1.bf16.msra.mxu0 0
  %71 = vmatprep.subr.bf16.mxu0 0
  %72 = vmatpush1.bf16.msra.mxu0 0
  %73 = vmatprep.subr.bf16.mxu0 0
  %74 = vmatpush1.bf16.msra.mxu0 0
  %75 = vmatprep.subr.bf16.mxu0 0
  %76 = vmatpush1.bf16.msra.mxu0 0
  %77 = vmatprep.subr.bf16.mxu0 0
  %78 = vmatpush1.bf16.msra.mxu0 0
  %79 = vmatprep.subr.bf16.mxu0 0
  %80 = vmatpush1.bf16.msra.mxu0 0
  %81 = vmatprep.subr.bf16.mxu0 0
  %82 = vmatpush1.bf16.msra.mxu0 0
  %83 = vmatprep.subr.bf16.mxu0 0
  %84 = vmatpush1.bf16.msra.mxu0 0
  %85 = vmatprep.subr.bf16.mxu0 0
  %86 = vmatpush1.bf16.msra.mxu0 0
  %87 = vmatprep.subr.bf16.mxu0 0
  %88 = vmatpush1.bf16.msra.mxu0 0
  %89 = vmatprep.subr.bf16.mxu0 0
  %90 = vmatpush1.bf16.msra.mxu0 0
  %91 = vmatprep.subr.bf16.mxu0 0
  %92 = vmatpush1.bf16.msra.mxu0 0
  %93 = vmatprep.subr.bf16.mxu0 0
  %94 = vmatpush1.bf16.msra.mxu0 0
  %95 = vmatprep.mubr.bf16.mxu0 0
  %96 = vmatmul.mubr.bf16.gmra.mrb[0].mxu0 %v61
  %v97 = vpop.f32.mrb[0].mxu0
  %v98 = vadd.f32 %v45, %v97
  %v99 = vpop.f32.mrb[0].mxu0
  %v100 = vpop.f32.mrb[0].mxu0
  %v101 = vadd.f32 %v45, %v100
  %v102 = vpop.f32.mrb[0].mxu0
  %103 = vdwg.mxu0
  %v104 = vld [vmem:[%s2] sm:$0xf]
  %v105 = vld [vmem:[%s2 + $0x4] sm:$0xf]
  %v106 = vld [vmem:[%s2 + $0x8] sm:$0xf]
  %v107 = vld [vmem:[%s2 + $0xc] sm:$0xf]
  %v108 = vld [vmem:[%s6] sm:$0x1]
  %v110 = vlaneseq
  %v111 = vshrl.u32 %v110, 7
  %v112 = vsub.s32 0, %v111
  %v113 = vrot.slane %v108, %v112
  %v119 = vunpack.c.l.b16 %v104
  %v120 = vunpack.c.l.b16 %v105
  %v121 = vunpack.c.l.b16 %v106
  %v122 = vunpack.c.l.b16 %v107
  %v123 = vpack.c.b16 %v120, %v119
  %v124 = vpack.c.b16 %v122, %v121
  %127 = vmatprep.subr.bf16.mxu0 0
  %128 = vmatpush1.bf16.msra.mxu0 %v123
  %129 = vmatprep.subr.bf16.mxu0 0
  %130 = vmatpush1.bf16.msra.mxu0 %v124
  %131 = vmatprep.subr.bf16.mxu0 0
  %132 = vmatpush1.bf16.msra.mxu0 0
  %133 = vmatprep.subr.bf16.mxu0 0
  %134 = vmatpush1.bf16.msra.mxu0 0
  %135 = vmatprep.subr.bf16.mxu0 0
  %136 = vmatpush1.bf16.msra.mxu0 0
  %137 = vmatprep.subr.bf16.mxu0 0
  %138 = vmatpush1.bf16.msra.mxu0 0
  %139 = vmatprep.subr.bf16.mxu0 0
  %140 = vmatpush1.bf16.msra.mxu0 0
  %141 = vmatprep.subr.bf16.mxu0 0
  %142 = vmatpush1.bf16.msra.mxu0 0
  %143 = vmatprep.subr.bf16.mxu0 0
  %144 = vmatpush1.bf16.msra.mxu0 0
  %145 = vmatprep.subr.bf16.mxu0 0
  %146 = vmatpush1.bf16.msra.mxu0 0
  %147 = vmatprep.subr.bf16.mxu0 0
  %148 = vmatpush1.bf16.msra.mxu0 0
  %149 = vmatprep.subr.bf16.mxu0 0
  %150 = vmatpush1.bf16.msra.mxu0 0
  %151 = vmatprep.subr.bf16.mxu0 0
  %152 = vmatpush1.bf16.msra.mxu0 0
  %153 = vmatprep.subr.bf16.mxu0 0
  %154 = vmatpush1.bf16.msra.mxu0 0
  %155 = vmatprep.subr.bf16.mxu0 0
  %156 = vmatpush1.bf16.msra.mxu0 0
  %157 = vmatprep.subr.bf16.mxu0 0
  %158 = vmatpush1.bf16.msra.mxu0 0
  %159 = vmatprep.mubr.bf16.mxu0 0
  %160 = vmatmul.mubr.bf16.gmra.mrb[0].mxu0 %v61
  %v161 = vpop.f32.mrb[0].mxu0
  %v162 = vadd.f32 %v113, %v161
  %v163 = vpop.f32.mrb[0].mxu0
  %v164 = vpop.f32.mrb[0].mxu0
  %v165 = vadd.f32 %v113, %v164
  %v166 = vpop.f32.mrb[0].mxu0
  %167 = vdwg.mxu0
  %v168 = vld [vmem:[%s3] sm:$0xf]
  %v169 = vld [vmem:[%s3 + $0x4] sm:$0xf]
  %v170 = vld [vmem:[%s3 + $0x8] sm:$0xf]
  %v171 = vld [vmem:[%s3 + $0xc] sm:$0xf]
  %v172 = vld [vmem:[%s4] sm:$0xf]
  %v173 = vld [vmem:[%s4 + $0x4] sm:$0xf]
  %v174 = vld [vmem:[%s4 + $0x8] sm:$0xf]
  %v175 = vld [vmem:[%s4 + $0xc] sm:$0xf]
  %v176 = vld [vmem:[%s7] sm:$0x1]
  %v178 = vlaneseq
  %v179 = vshrl.u32 %v178, 7
  %v180 = vsub.s32 0, %v179
  %v181 = vrot.slane %v176, %v180
  %v183 = vld [vmem:[%s8] sm:$0x1]
  %v185 = vlaneseq
  %v186 = vshrl.u32 %v185, 7
  %v187 = vsub.s32 0, %v186
  %v188 = vrot.slane %v183, %v187
  %v194 = vunpack.c.l.b16 %v168
  %v195 = vunpack.c.l.b16 %v169
  %v196 = vunpack.c.l.b16 %v170
  %v197 = vunpack.c.l.b16 %v171
  %v198 = vpack.c.b16 %v195, %v194
  %v199 = vpack.c.b16 %v197, %v196
  %v203 = vsel %vm59, 0, 0
  %205 = vmatprep.subr.bf16.mxu0 0
  %206 = vmatpush1.bf16.msra.mxu0 %v198
  %207 = vmatprep.subr.bf16.mxu0 0
  %208 = vmatpush1.bf16.msra.mxu0 %v199
  %209 = vmatprep.subr.bf16.mxu0 0
  %210 = vmatpush1.bf16.msra.mxu0 0
  %211 = vmatprep.subr.bf16.mxu0 0
  %212 = vmatpush1.bf16.msra.mxu0 0
  %213 = vmatprep.subr.bf16.mxu0 0
  %214 = vmatpush1.bf16.msra.mxu0 0
  %215 = vmatprep.subr.bf16.mxu0 0
  %216 = vmatpush1.bf16.msra.mxu0 0
  %217 = vmatprep.subr.bf16.mxu0 0
  %218 = vmatpush1.bf16.msra.mxu0 0
  %219 = vmatprep.subr.bf16.mxu0 0
  %220 = vmatpush1.bf16.msra.mxu0 0
  %221 = vmatprep.subr.bf16.mxu0 0
  %222 = vmatpush1.bf16.msra.mxu0 0
  %223 = vmatprep.subr.bf16.mxu0 0
  %224 = vmatpush1.bf16.msra.mxu0 0
  %225 = vmatprep.subr.bf16.mxu0 0
  %226 = vmatpush1.bf16.msra.mxu0 0
  %227 = vmatprep.subr.bf16.mxu0 0
  %228 = vmatpush1.bf16.msra.mxu0 0
  %229 = vmatprep.subr.bf16.mxu0 0
  %230 = vmatpush1.bf16.msra.mxu0 0
  %231 = vmatprep.subr.bf16.mxu0 0
  %232 = vmatpush1.bf16.msra.mxu0 0
  %233 = vmatprep.subr.bf16.mxu0 0
  %234 = vmatpush1.bf16.msra.mxu0 0
  %235 = vmatprep.subr.bf16.mxu0 0
  %236 = vmatpush1.bf16.msra.mxu0 0
  %237 = vmatprep.mubr.bf16.mxu0 0
  %238 = vmatmul.mubr.bf16.gmra.mrb[0].mxu0 %v203
  %v239 = vpop.f32.mrb[0].mxu0
  %v240 = vadd.f32 %v181, %v239
  %v241 = vpop.f32.mrb[0].mxu0
  %v242 = vpop.f32.mrb[0].mxu0
  %v243 = vpop.f32.mrb[0].mxu0
  %244 = vdwg.mxu0
  %v249 = vunpack.c.l.b16 %v172
  %v250 = vunpack.c.l.b16 %v173
  %v251 = vunpack.c.l.b16 %v174
  %v252 = vunpack.c.l.b16 %v175
  %v253 = vpack.c.b16 %v250, %v249
  %v254 = vpack.c.b16 %v252, %v251
  %257 = vmatprep.subr.bf16.mxu0 0
  %258 = vmatpush1.bf16.msra.mxu0 %v253
  %259 = vmatprep.subr.bf16.mxu0 0
  %260 = vmatpush1.bf16.msra.mxu0 %v254
  %261 = vmatprep.subr.bf16.mxu0 0
  %262 = vmatpush1.bf16.msra.mxu0 0
  %263 = vmatprep.subr.bf16.mxu0 0
  %264 = vmatpush1.bf16.msra.mxu0 0
  %265 = vmatprep.subr.bf16.mxu0 0
  %266 = vmatpush1.bf16.msra.mxu0 0
  %267 = vmatprep.subr.bf16.mxu0 0
  %268 = vmatpush1.bf16.msra.mxu0 0
  %269 = vmatprep.subr.bf16.mxu0 0
  %270 = vmatpush1.bf16.msra.mxu0 0
  %271 = vmatprep.subr.bf16.mxu0 0
  %272 = vmatpush1.bf16.msra.mxu0 0
  %273 = vmatprep.subr.bf16.mxu0 0
  %274 = vmatpush1.bf16.msra.mxu0 0
  %275 = vmatprep.subr.bf16.mxu0 0
  %276 = vmatpush1.bf16.msra.mxu0 0
  %277 = vmatprep.subr.bf16.mxu0 0
  %278 = vmatpush1.bf16.msra.mxu0 0
  %279 = vmatprep.subr.bf16.mxu0 0
  %280 = vmatpush1.bf16.msra.mxu0 0
  %281 = vmatprep.subr.bf16.mxu0 0
  %282 = vmatpush1.bf16.msra.mxu0 0
  %283 = vmatprep.subr.bf16.mxu0 0
  %284 = vmatpush1.bf16.msra.mxu0 0
  %285 = vmatprep.subr.bf16.mxu0 0
  %286 = vmatpush1.bf16.msra.mxu0 0
  %287 = vmatprep.subr.bf16.mxu0 0
  %288 = vmatpush1.bf16.msra.mxu0 0
  %289 = vmatprep.mubr.bf16.mxu0 0
  %290 = vmatmul.mubr.bf16.gmra.mrb[0].mxu0 %v203
  %v291 = vpop.f32.mrb[0].mxu0
  %v292 = vadd.f32 %v188, %v291
  %v293 = vpop.f32.mrb[0].mxu0
  %v294 = vpop.f32.mrb[0].mxu0
  %v295 = vpop.f32.mrb[0].mxu0
  %296 = vdwg.mxu0
  %v297 = vadd.f32 %v98, %v240
  %v298 = vxor.u32 %v297, 2147483648
  %v299 = vmul.f32 %v298, 1.442695
  %v300 = vpow.pop %v299
  %v301 = vadd.f32 %v300, 1.0
  %v302 = vrcp.pop %v301
  %v303 = vmul.f32 1.0, %v302
  %305 = vrot.lane.b32.xlu0 %v240, 64
  %v306 = vpop.permute.xlu0 %305
  %v308 = vmul.f32 %v303, %v306
  %310 = vrot.lane.b32.xlu0 %v308, 64
  %v311 = vpop.permute.xlu0 %310
  %v313 = vadd.f32 %v98, %v311
  %v314 = vtanh.pop %v313
  %v315 = vsub.f32 1.0, %v303
  %317 = vrot.lane.b32.xlu0 %v314, 96
  %v318 = vpop.permute.xlu0 %317
  %v320 = vmul.f32 %v315, %v318
  %v321 = vmul.f32 %v303, 0.0
  %v322 = vadd.f32 %v320, %v321
  %v324 = vrot.slane %v292, 2
  %v326 = vadd.f32 %v165, %v324
  %v327 = vxor.u32 %v326, 2147483648
  %v328 = vmul.f32 %v327, 1.442695
  %v329 = vpow.pop %v328
  %v330 = vadd.f32 %v329, 1.0
  %v331 = vrcp.pop %v330
  %v332 = vmul.f32 1.0, %v331
  %333 = vrot.lane.b32.xlu0 %v324, 64
  %v334 = vpop.permute.xlu0 %333
  %v336 = vmul.f32 %v332, %v334
  %338 = vrot.lane.b32.xlu0 %v336, 64
  %v339 = vpop.permute.xlu0 %338
  %v341 = vadd.f32 %v165, %v339
  %v342 = vtanh.pop %v341
  %v343 = vsub.f32 1.0, %v332
  %345 = vrot.lane.b32.xlu0 %v342, 96
  %v346 = vpop.permute.xlu0 %345
  %v348 = vmul.f32 %v343, %v346
  %v349 = vmul.f32 %v332, 0.0
  %v350 = vadd.f32 %v348, %v349
  %352 = vrot.lane.b32.xlu0 %v322, 96
  %v353 = vpop.permute.xlu0 %352
  %vm355 = vcmask 254976
  %356 = vst.msk [vmem:[%s9] sm:$0x3] %vm355, %v353
  %vm357 = vcmask 523526
  %358 = vst.msk [vmem:[%s9 + $0x8] sm:$0xc0] %vm357, %v350
  %v359 = vpack.c.bf16 %v322, %v322
  %361 = vrot.lane.b32.xlu0 %v359, 96
  %v362 = vpop.permute.xlu0 %361
  %v364 = vsel %vm59, %v362, 0
  %366 = vmatprep.subr.bf16.mxu0 0
  %367 = vmatpush1.bf16.msra.mxu0 %v198
  %368 = vmatprep.subr.bf16.mxu0 0
  %369 = vmatpush1.bf16.msra.mxu0 %v199
  %370 = vmatprep.subr.bf16.mxu0 0
  %371 = vmatpush1.bf16.msra.mxu0 0
  %372 = vmatprep.subr.bf16.mxu0 0
  %373 = vmatpush1.bf16.msra.mxu0 0
  %374 = vmatprep.subr.bf16.mxu0 0
  %375 = vmatpush1.bf16.msra.mxu0 0
  %376 = vmatprep.subr.bf16.mxu0 0
  %377 = vmatpush1.bf16.msra.mxu0 0
  %378 = vmatprep.subr.bf16.mxu0 0
  %379 = vmatpush1.bf16.msra.mxu0 0
  %380 = vmatprep.subr.bf16.mxu0 0
  %381 = vmatpush1.bf16.msra.mxu0 0
  %382 = vmatprep.subr.bf16.mxu0 0
  %383 = vmatpush1.bf16.msra.mxu0 0
  %384 = vmatprep.subr.bf16.mxu0 0
  %385 = vmatpush1.bf16.msra.mxu0 0
  %386 = vmatprep.subr.bf16.mxu0 0
  %387 = vmatpush1.bf16.msra.mxu0 0
  %388 = vmatprep.subr.bf16.mxu0 0
  %389 = vmatpush1.bf16.msra.mxu0 0
  %390 = vmatprep.subr.bf16.mxu0 0
  %391 = vmatpush1.bf16.msra.mxu0 0
  %392 = vmatprep.subr.bf16.mxu0 0
  %393 = vmatpush1.bf16.msra.mxu0 0
  %394 = vmatprep.subr.bf16.mxu0 0
  %395 = vmatpush1.bf16.msra.mxu0 0
  %396 = vmatprep.subr.bf16.mxu0 0
  %397 = vmatpush1.bf16.msra.mxu0 0
  %398 = vmatprep.mubr.bf16.mxu0 0
  %399 = vmatmul.mubr.bf16.gmra.mrb[0].mxu0 %v364
  %v400 = vpop.f32.mrb[0].mxu0
  %v401 = vadd.f32 %v181, %v400
  %v402 = vpop.f32.mrb[0].mxu0
  %v403 = vpop.f32.mrb[0].mxu0
  %v404 = vpop.f32.mrb[0].mxu0
  %405 = vdwg.mxu0
  %v406 = vpack.c.bf16 %v350, %v350
  %v408 = vrot.slane %v406, 3
  %409 = vrot.lane.b32.xlu0 %v408, 96
  %v410 = vpop.permute.xlu0 %409
  %v412 = vsel %vm59, %v410, 0
  %414 = vmatprep.subr.bf16.mxu0 0
  %415 = vmatpush1.bf16.msra.mxu0 %v253
  %416 = vmatprep.subr.bf16.mxu0 0
  %417 = vmatpush1.bf16.msra.mxu0 %v254
  %418 = vmatprep.subr.bf16.mxu0 0
  %419 = vmatpush1.bf16.msra.mxu0 0
  %420 = vmatprep.subr.bf16.mxu0 0
  %421 = vmatpush1.bf16.msra.mxu0 0
  %422 = vmatprep.subr.bf16.mxu0 0
  %423 = vmatpush1.bf16.msra.mxu0 0
  %424 = vmatprep.subr.bf16.mxu0 0
  %425 = vmatpush1.bf16.msra.mxu0 0
  %426 = vmatprep.subr.bf16.mxu0 0
  %427 = vmatpush1.bf16.msra.mxu0 0
  %428 = vmatprep.subr.bf16.mxu0 0
  %429 = vmatpush1.bf16.msra.mxu0 0
  %430 = vmatprep.subr.bf16.mxu0 0
  %431 = vmatpush1.bf16.msra.mxu0 0
  %432 = vmatprep.subr.bf16.mxu0 0
  %433 = vmatpush1.bf16.msra.mxu0 0
  %434 = vmatprep.subr.bf16.mxu0 0
  %435 = vmatpush1.bf16.msra.mxu0 0
  %436 = vmatprep.subr.bf16.mxu0 0
  %437 = vmatpush1.bf16.msra.mxu0 0
  %438 = vmatprep.subr.bf16.mxu0 0
  %439 = vmatpush1.bf16.msra.mxu0 0
  %440 = vmatprep.subr.bf16.mxu0 0
  %441 = vmatpush1.bf16.msra.mxu0 0
  %442 = vmatprep.subr.bf16.mxu0 0
  %443 = vmatpush1.bf16.msra.mxu0 0
  %444 = vmatprep.subr.bf16.mxu0 0
  %445 = vmatpush1.bf16.msra.mxu0 0
  %446 = vmatprep.mubr.bf16.mxu0 0
  %447 = vmatmul.mubr.bf16.gmra.mrb[0].mxu0 %v412
  %v448 = vpop.f32.mrb[0].mxu0
  %v449 = vadd.f32 %v188, %v448
  %v450 = vpop.f32.mrb[0].mxu0
  %v451 = vpop.f32.mrb[0].mxu0
  %v452 = vpop.f32.mrb[0].mxu0
  %453 = vdwg.mxu0
  %v455 = vrot.slane %v401, 6
  %v457 = vadd.f32 %v98, %v455
  %v458 = vxor.u32 %v457, 2147483648
  %v459 = vmul.f32 %v458, 1.442695
  %v460 = vpow.pop %v459
  %v461 = vadd.f32 %v460, 1.0
  %v462 = vrcp.pop %v461
  %v463 = vmul.f32 1.0, %v462
  %464 = vrot.lane.b32.xlu0 %v455, 64
  %v465 = vpop.permute.xlu0 %464
  %v467 = vmul.f32 %v463, %v465
  %469 = vrot.lane.b32.xlu0 %v467, 64
  %v470 = vpop.permute.xlu0 %469
  %v472 = vadd.f32 %v98, %v470
  %v473 = vtanh.pop %v472
  %v474 = vsub.f32 1.0, %v463
  %476 = vrot.lane.b32.xlu0 %v473, 96
  %v477 = vpop.permute.xlu0 %476
  %v479 = vmul.f32 %v474, %v477
  %v480 = vrot.slane %v322, 6
  %v482 = vmul.f32 %v463, %v480
  %v483 = vadd.f32 %v479, %v482
  %v485 = vrot.slane %v449, 4
  %v487 = vadd.f32 %v165, %v485
  %v488 = vxor.u32 %v487, 2147483648
  %v489 = vmul.f32 %v488, 1.442695
  %v490 = vpow.pop %v489
  %v491 = vadd.f32 %v490, 1.0
  %v492 = vrcp.pop %v491
  %v493 = vmul.f32 1.0, %v492
  %494 = vrot.lane.b32.xlu0 %v485, 64
  %v495 = vpop.permute.xlu0 %494
  %v497 = vmul.f32 %v493, %v495
  %499 = vrot.lane.b32.xlu0 %v497, 64
  %v500 = vpop.permute.xlu0 %499
  %v502 = vadd.f32 %v165, %v500
  %v503 = vtanh.pop %v502
  %v504 = vsub.f32 1.0, %v493
  %506 = vrot.lane.b32.xlu0 %v503, 96
  %v507 = vpop.permute.xlu0 %506
  %v509 = vmul.f32 %v504, %v507
  %v511 = vrot.slane %v350, 2
  %v513 = vmul.f32 %v493, %v511
  %v514 = vadd.f32 %v509, %v513
  %516 = vrot.lane.b32.xlu0 %v483, 96
  %v517 = vpop.permute.xlu0 %516
  %vm519 = vcmask 257026
  %520 = vst.msk [vmem:[%s9] sm:$0xc] %vm519, %v517
  %vm521 = vcmask 521476
  %522 = vst.msk [vmem:[%s9 + $0x8] sm:$0x30] %vm521, %v514
  %v523 = vpack.c.bf16 %v483, %v483
  %v525 = vrot.slane %v523, 1
  %526 = vrot.lane.b32.xlu0 %v525, 96
  %v527 = vpop.permute.xlu0 %526
  %v529 = vsel %vm59, %v527, 0
  %531 = vmatprep.subr.bf16.mxu0 0
  %532 = vmatpush1.bf16.msra.mxu0 %v198
  %533 = vmatprep.subr.bf16.mxu0 0
  %534 = vmatpush1.bf16.msra.mxu0 %v199
  %535 = vmatprep.subr.bf16.mxu0 0
  %536 = vmatpush1.bf16.msra.mxu0 0
  %537 = vmatprep.subr.bf16.mxu0 0
  %538 = vmatpush1.bf16.msra.mxu0 0
  %539 = vmatprep.subr.bf16.mxu0 0
  %540 = vmatpush1.bf16.msra.mxu0 0
  %541 = vmatprep.subr.bf16.mxu0 0
  %542 = vmatpush1.bf16.msra.mxu0 0
  %543 = vmatprep.subr.bf16.mxu0 0
  %544 = vmatpush1.bf16.msra.mxu0 0
  %545 = vmatprep.subr.bf16.mxu0 0
  %546 = vmatpush1.bf16.msra.mxu0 0
  %547 = vmatprep.subr.bf16.mxu0 0
  %548 = vmatpush1.bf16.msra.mxu0 0
  %549 = vmatprep.subr.bf16.mxu0 0
  %550 = vmatpush1.bf16.msra.mxu0 0
  %551 = vmatprep.subr.bf16.mxu0 0
  %552 = vmatpush1.bf16.msra.mxu0 0
  %553 = vmatprep.subr.bf16.mxu0 0
  %554 = vmatpush1.bf16.msra.mxu0 0
  %555 = vmatprep.subr.bf16.mxu0 0
  %556 = vmatpush1.bf16.msra.mxu0 0
  %557 = vmatprep.subr.bf16.mxu0 0
  %558 = vmatpush1.bf16.msra.mxu0 0
  %559 = vmatprep.subr.bf16.mxu0 0
  %560 = vmatpush1.bf16.msra.mxu0 0
  %561 = vmatprep.subr.bf16.mxu0 0
  %562 = vmatpush1.bf16.msra.mxu0 0
  %563 = vmatprep.mubr.bf16.mxu0 0
  %564 = vmatmul.mubr.bf16.gmra.mrb[0].mxu0 %v529
  %v565 = vpop.f32.mrb[0].mxu0
  %v566 = vadd.f32 %v181, %v565
  %v567 = vpop.f32.mrb[0].mxu0
  %v568 = vpop.f32.mrb[0].mxu0
  %v569 = vpop.f32.mrb[0].mxu0
  %570 = vdwg.mxu0
  %v571 = vpack.c.bf16 %v514, %v514
  %v573 = vrot.slane %v571, 2
  %574 = vrot.lane.b32.xlu0 %v573, 96
  %v575 = vpop.permute.xlu0 %574
  %v577 = vsel %vm59, %v575, 0
  %579 = vmatprep.subr.bf16.mxu0 0
  %580 = vmatpush1.bf16.msra.mxu0 %v253
  %581 = vmatprep.subr.bf16.mxu0 0
  %582 = vmatpush1.bf16.msra.mxu0 %v254
  %583 = vmatprep.subr.bf16.mxu0 0
  %584 = vmatpush1.bf16.msra.mxu0 0
  %585 = vmatprep.subr.bf16.mxu0 0
  %586 = vmatpush1.bf16.msra.mxu0 0
  %587 = vmatprep.subr.bf16.mxu0 0
  %588 = vmatpush1.bf16.msra.mxu0 0
  %589 = vmatprep.subr.bf16.mxu0 0
  %590 = vmatpush1.bf16.msra.mxu0 0
  %591 = vmatprep.subr.bf16.mxu0 0
  %592 = vmatpush1.bf16.msra.mxu0 0
  %593 = vmatprep.subr.bf16.mxu0 0
  %594 = vmatpush1.bf16.msra.mxu0 0
  %595 = vmatprep.subr.bf16.mxu0 0
  %596 = vmatpush1.bf16.msra.mxu0 0
  %597 = vmatprep.subr.bf16.mxu0 0
  %598 = vmatpush1.bf16.msra.mxu0 0
  %599 = vmatprep.subr.bf16.mxu0 0
  %600 = vmatpush1.bf16.msra.mxu0 0
  %601 = vmatprep.subr.bf16.mxu0 0
  %602 = vmatpush1.bf16.msra.mxu0 0
  %603 = vmatprep.subr.bf16.mxu0 0
  %604 = vmatpush1.bf16.msra.mxu0 0
  %605 = vmatprep.subr.bf16.mxu0 0
  %606 = vmatpush1.bf16.msra.mxu0 0
  %607 = vmatprep.subr.bf16.mxu0 0
  %608 = vmatpush1.bf16.msra.mxu0 0
  %609 = vmatprep.subr.bf16.mxu0 0
  %610 = vmatpush1.bf16.msra.mxu0 0
  %611 = vmatprep.mubr.bf16.mxu0 0
  %612 = vmatmul.mubr.bf16.gmra.mrb[0].mxu0 %v577
  %v613 = vpop.f32.mrb[0].mxu0
  %v614 = vadd.f32 %v188, %v613
  %v615 = vpop.f32.mrb[0].mxu0
  %v616 = vpop.f32.mrb[0].mxu0
  %v617 = vpop.f32.mrb[0].mxu0
  %618 = vdwg.mxu0
  %v620 = vrot.slane %v566, 4
  %v622 = vadd.f32 %v98, %v620
  %v623 = vxor.u32 %v622, 2147483648
  %v624 = vmul.f32 %v623, 1.442695
  %v625 = vpow.pop %v624
  %v626 = vadd.f32 %v625, 1.0
  %v627 = vrcp.pop %v626
  %v628 = vmul.f32 1.0, %v627
  %629 = vrot.lane.b32.xlu0 %v620, 64
  %v630 = vpop.permute.xlu0 %629
  %v632 = vmul.f32 %v628, %v630
  %634 = vrot.lane.b32.xlu0 %v632, 64
  %v635 = vpop.permute.xlu0 %634
  %v637 = vadd.f32 %v98, %v635
  %v638 = vtanh.pop %v637
  %v639 = vsub.f32 1.0, %v628
  %641 = vrot.lane.b32.xlu0 %v638, 96
  %v642 = vpop.permute.xlu0 %641
  %v644 = vmul.f32 %v639, %v642
  %v645 = vrot.slane %v483, 6
  %v647 = vmul.f32 %v628, %v645
  %v648 = vadd.f32 %v644, %v647
  %v650 = vrot.slane %v614, 6
  %v652 = vadd.f32 %v165, %v650
  %v653 = vxor.u32 %v652, 2147483648
  %v654 = vmul.f32 %v653, 1.442695
  %v655 = vpow.pop %v654
  %v656 = vadd.f32 %v655, 1.0
  %v657 = vrcp.pop %v656
  %v658 = vmul.f32 1.0, %v657
  %659 = vrot.lane.b32.xlu0 %v650, 64
  %v660 = vpop.permute.xlu0 %659
  %v662 = vmul.f32 %v658, %v660
  %664 = vrot.lane.b32.xlu0 %v662, 64
  %v665 = vpop.permute.xlu0 %664
  %v667 = vadd.f32 %v165, %v665
  %v668 = vtanh.pop %v667
  %v669 = vsub.f32 1.0, %v658
  %671 = vrot.lane.b32.xlu0 %v668, 96
  %v672 = vpop.permute.xlu0 %671
  %v674 = vmul.f32 %v669, %v672
  %v676 = vrot.slane %v514, 2
  %v678 = vmul.f32 %v658, %v676
  %v679 = vadd.f32 %v674, %v678
  %681 = vrot.lane.b32.xlu0 %v648, 96
  %v682 = vpop.permute.xlu0 %681
  %vm684 = vcmask 259076
  %685 = vst.msk [vmem:[%s9] sm:$0x30] %vm684, %v682
  %vm686 = vcmask 519426
  %687 = vst.msk [vmem:[%s9 + $0x8] sm:$0xc] %vm686, %v679
  %v688 = vpack.c.bf16 %v648, %v648
  %v690 = vrot.slane %v688, 2
  %691 = vrot.lane.b32.xlu0 %v690, 96
  %v692 = vpop.permute.xlu0 %691
  %v694 = vsel %vm59, %v692, 0
  %696 = vmatprep.subr.bf16.mxu0 0
  %697 = vmatpush1.bf16.msra.mxu0 %v198
  %698 = vmatprep.subr.bf16.mxu0 0
  %699 = vmatpush1.bf16.msra.mxu0 %v199
  %700 = vmatprep.subr.bf16.mxu0 0
  %701 = vmatpush1.bf16.msra.mxu0 0
  %702 = vmatprep.subr.bf16.mxu0 0
  %703 = vmatpush1.bf16.msra.mxu0 0
  %704 = vmatprep.subr.bf16.mxu0 0
  %705 = vmatpush1.bf16.msra.mxu0 0
  %706 = vmatprep.subr.bf16.mxu0 0
  %707 = vmatpush1.bf16.msra.mxu0 0
  %708 = vmatprep.subr.bf16.mxu0 0
  %709 = vmatpush1.bf16.msra.mxu0 0
  %710 = vmatprep.subr.bf16.mxu0 0
  %711 = vmatpush1.bf16.msra.mxu0 0
  %712 = vmatprep.subr.bf16.mxu0 0
  %713 = vmatpush1.bf16.msra.mxu0 0
  %714 = vmatprep.subr.bf16.mxu0 0
  %715 = vmatpush1.bf16.msra.mxu0 0
  %716 = vmatprep.subr.bf16.mxu0 0
  %717 = vmatpush1.bf16.msra.mxu0 0
  %718 = vmatprep.subr.bf16.mxu0 0
  %719 = vmatpush1.bf16.msra.mxu0 0
  %720 = vmatprep.subr.bf16.mxu0 0
  %721 = vmatpush1.bf16.msra.mxu0 0
  %722 = vmatprep.subr.bf16.mxu0 0
  %723 = vmatpush1.bf16.msra.mxu0 0
  %724 = vmatprep.subr.bf16.mxu0 0
  %725 = vmatpush1.bf16.msra.mxu0 0
  %726 = vmatprep.subr.bf16.mxu0 0
  %727 = vmatpush1.bf16.msra.mxu0 0
  %728 = vmatprep.mubr.bf16.mxu0 0
  %729 = vmatmul.mubr.bf16.gmra.mrb[0].mxu0 %v694
  %v730 = vpop.f32.mrb[0].mxu0
  %v731 = vadd.f32 %v181, %v730
  %v732 = vpop.f32.mrb[0].mxu0
  %v733 = vpop.f32.mrb[0].mxu0
  %v734 = vpop.f32.mrb[0].mxu0
  %735 = vdwg.mxu0
  %v736 = vpack.c.bf16 %v679, %v679
  %v738 = vrot.slane %v736, 1
  %739 = vrot.lane.b32.xlu0 %v738, 96
  %v740 = vpop.permute.xlu0 %739
  %v742 = vsel %vm59, %v740, 0
  %744 = vmatprep.subr.bf16.mxu0 0
  %745 = vmatpush1.bf16.msra.mxu0 %v253
  %746 = vmatprep.subr.bf16.mxu0 0
  %747 = vmatpush1.bf16.msra.mxu0 %v254
  %748 = vmatprep.subr.bf16.mxu0 0
  %749 = vmatpush1.bf16.msra.mxu0 0
  %750 = vmatprep.subr.bf16.mxu0 0
  %751 = vmatpush1.bf16.msra.mxu0 0
  %752 = vmatprep.subr.bf16.mxu0 0
  %753 = vmatpush1.bf16.msra.mxu0 0
  %754 = vmatprep.subr.bf16.mxu0 0
  %755 = vmatpush1.bf16.msra.mxu0 0
  %756 = vmatprep.subr.bf16.mxu0 0
  %757 = vmatpush1.bf16.msra.mxu0 0
  %758 = vmatprep.subr.bf16.mxu0 0
  %759 = vmatpush1.bf16.msra.mxu0 0
  %760 = vmatprep.subr.bf16.mxu0 0
  %761 = vmatpush1.bf16.msra.mxu0 0
  %762 = vmatprep.subr.bf16.mxu0 0
  %763 = vmatpush1.bf16.msra.mxu0 0
  %764 = vmatprep.subr.bf16.mxu0 0
  %765 = vmatpush1.bf16.msra.mxu0 0
  %766 = vmatprep.subr.bf16.mxu0 0
  %767 = vmatpush1.bf16.msra.mxu0 0
  %768 = vmatprep.subr.bf16.mxu0 0
  %769 = vmatpush1.bf16.msra.mxu0 0
  %770 = vmatprep.subr.bf16.mxu0 0
  %771 = vmatpush1.bf16.msra.mxu0 0
  %772 = vmatprep.subr.bf16.mxu0 0
  %773 = vmatpush1.bf16.msra.mxu0 0
  %774 = vmatprep.subr.bf16.mxu0 0
  %775 = vmatpush1.bf16.msra.mxu0 0
  %776 = vmatprep.mubr.bf16.mxu0 0
  %777 = vmatmul.mubr.bf16.gmra.mrb[0].mxu0 %v742
  %v778 = vpop.f32.mrb[0].mxu0
  %v779 = vadd.f32 %v188, %v778
  %v780 = vpop.f32.mrb[0].mxu0
  %v781 = vpop.f32.mrb[0].mxu0
  %v782 = vpop.f32.mrb[0].mxu0
  %783 = vdwg.mxu0
  %v785 = vrot.slane %v731, 2
  %v787 = vadd.f32 %v98, %v785
  %v788 = vxor.u32 %v787, 2147483648
  %v789 = vmul.f32 %v788, 1.442695
  %v790 = vpow.pop %v789
  %v791 = vadd.f32 %v790, 1.0
  %v792 = vrcp.pop %v791
  %v793 = vmul.f32 1.0, %v792
  %794 = vrot.lane.b32.xlu0 %v785, 64
  %v795 = vpop.permute.xlu0 %794
  %v797 = vmul.f32 %v793, %v795
  %799 = vrot.lane.b32.xlu0 %v797, 64
  %v800 = vpop.permute.xlu0 %799
  %v802 = vadd.f32 %v98, %v800
  %v803 = vtanh.pop %v802
  %v804 = vsub.f32 1.0, %v793
  %806 = vrot.lane.b32.xlu0 %v803, 96
  %v807 = vpop.permute.xlu0 %806
  %v809 = vmul.f32 %v804, %v807
  %v810 = vrot.slane %v648, 6
  %v812 = vmul.f32 %v793, %v810
  %v813 = vadd.f32 %v809, %v812
  %v814 = vadd.f32 %v165, %v779
  %v815 = vxor.u32 %v814, 2147483648
  %v816 = vmul.f32 %v815, 1.442695
  %v817 = vpow.pop %v816
  %v818 = vadd.f32 %v817, 1.0
  %v819 = vrcp.pop %v818
  %v820 = vmul.f32 1.0, %v819
  %822 = vrot.lane.b32.xlu0 %v779, 64
  %v823 = vpop.permute.xlu0 %822
  %v825 = vmul.f32 %v820, %v823
  %827 = vrot.lane.b32.xlu0 %v825, 64
  %v828 = vpop.permute.xlu0 %827
  %v830 = vadd.f32 %v165, %v828
  %v831 = vtanh.pop %v830
  %v832 = vsub.f32 1.0, %v820
  %834 = vrot.lane.b32.xlu0 %v831, 96
  %v835 = vpop.permute.xlu0 %834
  %v837 = vmul.f32 %v832, %v835
  %v839 = vrot.slane %v679, 2
  %v841 = vmul.f32 %v820, %v839
  %v842 = vadd.f32 %v837, %v841
  %844 = vrot.lane.b32.xlu0 %v813, 96
  %v845 = vpop.permute.xlu0 %844
  %vm847 = vcmask 261126
  %848 = vst.msk [vmem:[%s9] sm:$0xc0] %vm847, %v845
  %vm849 = vcmask 517376
  %850 = vst.msk [vmem:[%s9 + $0x8] sm:$0x3] %vm849, %v842
  %v851 = vpack.c.bf16 %v813, %v813
  %v853 = vrot.slane %v851, 3
  %854 = vrot.lane.b32.xlu0 %v853, 96
  %v855 = vpop.permute.xlu0 %854
  %v857 = vsel %vm59, %v855, 0
  %859 = vmatprep.subr.bf16.mxu0 0
  %860 = vmatpush1.bf16.msra.mxu0 %v198
  %861 = vmatprep.subr.bf16.mxu0 0
  %862 = vmatpush1.bf16.msra.mxu0 %v199
  %863 = vmatprep.subr.bf16.mxu0 0
  %864 = vmatpush1.bf16.msra.mxu0 0
  %865 = vmatprep.subr.bf16.mxu0 0
  %866 = vmatpush1.bf16.msra.mxu0 0
  %867 = vmatprep.subr.bf16.mxu0 0
  %868 = vmatpush1.bf16.msra.mxu0 0
  %869 = vmatprep.subr.bf16.mxu0 0
  %870 = vmatpush1.bf16.msra.mxu0 0
  %871 = vmatprep.subr.bf16.mxu0 0
  %872 = vmatpush1.bf16.msra.mxu0 0
  %873 = vmatprep.subr.bf16.mxu0 0
  %874 = vmatpush1.bf16.msra.mxu0 0
  %875 = vmatprep.subr.bf16.mxu0 0
  %876 = vmatpush1.bf16.msra.mxu0 0
  %877 = vmatprep.subr.bf16.mxu0 0
  %878 = vmatpush1.bf16.msra.mxu0 0
  %879 = vmatprep.subr.bf16.mxu0 0
  %880 = vmatpush1.bf16.msra.mxu0 0
  %881 = vmatprep.subr.bf16.mxu0 0
  %882 = vmatpush1.bf16.msra.mxu0 0
  %883 = vmatprep.subr.bf16.mxu0 0
  %884 = vmatpush1.bf16.msra.mxu0 0
  %885 = vmatprep.subr.bf16.mxu0 0
  %886 = vmatpush1.bf16.msra.mxu0 0
  %887 = vmatprep.subr.bf16.mxu0 0
  %888 = vmatpush1.bf16.msra.mxu0 0
  %889 = vmatprep.subr.bf16.mxu0 0
  %890 = vmatpush1.bf16.msra.mxu0 0
  %891 = vmatprep.mubr.bf16.mxu0 0
  %892 = vmatmul.mubr.bf16.gmra.mrb[0].mxu0 %v857
  %v893 = vpop.f32.mrb[0].mxu0
  %v894 = vadd.f32 %v181, %v893
  %v895 = vpop.f32.mrb[0].mxu0
  %v896 = vpop.f32.mrb[0].mxu0
  %v897 = vpop.f32.mrb[0].mxu0
  %898 = vdwg.mxu0
  %v899 = vpack.c.bf16 %v842, %v842
  %901 = vrot.lane.b32.xlu0 %v899, 96
  %v902 = vpop.permute.xlu0 %901
  %v904 = vsel %vm59, %v902, 0
  %906 = vmatprep.subr.bf16.mxu0 0
  %907 = vmatpush1.bf16.msra.mxu0 %v253
  %908 = vmatprep.subr.bf16.mxu0 0
  %909 = vmatpush1.bf16.msra.mxu0 %v254
  %910 = vmatprep.subr.bf16.mxu0 0
  %911 = vmatpush1.bf16.msra.mxu0 0
  %912 = vmatprep.subr.bf16.mxu0 0
  %913 = vmatpush1.bf16.msra.mxu0 0
  %914 = vmatprep.subr.bf16.mxu0 0
  %915 = vmatpush1.bf16.msra.mxu0 0
  %916 = vmatprep.subr.bf16.mxu0 0
  %917 = vmatpush1.bf16.msra.mxu0 0
  %918 = vmatprep.subr.bf16.mxu0 0
  %919 = vmatpush1.bf16.msra.mxu0 0
  %920 = vmatprep.subr.bf16.mxu0 0
  %921 = vmatpush1.bf16.msra.mxu0 0
  %922 = vmatprep.subr.bf16.mxu0 0
  %923 = vmatpush1.bf16.msra.mxu0 0
  %924 = vmatprep.subr.bf16.mxu0 0
  %925 = vmatpush1.bf16.msra.mxu0 0
  %926 = vmatprep.subr.bf16.mxu0 0
  %927 = vmatpush1.bf16.msra.mxu0 0
  %928 = vmatprep.subr.bf16.mxu0 0
  %929 = vmatpush1.bf16.msra.mxu0 0
  %930 = vmatprep.subr.bf16.mxu0 0
  %931 = vmatpush1.bf16.msra.mxu0 0
  %932 = vmatprep.subr.bf16.mxu0 0
  %933 = vmatpush1.bf16.msra.mxu0 0
  %934 = vmatprep.subr.bf16.mxu0 0
  %935 = vmatpush1.bf16.msra.mxu0 0
  %936 = vmatprep.subr.bf16.mxu0 0
  %937 = vmatpush1.bf16.msra.mxu0 0
  %938 = vmatprep.mubr.bf16.mxu0 0
  %939 = vmatmul.mubr.bf16.gmra.mrb[0].mxu0 %v904
  %v940 = vpop.f32.mrb[0].mxu0
  %v941 = vadd.f32 %v188, %v940
  %v942 = vpop.f32.mrb[0].mxu0
  %v943 = vpop.f32.mrb[0].mxu0
  %v944 = vpop.f32.mrb[0].mxu0
  %945 = vdwg.mxu0
  %v946 = vadd.f32 %v101, %v894
  %v947 = vxor.u32 %v946, 2147483648
  %v948 = vmul.f32 %v947, 1.442695
  %v949 = vpow.pop %v948
  %v950 = vadd.f32 %v949, 1.0
  %v951 = vrcp.pop %v950
  %v952 = vmul.f32 1.0, %v951
  %954 = vrot.lane.b32.xlu0 %v894, 64
  %v955 = vpop.permute.xlu0 %954
  %v957 = vmul.f32 %v952, %v955
  %959 = vrot.lane.b32.xlu0 %v957, 64
  %v960 = vpop.permute.xlu0 %959
  %v962 = vadd.f32 %v101, %v960
  %v963 = vtanh.pop %v962
  %v964 = vsub.f32 1.0, %v952
  %966 = vrot.lane.b32.xlu0 %v963, 96
  %v967 = vpop.permute.xlu0 %966
  %v969 = vmul.f32 %v964, %v967
  %v970 = vrot.slane %v813, 6
  %v972 = vmul.f32 %v952, %v970
  %v973 = vadd.f32 %v969, %v972
  %v975 = vrot.slane %v941, 2
  %v977 = vadd.f32 %v162, %v975
  %v978 = vxor.u32 %v977, 2147483648
  %v979 = vmul.f32 %v978, 1.442695
  %v980 = vpow.pop %v979
  %v981 = vadd.f32 %v980, 1.0
  %v982 = vrcp.pop %v981
  %v983 = vmul.f32 1.0, %v982
  %984 = vrot.lane.b32.xlu0 %v975, 64
  %v985 = vpop.permute.xlu0 %984
  %v987 = vmul.f32 %v983, %v985
  %989 = vrot.lane.b32.xlu0 %v987, 64
  %v990 = vpop.permute.xlu0 %989
  %v992 = vadd.f32 %v162, %v990
  %v993 = vtanh.pop %v992
  %v994 = vsub.f32 1.0, %v983
  %996 = vrot.lane.b32.xlu0 %v993, 96
  %v997 = vpop.permute.xlu0 %996
  %v999 = vmul.f32 %v994, %v997
  %v1001 = vrot.slane %v842, 2
  %v1003 = vmul.f32 %v983, %v1001
  %v1004 = vadd.f32 %v999, %v1003
  %1006 = vrot.lane.b32.xlu0 %v973, 96
  %v1007 = vpop.permute.xlu0 %1006
  %1009 = vst.msk [vmem:[%s9 + $0x8] sm:$0x3] %vm355, %v1007
  %1010 = vst.msk [vmem:[%s9] sm:$0xc0] %vm357, %v1004
  %v1011 = vpack.c.bf16 %v973, %v973
  %1013 = vrot.lane.b32.xlu0 %v1011, 96
  %v1014 = vpop.permute.xlu0 %1013
  %v1016 = vsel %vm59, %v1014, 0
  %1018 = vmatprep.subr.bf16.mxu0 0
  %1019 = vmatpush1.bf16.msra.mxu0 %v198
  %1020 = vmatprep.subr.bf16.mxu0 0
  %1021 = vmatpush1.bf16.msra.mxu0 %v199
  %1022 = vmatprep.subr.bf16.mxu0 0
  %1023 = vmatpush1.bf16.msra.mxu0 0
  %1024 = vmatprep.subr.bf16.mxu0 0
  %1025 = vmatpush1.bf16.msra.mxu0 0
  %1026 = vmatprep.subr.bf16.mxu0 0
  %1027 = vmatpush1.bf16.msra.mxu0 0
  %1028 = vmatprep.subr.bf16.mxu0 0
  %1029 = vmatpush1.bf16.msra.mxu0 0
  %1030 = vmatprep.subr.bf16.mxu0 0
  %1031 = vmatpush1.bf16.msra.mxu0 0
  %1032 = vmatprep.subr.bf16.mxu0 0
  %1033 = vmatpush1.bf16.msra.mxu0 0
  %1034 = vmatprep.subr.bf16.mxu0 0
  %1035 = vmatpush1.bf16.msra.mxu0 0
  %1036 = vmatprep.subr.bf16.mxu0 0
  %1037 = vmatpush1.bf16.msra.mxu0 0
  %1038 = vmatprep.subr.bf16.mxu0 0
  %1039 = vmatpush1.bf16.msra.mxu0 0
  %1040 = vmatprep.subr.bf16.mxu0 0
  %1041 = vmatpush1.bf16.msra.mxu0 0
  %1042 = vmatprep.subr.bf16.mxu0 0
  %1043 = vmatpush1.bf16.msra.mxu0 0
  %1044 = vmatprep.subr.bf16.mxu0 0
  %1045 = vmatpush1.bf16.msra.mxu0 0
  %1046 = vmatprep.subr.bf16.mxu0 0
  %1047 = vmatpush1.bf16.msra.mxu0 0
  %1048 = vmatprep.subr.bf16.mxu0 0
  %1049 = vmatpush1.bf16.msra.mxu0 0
  %1050 = vmatprep.mubr.bf16.mxu0 0
  %1051 = vmatmul.mubr.bf16.gmra.mrb[0].mxu0 %v1016
  %v1052 = vpop.f32.mrb[0].mxu0
  %v1053 = vadd.f32 %v181, %v1052
  %v1054 = vpop.f32.mrb[0].mxu0
  %v1055 = vpop.f32.mrb[0].mxu0
  %v1056 = vpop.f32.mrb[0].mxu0
  %1057 = vdwg.mxu0
  %v1058 = vpack.c.bf16 %v1004, %v1004
  %v1060 = vrot.slane %v1058, 3
  %1061 = vrot.lane.b32.xlu0 %v1060, 96
  %v1062 = vpop.permute.xlu0 %1061
  %v1064 = vsel %vm59, %v1062, 0
  %1066 = vmatprep.subr.bf16.mxu0 0
  %1067 = vmatpush1.bf16.msra.mxu0 %v253
  %1068 = vmatprep.subr.bf16.mxu0 0
  %1069 = vmatpush1.bf16.msra.mxu0 %v254
  %1070 = vmatprep.subr.bf16.mxu0 0
  %1071 = vmatpush1.bf16.msra.mxu0 0
  %1072 = vmatprep.subr.bf16.mxu0 0
  %1073 = vmatpush1.bf16.msra.mxu0 0
  %1074 = vmatprep.subr.bf16.mxu0 0
  %1075 = vmatpush1.bf16.msra.mxu0 0
  %1076 = vmatprep.subr.bf16.mxu0 0
  %1077 = vmatpush1.bf16.msra.mxu0 0
  %1078 = vmatprep.subr.bf16.mxu0 0
  %1079 = vmatpush1.bf16.msra.mxu0 0
  %1080 = vmatprep.subr.bf16.mxu0 0
  %1081 = vmatpush1.bf16.msra.mxu0 0
  %1082 = vmatprep.subr.bf16.mxu0 0
  %1083 = vmatpush1.bf16.msra.mxu0 0
  %1084 = vmatprep.subr.bf16.mxu0 0
  %1085 = vmatpush1.bf16.msra.mxu0 0
  %1086 = vmatprep.subr.bf16.mxu0 0
  %1087 = vmatpush1.bf16.msra.mxu0 0
  %1088 = vmatprep.subr.bf16.mxu0 0
  %1089 = vmatpush1.bf16.msra.mxu0 0
  %1090 = vmatprep.subr.bf16.mxu0 0
  %1091 = vmatpush1.bf16.msra.mxu0 0
  %1092 = vmatprep.subr.bf16.mxu0 0
  %1093 = vmatpush1.bf16.msra.mxu0 0
  %1094 = vmatprep.subr.bf16.mxu0 0
  %1095 = vmatpush1.bf16.msra.mxu0 0
  %1096 = vmatprep.subr.bf16.mxu0 0
  %1097 = vmatpush1.bf16.msra.mxu0 0
  %1098 = vmatprep.mubr.bf16.mxu0 0
  %1099 = vmatmul.mubr.bf16.gmra.mrb[0].mxu0 %v1064
  %v1100 = vpop.f32.mrb[0].mxu0
  %v1101 = vadd.f32 %v188, %v1100
  %v1102 = vpop.f32.mrb[0].mxu0
  %v1103 = vpop.f32.mrb[0].mxu0
  %v1104 = vpop.f32.mrb[0].mxu0
  %1105 = vdwg.mxu0
  %v1107 = vrot.slane %v1053, 6
  %v1109 = vadd.f32 %v101, %v1107
  %v1110 = vxor.u32 %v1109, 2147483648
  %v1111 = vmul.f32 %v1110, 1.442695
  %v1112 = vpow.pop %v1111
  %v1113 = vadd.f32 %v1112, 1.0
  %v1114 = vrcp.pop %v1113
  %v1115 = vmul.f32 1.0, %v1114
  %1116 = vrot.lane.b32.xlu0 %v1107, 64
  %v1117 = vpop.permute.xlu0 %1116
  %v1119 = vmul.f32 %v1115, %v1117
  %1121 = vrot.lane.b32.xlu0 %v1119, 64
  %v1122 = vpop.permute.xlu0 %1121
  %v1124 = vadd.f32 %v101, %v1122
  %v1125 = vtanh.pop %v1124
  %v1126 = vsub.f32 1.0, %v1115
  %1128 = vrot.lane.b32.xlu0 %v1125, 96
  %v1129 = vpop.permute.xlu0 %1128
  %v1131 = vmul.f32 %v1126, %v1129
  %v1132 = vrot.slane %v973, 6
  %v1134 = vmul.f32 %v1115, %v1132
  %v1135 = vadd.f32 %v1131, %v1134
  %v1137 = vrot.slane %v1101, 4
  %v1139 = vadd.f32 %v162, %v1137
  %v1140 = vxor.u32 %v1139, 2147483648
  %v1141 = vmul.f32 %v1140, 1.442695
  %v1142 = vpow.pop %v1141
  %v1143 = vadd.f32 %v1142, 1.0
  %v1144 = vrcp.pop %v1143
  %v1145 = vmul.f32 1.0, %v1144
  %1146 = vrot.lane.b32.xlu0 %v1137, 64
  %v1147 = vpop.permute.xlu0 %1146
  %v1149 = vmul.f32 %v1145, %v1147
  %1151 = vrot.lane.b32.xlu0 %v1149, 64
  %v1152 = vpop.permute.xlu0 %1151
  %v1154 = vadd.f32 %v162, %v1152
  %v1155 = vtanh.pop %v1154
  %v1156 = vsub.f32 1.0, %v1145
  %1158 = vrot.lane.b32.xlu0 %v1155, 96
  %v1159 = vpop.permute.xlu0 %1158
  %v1161 = vmul.f32 %v1156, %v1159
  %v1163 = vrot.slane %v1004, 2
  %v1165 = vmul.f32 %v1145, %v1163
  %v1166 = vadd.f32 %v1161, %v1165
  %1168 = vrot.lane.b32.xlu0 %v1135, 96
  %v1169 = vpop.permute.xlu0 %1168
  %1171 = vst.msk [vmem:[%s9 + $0x8] sm:$0xc] %vm519, %v1169
  %1172 = vst.msk [vmem:[%s9] sm:$0x30] %vm521, %v1166
  %v1173 = vpack.c.bf16 %v1135, %v1135
  %v1175 = vrot.slane %v1173, 1
  %1176 = vrot.lane.b32.xlu0 %v1175, 96
  %v1177 = vpop.permute.xlu0 %1176
  %v1179 = vsel %vm59, %v1177, 0
  %1181 = vmatprep.subr.bf16.mxu0 0
  %1182 = vmatpush1.bf16.msra.mxu0 %v198
  %1183 = vmatprep.subr.bf16.mxu0 0
  %1184 = vmatpush1.bf16.msra.mxu0 %v199
  %1185 = vmatprep.subr.bf16.mxu0 0
  %1186 = vmatpush1.bf16.msra.mxu0 0
  %1187 = vmatprep.subr.bf16.mxu0 0
  %1188 = vmatpush1.bf16.msra.mxu0 0
  %1189 = vmatprep.subr.bf16.mxu0 0
  %1190 = vmatpush1.bf16.msra.mxu0 0
  %1191 = vmatprep.subr.bf16.mxu0 0
  %1192 = vmatpush1.bf16.msra.mxu0 0
  %1193 = vmatprep.subr.bf16.mxu0 0
  %1194 = vmatpush1.bf16.msra.mxu0 0
  %1195 = vmatprep.subr.bf16.mxu0 0
  %1196 = vmatpush1.bf16.msra.mxu0 0
  %1197 = vmatprep.subr.bf16.mxu0 0
  %1198 = vmatpush1.bf16.msra.mxu0 0
  %1199 = vmatprep.subr.bf16.mxu0 0
  %1200 = vmatpush1.bf16.msra.mxu0 0
  %1201 = vmatprep.subr.bf16.mxu0 0
  %1202 = vmatpush1.bf16.msra.mxu0 0
  %1203 = vmatprep.subr.bf16.mxu0 0
  %1204 = vmatpush1.bf16.msra.mxu0 0
  %1205 = vmatprep.subr.bf16.mxu0 0
  %1206 = vmatpush1.bf16.msra.mxu0 0
  %1207 = vmatprep.subr.bf16.mxu0 0
  %1208 = vmatpush1.bf16.msra.mxu0 0
  %1209 = vmatprep.subr.bf16.mxu0 0
  %1210 = vmatpush1.bf16.msra.mxu0 0
  %1211 = vmatprep.subr.bf16.mxu0 0
  %1212 = vmatpush1.bf16.msra.mxu0 0
  %1213 = vmatprep.mubr.bf16.mxu0 0
  %1214 = vmatmul.mubr.bf16.gmra.mrb[0].mxu0 %v1179
  %v1215 = vpop.f32.mrb[0].mxu0
  %v1216 = vadd.f32 %v181, %v1215
  %v1217 = vpop.f32.mrb[0].mxu0
  %v1218 = vpop.f32.mrb[0].mxu0
  %v1219 = vpop.f32.mrb[0].mxu0
  %1220 = vdwg.mxu0
  %v1221 = vpack.c.bf16 %v1166, %v1166
  %v1223 = vrot.slane %v1221, 2
  %1224 = vrot.lane.b32.xlu0 %v1223, 96
  %v1225 = vpop.permute.xlu0 %1224
  %v1227 = vsel %vm59, %v1225, 0
  %1229 = vmatprep.subr.bf16.mxu0 0
  %1230 = vmatpush1.bf16.msra.mxu0 %v253
  %1231 = vmatprep.subr.bf16.mxu0 0
  %1232 = vmatpush1.bf16.msra.mxu0 %v254
  %1233 = vmatprep.subr.bf16.mxu0 0
  %1234 = vmatpush1.bf16.msra.mxu0 0
  %1235 = vmatprep.subr.bf16.mxu0 0
  %1236 = vmatpush1.bf16.msra.mxu0 0
  %1237 = vmatprep.subr.bf16.mxu0 0
  %1238 = vmatpush1.bf16.msra.mxu0 0
  %1239 = vmatprep.subr.bf16.mxu0 0
  %1240 = vmatpush1.bf16.msra.mxu0 0
  %1241 = vmatprep.subr.bf16.mxu0 0
  %1242 = vmatpush1.bf16.msra.mxu0 0
  %1243 = vmatprep.subr.bf16.mxu0 0
  %1244 = vmatpush1.bf16.msra.mxu0 0
  %1245 = vmatprep.subr.bf16.mxu0 0
  %1246 = vmatpush1.bf16.msra.mxu0 0
  %1247 = vmatprep.subr.bf16.mxu0 0
  %1248 = vmatpush1.bf16.msra.mxu0 0
  %1249 = vmatprep.subr.bf16.mxu0 0
  %1250 = vmatpush1.bf16.msra.mxu0 0
  %1251 = vmatprep.subr.bf16.mxu0 0
  %1252 = vmatpush1.bf16.msra.mxu0 0
  %1253 = vmatprep.subr.bf16.mxu0 0
  %1254 = vmatpush1.bf16.msra.mxu0 0
  %1255 = vmatprep.subr.bf16.mxu0 0
  %1256 = vmatpush1.bf16.msra.mxu0 0
  %1257 = vmatprep.subr.bf16.mxu0 0
  %1258 = vmatpush1.bf16.msra.mxu0 0
  %1259 = vmatprep.subr.bf16.mxu0 0
  %1260 = vmatpush1.bf16.msra.mxu0 0
  %1261 = vmatprep.mubr.bf16.mxu0 0
  %1262 = vmatmul.mubr.bf16.gmra.mrb[0].mxu0 %v1227
  %v1263 = vpop.f32.mrb[0].mxu0
  %v1264 = vadd.f32 %v188, %v1263
  %v1265 = vpop.f32.mrb[0].mxu0
  %v1266 = vpop.f32.mrb[0].mxu0
  %v1267 = vpop.f32.mrb[0].mxu0
  %1268 = vdwg.mxu0
  %v1270 = vrot.slane %v1216, 4
  %v1272 = vadd.f32 %v101, %v1270
  %v1273 = vxor.u32 %v1272, 2147483648
  %v1274 = vmul.f32 %v1273, 1.442695
  %v1275 = vpow.pop %v1274
  %v1276 = vadd.f32 %v1275, 1.0
  %v1277 = vrcp.pop %v1276
  %v1278 = vmul.f32 1.0, %v1277
  %1279 = vrot.lane.b32.xlu0 %v1270, 64
  %v1280 = vpop.permute.xlu0 %1279
  %v1282 = vmul.f32 %v1278, %v1280
  %1284 = vrot.lane.b32.xlu0 %v1282, 64
  %v1285 = vpop.permute.xlu0 %1284
  %v1287 = vadd.f32 %v101, %v1285
  %v1288 = vtanh.pop %v1287
  %v1289 = vsub.f32 1.0, %v1278
  %1291 = vrot.lane.b32.xlu0 %v1288, 96
  %v1292 = vpop.permute.xlu0 %1291
  %v1294 = vmul.f32 %v1289, %v1292
  %v1295 = vrot.slane %v1135, 6
  %v1297 = vmul.f32 %v1278, %v1295
  %v1298 = vadd.f32 %v1294, %v1297
  %v1300 = vrot.slane %v1264, 6
  %v1302 = vadd.f32 %v162, %v1300
  %v1303 = vxor.u32 %v1302, 2147483648
  %v1304 = vmul.f32 %v1303, 1.442695
  %v1305 = vpow.pop %v1304
  %v1306 = vadd.f32 %v1305, 1.0
  %v1307 = vrcp.pop %v1306
  %v1308 = vmul.f32 1.0, %v1307
  %1309 = vrot.lane.b32.xlu0 %v1300, 64
  %v1310 = vpop.permute.xlu0 %1309
  %v1312 = vmul.f32 %v1308, %v1310
  %1314 = vrot.lane.b32.xlu0 %v1312, 64
  %v1315 = vpop.permute.xlu0 %1314
  %v1317 = vadd.f32 %v162, %v1315
  %v1318 = vtanh.pop %v1317
  %v1319 = vsub.f32 1.0, %v1308
  %1321 = vrot.lane.b32.xlu0 %v1318, 96
  %v1322 = vpop.permute.xlu0 %1321
  %v1324 = vmul.f32 %v1319, %v1322
  %v1326 = vrot.slane %v1166, 2
  %v1328 = vmul.f32 %v1308, %v1326
  %v1329 = vadd.f32 %v1324, %v1328
  %1331 = vrot.lane.b32.xlu0 %v1298, 96
  %v1332 = vpop.permute.xlu0 %1331
  %1334 = vst.msk [vmem:[%s9 + $0x8] sm:$0x30] %vm684, %v1332
  %1335 = vst.msk [vmem:[%s9] sm:$0xc] %vm686, %v1329
  %v1336 = vpack.c.bf16 %v1298, %v1298
  %v1338 = vrot.slane %v1336, 2
  %1339 = vrot.lane.b32.xlu0 %v1338, 96
  %v1340 = vpop.permute.xlu0 %1339
  %v1342 = vsel %vm59, %v1340, 0
  %1344 = vmatprep.subr.bf16.mxu0 0
  %1345 = vmatpush1.bf16.msra.mxu0 %v198
  %1346 = vmatprep.subr.bf16.mxu0 0
  %1347 = vmatpush1.bf16.msra.mxu0 %v199
  %1348 = vmatprep.subr.bf16.mxu0 0
  %1349 = vmatpush1.bf16.msra.mxu0 0
  %1350 = vmatprep.subr.bf16.mxu0 0
  %1351 = vmatpush1.bf16.msra.mxu0 0
  %1352 = vmatprep.subr.bf16.mxu0 0
  %1353 = vmatpush1.bf16.msra.mxu0 0
  %1354 = vmatprep.subr.bf16.mxu0 0
  %1355 = vmatpush1.bf16.msra.mxu0 0
  %1356 = vmatprep.subr.bf16.mxu0 0
  %1357 = vmatpush1.bf16.msra.mxu0 0
  %1358 = vmatprep.subr.bf16.mxu0 0
  %1359 = vmatpush1.bf16.msra.mxu0 0
  %1360 = vmatprep.subr.bf16.mxu0 0
  %1361 = vmatpush1.bf16.msra.mxu0 0
  %1362 = vmatprep.subr.bf16.mxu0 0
  %1363 = vmatpush1.bf16.msra.mxu0 0
  %1364 = vmatprep.subr.bf16.mxu0 0
  %1365 = vmatpush1.bf16.msra.mxu0 0
  %1366 = vmatprep.subr.bf16.mxu0 0
  %1367 = vmatpush1.bf16.msra.mxu0 0
  %1368 = vmatprep.subr.bf16.mxu0 0
  %1369 = vmatpush1.bf16.msra.mxu0 0
  %1370 = vmatprep.subr.bf16.mxu0 0
  %1371 = vmatpush1.bf16.msra.mxu0 0
  %1372 = vmatprep.subr.bf16.mxu0 0
  %1373 = vmatpush1.bf16.msra.mxu0 0
  %1374 = vmatprep.subr.bf16.mxu0 0
  %1375 = vmatpush1.bf16.msra.mxu0 0
  %1376 = vmatprep.mubr.bf16.mxu0 0
  %1377 = vmatmul.mubr.bf16.gmra.mrb[0].mxu0 %v1342
  %v1378 = vpop.f32.mrb[0].mxu0
  %v1379 = vadd.f32 %v181, %v1378
  %v1380 = vpop.f32.mrb[0].mxu0
  %v1381 = vpop.f32.mrb[0].mxu0
  %v1382 = vpop.f32.mrb[0].mxu0
  %1383 = vdwg.mxu0
  %v1384 = vpack.c.bf16 %v1329, %v1329
  %v1386 = vrot.slane %v1384, 1
  %1387 = vrot.lane.b32.xlu0 %v1386, 96
  %v1388 = vpop.permute.xlu0 %1387
  %v1390 = vsel %vm59, %v1388, 0
  %1392 = vmatprep.subr.bf16.mxu0 0
  %1393 = vmatpush1.bf16.msra.mxu0 %v253
  %1394 = vmatprep.subr.bf16.mxu0 0
  %1395 = vmatpush1.bf16.msra.mxu0 %v254
  %1396 = vmatprep.subr.bf16.mxu0 0
  %1397 = vmatpush1.bf16.msra.mxu0 0
  %1398 = vmatprep.subr.bf16.mxu0 0
  %1399 = vmatpush1.bf16.msra.mxu0 0
  %1400 = vmatprep.subr.bf16.mxu0 0
  %1401 = vmatpush1.bf16.msra.mxu0 0
  %1402 = vmatprep.subr.bf16.mxu0 0
  %1403 = vmatpush1.bf16.msra.mxu0 0
  %1404 = vmatprep.subr.bf16.mxu0 0
  %1405 = vmatpush1.bf16.msra.mxu0 0
  %1406 = vmatprep.subr.bf16.mxu0 0
  %1407 = vmatpush1.bf16.msra.mxu0 0
  %1408 = vmatprep.subr.bf16.mxu0 0
  %1409 = vmatpush1.bf16.msra.mxu0 0
  %1410 = vmatprep.subr.bf16.mxu0 0
  %1411 = vmatpush1.bf16.msra.mxu0 0
  %1412 = vmatprep.subr.bf16.mxu0 0
  %1413 = vmatpush1.bf16.msra.mxu0 0
  %1414 = vmatprep.subr.bf16.mxu0 0
  %1415 = vmatpush1.bf16.msra.mxu0 0
  %1416 = vmatprep.subr.bf16.mxu0 0
  %1417 = vmatpush1.bf16.msra.mxu0 0
  %1418 = vmatprep.subr.bf16.mxu0 0
  %1419 = vmatpush1.bf16.msra.mxu0 0
  %1420 = vmatprep.subr.bf16.mxu0 0
  %1421 = vmatpush1.bf16.msra.mxu0 0
  %1422 = vmatprep.subr.bf16.mxu0 0
  %1423 = vmatpush1.bf16.msra.mxu0 0
  %1424 = vmatprep.mubr.bf16.mxu0 0
  %1425 = vmatmul.mubr.bf16.gmra.mrb[0].mxu0 %v1390
  %v1426 = vpop.f32.mrb[0].mxu0
  %v1427 = vadd.f32 %v188, %v1426
  %v1428 = vpop.f32.mrb[0].mxu0
  %v1429 = vpop.f32.mrb[0].mxu0
  %v1430 = vpop.f32.mrb[0].mxu0
  %1431 = vdwg.mxu0
  %v1433 = vrot.slane %v1379, 2
  %v1435 = vadd.f32 %v101, %v1433
  %v1436 = vxor.u32 %v1435, 2147483648
  %v1437 = vmul.f32 %v1436, 1.442695
  %v1438 = vpow.pop %v1437
  %v1439 = vadd.f32 %v1438, 1.0
  %v1440 = vrcp.pop %v1439
  %v1441 = vmul.f32 1.0, %v1440
  %1442 = vrot.lane.b32.xlu0 %v1433, 64
  %v1443 = vpop.permute.xlu0 %1442
  %v1445 = vmul.f32 %v1441, %v1443
  %1447 = vrot.lane.b32.xlu0 %v1445, 64
  %v1448 = vpop.permute.xlu0 %1447
  %v1450 = vadd.f32 %v101, %v1448
  %v1451 = vtanh.pop %v1450
  %v1452 = vsub.f32 1.0, %v1441
  %1454 = vrot.lane.b32.xlu0 %v1451, 96
  %v1455 = vpop.permute.xlu0 %1454
  %v1457 = vmul.f32 %v1452, %v1455
  %v1458 = vrot.slane %v1298, 6
  %v1460 = vmul.f32 %v1441, %v1458
  %v1461 = vadd.f32 %v1457, %v1460
  %v1462 = vadd.f32 %v162, %v1427
  %v1463 = vxor.u32 %v1462, 2147483648
  %v1464 = vmul.f32 %v1463, 1.442695
  %v1465 = vpow.pop %v1464
  %v1466 = vadd.f32 %v1465, 1.0
  %v1467 = vrcp.pop %v1466
  %v1468 = vmul.f32 1.0, %v1467
  %1470 = vrot.lane.b32.xlu0 %v1427, 64
  %v1471 = vpop.permute.xlu0 %1470
  %v1473 = vmul.f32 %v1468, %v1471
  %1475 = vrot.lane.b32.xlu0 %v1473, 64
  %v1476 = vpop.permute.xlu0 %1475
  %v1478 = vadd.f32 %v162, %v1476
  %v1479 = vtanh.pop %v1478
  %v1480 = vsub.f32 1.0, %v1468
  %1482 = vrot.lane.b32.xlu0 %v1479, 96
  %v1483 = vpop.permute.xlu0 %1482
  %v1485 = vmul.f32 %v1480, %v1483
  %v1487 = vrot.slane %v1329, 2
  %v1489 = vmul.f32 %v1468, %v1487
  %v1490 = vadd.f32 %v1485, %v1489
  %1492 = vrot.lane.b32.xlu0 %v1461, 96
  %v1493 = vpop.permute.xlu0 %1492
  %1495 = vst.msk [vmem:[%s9 + $0x8] sm:$0xc0] %vm847, %v1493
  %1496 = vst.msk [vmem:[%s9] sm:$0x3] %vm849, %v1490
  // Predicated region
  $region38: #{rnns_forward.2} parent=0 // pred_check
    _
  $region39: #{rnns_forward.2} parent=0 // pred_check_branch
    %1498 = sbr.rel (0) target = $region41
  $region40: #{rnns_forward.2} parent=0 // pred_region
    _
  $region41: #{rnns_forward.2} parent=0 // pred_fallthru
    _
  // Predicated region
  $region42: #{rnns_forward.2} parent=0 // pred_check
    _
  $region43: #{rnns_forward.2} parent=0 // pred_check_branch
    %1500 = sbr.rel (0) target = $region45
  $region44: #{rnns_forward.2} parent=0 // pred_region
    _
  $region45: #{rnns_forward.2} parent=0 // pred_fallthru
    _

// kernel: rnns_forward.3
$region0: #{rnns_forward.3}
  #allocation0 [shape = 'u32[]', space=smem, size = 0x4, offset = 0x4, fixed_abs, tag = 'smem constant byte address 0x4 - core index']
  #allocation1 [shape = 'u32[144,128]{1,0:T(1,128)}', space=vmem, size = 0x12000, scoped, tag = 'internal scratch']
  %s0 = inlined_call_operand.vmem [shape: f32[16,64], index: 0, kind: input, shape index: {}]
  %s1 = inlined_call_operand.vmem [shape: bf16[64,96], index: 1, kind: input, shape index: {}]
  %s2 = inlined_call_operand.vmem [shape: bf16[64,96], index: 2, kind: input, shape index: {}]
  %s3 = inlined_call_operand.vmem [shape: bf16[32,96], index: 3, kind: input, shape index: {}]
  %s4 = inlined_call_operand.vmem [shape: bf16[32,96], index: 4, kind: input, shape index: {}]
  %s5 = inlined_call_operand.vmem [shape: f32[1,96], index: 5, kind: input, shape index: {}]
  %s6 = inlined_call_operand.vmem [shape: f32[1,96], index: 6, kind: input, shape index: {}]
  %s7 = inlined_call_operand.vmem [shape: f32[1,96], index: 7, kind: input, shape index: {}]
  %s8 = inlined_call_operand.vmem [shape: f32[1,96], index: 8, kind: input, shape index: {}]
  %s9 = inlined_call_operand.vmem [shape: f32[16,64], index: 9, kind: output, shape index: {}]
  %s10 = sld [smem:[#allocation0]]
  $region46: #{rnns_forward.3} parent=0
    _
  %s12 = ssub.s32 1, %s10
  %s13 = scalar_select 0, %s12, %s10
  // Predicated region
  $region2: #{rnns_forward.3} parent=0 // pred_check
    _
  $region3: #{rnns_forward.3} parent=0 // pred_check_branch
    %15 = sbr.rel (0) target = $region5
  $region4: #{rnns_forward.3} parent=0 // pred_region
    _
  $region5: #{rnns_forward.3} parent=0 // pred_fallthru
    _
  // Predicated region
  $region6: #{rnns_forward.3} parent=0 // pred_check
    _
  $region7: #{rnns_forward.3} parent=0 // pred_check_branch
    %17 = sbr.rel (0) target = $region9
  $region8: #{rnns_forward.3} parent=0 // pred_region
    _
  $region9: #{rnns_forward.3} parent=0 // pred_fallthru
    _
  // Predicated region
  $region10: #{rnns_forward.3} parent=0 // pred_check
    _
  $region11: #{rnns_forward.3} parent=0 // pred_check_branch
    %19 = sbr.rel (0) target = $region13
  $region12: #{rnns_forward.3} parent=0 // pred_region
    _
  $region13: #{rnns_forward.3} parent=0 // pred_fallthru
    _
  // Predicated region
  $region14: #{rnns_forward.3} parent=0 // pred_check
    _
  $region15: #{rnns_forward.3} parent=0 // pred_check_branch
    %21 = sbr.rel (0) target = $region17
  $region16: #{rnns_forward.3} parent=0 // pred_region
    _
  $region17: #{rnns_forward.3} parent=0 // pred_fallthru
    _
  // Predicated region
  $region18: #{rnns_forward.3} parent=0 // pred_check
    _
  $region19: #{rnns_forward.3} parent=0 // pred_check_branch
    %23 = sbr.rel (0) target = $region21
  $region20: #{rnns_forward.3} parent=0 // pred_region
    _
  $region21: #{rnns_forward.3} parent=0 // pred_fallthru
    _
  // Predicated region
  $region22: #{rnns_forward.3} parent=0 // pred_check
    _
  $region23: #{rnns_forward.3} parent=0 // pred_check_branch
    %25 = sbr.rel (0) target = $region25
  $region24: #{rnns_forward.3} parent=0 // pred_region
    _
  $region25: #{rnns_forward.3} parent=0 // pred_fallthru
    _
  // Predicated region
  $region26: #{rnns_forward.3} parent=0 // pred_check
    _
  $region27: #{rnns_forward.3} parent=0 // pred_check_branch
    %27 = sbr.rel (0) target = $region29
  $region28: #{rnns_forward.3} parent=0 // pred_region
    _
  $region29: #{rnns_forward.3} parent=0 // pred_fallthru
    _
  // Predicated region
  $region30: #{rnns_forward.3} parent=0 // pred_check
    _
  $region31: #{rnns_forward.3} parent=0 // pred_check_branch
    %29 = sbr.rel (0) target = $region33
  $region32: #{rnns_forward.3} parent=0 // pred_region
    _
  $region33: #{rnns_forward.3} parent=0 // pred_fallthru
    _
  // Predicated region
  $region34: #{rnns_forward.3} parent=0 // pred_check
    _
  $region35: #{rnns_forward.3} parent=0 // pred_check_branch
    %31 = sbr.rel (0) target = $region37
  $region36: #{rnns_forward.3} parent=0 // pred_region
    _
  $region37: #{rnns_forward.3} parent=0 // pred_fallthru
    _
  %v33 = vld [vmem:[%s0] sm:$0xff]
  %v34 = vld [vmem:[%s0 + $0x8] sm:$0xff]
  %v35 = vpack.c.bf16 %v34, %v33
  %v36 = vld [vmem:[%s1] sm:$0xf]
  %v37 = vld [vmem:[%s1 + $0x4] sm:$0xf]
  %v38 = vld [vmem:[%s1 + $0x8] sm:$0xf]
  %v39 = vld [vmem:[%s1 + $0xc] sm:$0xf]
  %v40 = vld [vmem:[%s1 + $0x10] sm:$0xf]
  %v41 = vld [vmem:[%s1 + $0x14] sm:$0xf]
  %v42 = vld [vmem:[%s1 + $0x18] sm:$0xf]
  %v43 = vld [vmem:[%s1 + $0x1c] sm:$0xf]
  %v44 = vld [vmem:[%s5] sm:$0x1]
  %v46 = vlaneseq
  %v47 = vshrl.u32 %v46, 7
  %v48 = vsub.s32 0, %v47
  %v49 = vrot.slane %v44, %v48
  %v59 = vunpack.c.l.b16 %v36
  %v60 = vunpack.c.l.b16 %v37
  %v61 = vunpack.c.l.b16 %v38
  %v62 = vunpack.c.l.b16 %v39
  %v63 = vunpack.c.l.b16 %v40
  %v64 = vunpack.c.l.b16 %v41
  %v65 = vunpack.c.l.b16 %v42
  %v66 = vunpack.c.l.b16 %v43
  %v67 = vpack.c.b16 %v60, %v59
  %v68 = vpack.c.b16 %v62, %v61
  %v69 = vpack.c.b16 %v64, %v63
  %v70 = vpack.c.b16 %v66, %v65
  %vm75 = vcmask 523264
  %v77 = vsel %vm75, %v35, 0
  %79 = vmatprep.subr.bf16.mxu0 0
  %80 = vmatpush1.bf16.msra.mxu0 %v67
  %81 = vmatprep.subr.bf16.mxu0 0
  %82 = vmatpush1.bf16.msra.mxu0 %v68
  %83 = vmatprep.subr.bf16.mxu0 0
  %84 = vmatpush1.bf16.msra.mxu0 %v69
  %85 = vmatprep.subr.bf16.mxu0 0
  %86 = vmatpush1.bf16.msra.mxu0 %v70
  %87 = vmatprep.subr.bf16.mxu0 0
  %88 = vmatpush1.bf16.msra.mxu0 0
  %89 = vmatprep.subr.bf16.mxu0 0
  %90 = vmatpush1.bf16.msra.mxu0 0
  %91 = vmatprep.subr.bf16.mxu0 0
  %92 = vmatpush1.bf16.msra.mxu0 0
  %93 = vmatprep.subr.bf16.mxu0 0
  %94 = vmatpush1.bf16.msra.mxu0 0
  %95 = vmatprep.subr.bf16.mxu0 0
  %96 = vmatpush1.bf16.msra.mxu0 0
  %97 = vmatprep.subr.bf16.mxu0 0
  %98 = vmatpush1.bf16.msra.mxu0 0
  %99 = vmatprep.subr.bf16.mxu0 0
  %100 = vmatpush1.bf16.msra.mxu0 0
  %101 = vmatprep.subr.bf16.mxu0 0
  %102 = vmatpush1.bf16.msra.mxu0 0
  %103 = vmatprep.subr.bf16.mxu0 0
  %104 = vmatpush1.bf16.msra.mxu0 0
  %105 = vmatprep.subr.bf16.mxu0 0
  %106 = vmatpush1.bf16.msra.mxu0 0
  %107 = vmatprep.subr.bf16.mxu0 0
  %108 = vmatpush1.bf16.msra.mxu0 0
  %109 = vmatprep.subr.bf16.mxu0 0
  %110 = vmatpush1.bf16.msra.mxu0 0
  %111 = vmatprep.mubr.bf16.mxu0 0
  %112 = vmatmul.mubr.bf16.gmra.mrb[0].mxu0 %v77
  %v113 = vpop.f32.mrb[0].mxu0
  %v114 = vadd.f32 %v49, %v113
  %v115 = vpop.f32.mrb[0].mxu0
  %v116 = vpop.f32.mrb[0].mxu0
  %v117 = vadd.f32 %v49, %v116
  %v118 = vpop.f32.mrb[0].mxu0
  %119 = vdwg.mxu0
  %v120 = vld [vmem:[%s2] sm:$0xf]
  %v121 = vld [vmem:[%s2 + $0x4] sm:$0xf]
  %v122 = vld [vmem:[%s2 + $0x8] sm:$0xf]
  %v123 = vld [vmem:[%s2 + $0xc] sm:$0xf]
  %v124 = vld [vmem:[%s2 + $0x10] sm:$0xf]
  %v125 = vld [vmem:[%s2 + $0x14] sm:$0xf]
  %v126 = vld [vmem:[%s2 + $0x18] sm:$0xf]
  %v127 = vld [vmem:[%s2 + $0x1c] sm:$0xf]
  %v128 = vld [vmem:[%s6] sm:$0x1]
  %v130 = vlaneseq
  %v131 = vshrl.u32 %v130, 7
  %v132 = vsub.s32 0, %v131
  %v133 = vrot.slane %v128, %v132
  %v143 = vunpack.c.l.b16 %v120
  %v144 = vunpack.c.l.b16 %v121
  %v145 = vunpack.c.l.b16 %v122
  %v146 = vunpack.c.l.b16 %v123
  %v147 = vunpack.c.l.b16 %v124
  %v148 = vunpack.c.l.b16 %v125
  %v149 = vunpack.c.l.b16 %v126
  %v150 = vunpack.c.l.b16 %v127
  %v151 = vpack.c.b16 %v144, %v143
  %v152 = vpack.c.b16 %v146, %v145
  %v153 = vpack.c.b16 %v148, %v147
  %v154 = vpack.c.b16 %v150, %v149
  %159 = vmatprep.subr.bf16.mxu0 0
  %160 = vmatpush1.bf16.msra.mxu0 %v151
  %161 = vmatprep.subr.bf16.mxu0 0
  %162 = vmatpush1.bf16.msra.mxu0 %v152
  %163 = vmatprep.subr.bf16.mxu0 0
  %164 = vmatpush1.bf16.msra.mxu0 %v153
  %165 = vmatprep.subr.bf16.mxu0 0
  %166 = vmatpush1.bf16.msra.mxu0 %v154
  %167 = vmatprep.subr.bf16.mxu0 0
  %168 = vmatpush1.bf16.msra.mxu0 0
  %169 = vmatprep.subr.bf16.mxu0 0
  %170 = vmatpush1.bf16.msra.mxu0 0
  %171 = vmatprep.subr.bf16.mxu0 0
  %172 = vmatpush1.bf16.msra.mxu0 0
  %173 = vmatprep.subr.bf16.mxu0 0
  %174 = vmatpush1.bf16.msra.mxu0 0
  %175 = vmatprep.subr.bf16.mxu0 0
  %176 = vmatpush1.bf16.msra.mxu0 0
  %177 = vmatprep.subr.bf16.mxu0 0
  %178 = vmatpush1.bf16.msra.mxu0 0
  %179 = vmatprep.subr.bf16.mxu0 0
  %180 = vmatpush1.bf16.msra.mxu0 0
  %181 = vmatprep.subr.bf16.mxu0 0
  %182 = vmatpush1.bf16.msra.mxu0 0
  %183 = vmatprep.subr.bf16.mxu0 0
  %184 = vmatpush1.bf16.msra.mxu0 0
  %185 = vmatprep.subr.bf16.mxu0 0
  %186 = vmatpush1.bf16.msra.mxu0 0
  %187 = vmatprep.subr.bf16.mxu0 0
  %188 = vmatpush1.bf16.msra.mxu0 0
  %189 = vmatprep.subr.bf16.mxu0 0
  %190 = vmatpush1.bf16.msra.mxu0 0
  %191 = vmatprep.mubr.bf16.mxu0 0
  %192 = vmatmul.mubr.bf16.gmra.mrb[0].mxu0 %v77
  %v193 = vpop.f32.mrb[0].mxu0
  %v194 = vadd.f32 %v133, %v193
  %v195 = vpop.f32.mrb[0].mxu0
  %v196 = vpop.f32.mrb[0].mxu0
  %v197 = vadd.f32 %v133, %v196
  %v198 = vpop.f32.mrb[0].mxu0
  %199 = vdwg.mxu0
  %v200 = vld [vmem:[%s3] sm:$0xf]
  %v201 = vld [vmem:[%s3 + $0x4] sm:$0xf]
  %v202 = vld [vmem:[%s3 + $0x8] sm:$0xf]
  %v203 = vld [vmem:[%s3 + $0xc] sm:$0xf]
  %v204 = vld [vmem:[%s4] sm:$0xf]
  %v205 = vld [vmem:[%s4 + $0x4] sm:$0xf]
  %v206 = vld [vmem:[%s4 + $0x8] sm:$0xf]
  %v207 = vld [vmem:[%s4 + $0xc] sm:$0xf]
  %v208 = vld [vmem:[%s7] sm:$0x1]
  %v210 = vlaneseq
  %v211 = vshrl.u32 %v210, 7
  %v212 = vsub.s32 0, %v211
  %v213 = vrot.slane %v208, %v212
  %v215 = vld [vmem:[%s8] sm:$0x1]
  %v217 = vlaneseq
  %v218 = vshrl.u32 %v217, 7
  %v219 = vsub.s32 0, %v218
  %v220 = vrot.slane %v215, %v219
  %v226 = vunpack.c.l.b16 %v200
  %v227 = vunpack.c.l.b16 %v201
  %v228 = vunpack.c.l.b16 %v202
  %v229 = vunpack.c.l.b16 %v203
  %v230 = vpack.c.b16 %v227, %v226
  %v231 = vpack.c.b16 %v229, %v228
  %vm234 = vcmask 261120
  %v236 = vsel %vm234, 0, 0
  %238 = vmatprep.subr.bf16.mxu0 0
  %239 = vmatpush1.bf16.msra.mxu0 %v230
  %240 = vmatprep.subr.bf16.mxu0 0
  %241 = vmatpush1.bf16.msra.mxu0 %v231
  %242 = vmatprep.subr.bf16.mxu0 0
  %243 = vmatpush1.bf16.msra.mxu0 0
  %244 = vmatprep.subr.bf16.mxu0 0
  %245 = vmatpush1.bf16.msra.mxu0 0
  %246 = vmatprep.subr.bf16.mxu0 0
  %247 = vmatpush1.bf16.msra.mxu0 0
  %248 = vmatprep.subr.bf16.mxu0 0
  %249 = vmatpush1.bf16.msra.mxu0 0
  %250 = vmatprep.subr.bf16.mxu0 0
  %251 = vmatpush1.bf16.msra.mxu0 0
  %252 = vmatprep.subr.bf16.mxu0 0
  %253 = vmatpush1.bf16.msra.mxu0 0
  %254 = vmatprep.subr.bf16.mxu0 0
  %255 = vmatpush1.bf16.msra.mxu0 0
  %256 = vmatprep.subr.bf16.mxu0 0
  %257 = vmatpush1.bf16.msra.mxu0 0
  %258 = vmatprep.subr.bf16.mxu0 0
  %259 = vmatpush1.bf16.msra.mxu0 0
  %260 = vmatprep.subr.bf16.mxu0 0
  %261 = vmatpush1.bf16.msra.mxu0 0
  %262 = vmatprep.subr.bf16.mxu0 0
  %263 = vmatpush1.bf16.msra.mxu0 0
  %264 = vmatprep.subr.bf16.mxu0 0
  %265 = vmatpush1.bf16.msra.mxu0 0
  %266 = vmatprep.subr.bf16.mxu0 0
  %267 = vmatpush1.bf16.msra.mxu0 0
  %268 = vmatprep.subr.bf16.mxu0 0
  %269 = vmatpush1.bf16.msra.mxu0 0
  %270 = vmatprep.mubr.bf16.mxu0 0
  %271 = vmatmul.mubr.bf16.gmra.mrb[0].mxu0 %v236
  %v272 = vpop.f32.mrb[0].mxu0
  %v273 = vadd.f32 %v213, %v272
  %v274 = vpop.f32.mrb[0].mxu0
  %v275 = vpop.f32.mrb[0].mxu0
  %v276 = vpop.f32.mrb[0].mxu0
  %277 = vdwg.mxu0
  %v282 = vunpack.c.l.b16 %v204
  %v283 = vunpack.c.l.b16 %v205
  %v284 = vunpack.c.l.b16 %v206
  %v285 = vunpack.c.l.b16 %v207
  %v286 = vpack.c.b16 %v283, %v282
  %v287 = vpack.c.b16 %v285, %v284
  %290 = vmatprep.subr.bf16.mxu0 0
  %291 = vmatpush1.bf16.msra.mxu0 %v286
  %292 = vmatprep.subr.bf16.mxu0 0
  %293 = vmatpush1.bf16.msra.mxu0 %v287
  %294 = vmatprep.subr.bf16.mxu0 0
  %295 = vmatpush1.bf16.msra.mxu0 0
  %296 = vmatprep.subr.bf16.mxu0 0
  %297 = vmatpush1.bf16.msra.mxu0 0
  %298 = vmatprep.subr.bf16.mxu0 0
  %299 = vmatpush1.bf16.msra.mxu0 0
  %300 = vmatprep.subr.bf16.mxu0 0
  %301 = vmatpush1.bf16.msra.mxu0 0
  %302 = vmatprep.subr.bf16.mxu0 0
  %303 = vmatpush1.bf16.msra.mxu0 0
  %304 = vmatprep.subr.bf16.mxu0 0
  %305 = vmatpush1.bf16.msra.mxu0 0
  %306 = vmatprep.subr.bf16.mxu0 0
  %307 = vmatpush1.bf16.msra.mxu0 0
  %308 = vmatprep.subr.bf16.mxu0 0
  %309 = vmatpush1.bf16.msra.mxu0 0
  %310 = vmatprep.subr.bf16.mxu0 0
  %311 = vmatpush1.bf16.msra.mxu0 0
  %312 = vmatprep.subr.bf16.mxu0 0
  %313 = vmatpush1.bf16.msra.mxu0 0
  %314 = vmatprep.subr.bf16.mxu0 0
  %315 = vmatpush1.bf16.msra.mxu0 0
  %316 = vmatprep.subr.bf16.mxu0 0
  %317 = vmatpush1.bf16.msra.mxu0 0
  %318 = vmatprep.subr.bf16.mxu0 0
  %319 = vmatpush1.bf16.msra.mxu0 0
  %320 = vmatprep.subr.bf16.mxu0 0
  %321 = vmatpush1.bf16.msra.mxu0 0
  %322 = vmatprep.mubr.bf16.mxu0 0
  %323 = vmatmul.mubr.bf16.gmra.mrb[0].mxu0 %v236
  %v324 = vpop.f32.mrb[0].mxu0
  %v325 = vadd.f32 %v220, %v324
  %v326 = vpop.f32.mrb[0].mxu0
  %v327 = vpop.f32.mrb[0].mxu0
  %v328 = vpop.f32.mrb[0].mxu0
  %329 = vdwg.mxu0
  %v330 = vadd.f32 %v114, %v273
  %v331 = vxor.u32 %v330, 2147483648
  %v332 = vmul.f32 %v331, 1.442695
  %v333 = vpow.pop %v332
  %v334 = vadd.f32 %v333, 1.0
  %v335 = vrcp.pop %v334
  %v336 = vmul.f32 1.0, %v335
  %338 = vrot.lane.b32.xlu0 %v273, 64
  %v339 = vpop.permute.xlu0 %338
  %v341 = vmul.f32 %v336, %v339
  %343 = vrot.lane.b32.xlu0 %v341, 64
  %v344 = vpop.permute.xlu0 %343
  %v346 = vadd.f32 %v114, %v344
  %v347 = vtanh.pop %v346
  %v348 = vsub.f32 1.0, %v336
  %350 = vrot.lane.b32.xlu0 %v347, 96
  %v351 = vpop.permute.xlu0 %350
  %v353 = vmul.f32 %v348, %v351
  %v354 = vmul.f32 %v336, 0.0
  %v355 = vadd.f32 %v353, %v354
  %v357 = vrot.slane %v325, 2
  %v359 = vadd.f32 %v197, %v357
  %v360 = vxor.u32 %v359, 2147483648
  %v361 = vmul.f32 %v360, 1.442695
  %v362 = vpow.pop %v361
  %v363 = vadd.f32 %v362, 1.0
  %v364 = vrcp.pop %v363
  %v365 = vmul.f32 1.0, %v364
  %366 = vrot.lane.b32.xlu0 %v357, 64
  %v367 = vpop.permute.xlu0 %366
  %v369 = vmul.f32 %v365, %v367
  %371 = vrot.lane.b32.xlu0 %v369, 64
  %v372 = vpop.permute.xlu0 %371
  %v374 = vadd.f32 %v197, %v372
  %v375 = vtanh.pop %v374
  %v376 = vsub.f32 1.0, %v365
  %378 = vrot.lane.b32.xlu0 %v375, 96
  %v379 = vpop.permute.xlu0 %378
  %v381 = vmul.f32 %v376, %v379
  %v382 = vmul.f32 %v365, 0.0
  %v383 = vadd.f32 %v381, %v382
  %385 = vrot.lane.b32.xlu0 %v355, 96
  %v386 = vpop.permute.xlu0 %385
  %vm388 = vcmask 254976
  %389 = vst.msk [vmem:[%s9] sm:$0x3] %vm388, %v386
  %vm390 = vcmask 523526
  %391 = vst.msk [vmem:[%s9 + $0x8] sm:$0xc0] %vm390, %v383
  %v392 = vpack.c.bf16 %v355, %v355
  %394 = vrot.lane.b32.xlu0 %v392, 96
  %v395 = vpop.permute.xlu0 %394
  %v397 = vsel %vm234, %v395, 0
  %399 = vmatprep.subr.bf16.mxu0 0
  %400 = vmatpush1.bf16.msra.mxu0 %v230
  %401 = vmatprep.subr.bf16.mxu0 0
  %402 = vmatpush1.bf16.msra.mxu0 %v231
  %403 = vmatprep.subr.bf16.mxu0 0
  %404 = vmatpush1.bf16.msra.mxu0 0
  %405 = vmatprep.subr.bf16.mxu0 0
  %406 = vmatpush1.bf16.msra.mxu0 0
  %407 = vmatprep.subr.bf16.mxu0 0
  %408 = vmatpush1.bf16.msra.mxu0 0
  %409 = vmatprep.subr.bf16.mxu0 0
  %410 = vmatpush1.bf16.msra.mxu0 0
  %411 = vmatprep.subr.bf16.mxu0 0
  %412 = vmatpush1.bf16.msra.mxu0 0
  %413 = vmatprep.subr.bf16.mxu0 0
  %414 = vmatpush1.bf16.msra.mxu0 0
  %415 = vmatprep.subr.bf16.mxu0 0
  %416 = vmatpush1.bf16.msra.mxu0 0
  %417 = vmatprep.subr.bf16.mxu0 0
  %418 = vmatpush1.bf16.msra.mxu0 0
  %419 = vmatprep.subr.bf16.mxu0 0
  %420 = vmatpush1.bf16.msra.mxu0 0
  %421 = vmatprep.subr.bf16.mxu0 0
  %422 = vmatpush1.bf16.msra.mxu0 0
  %423 = vmatprep.subr.bf16.mxu0 0
  %424 = vmatpush1.bf16.msra.mxu0 0
  %425 = vmatprep.subr.bf16.mxu0 0
  %426 = vmatpush1.bf16.msra.mxu0 0
  %427 = vmatprep.subr.bf16.mxu0 0
  %428 = vmatpush1.bf16.msra.mxu0 0
  %429 = vmatprep.subr.bf16.mxu0 0
  %430 = vmatpush1.bf16.msra.mxu0 0
  %431 = vmatprep.mubr.bf16.mxu0 0
  %432 = vmatmul.mubr.bf16.gmra.mrb[0].mxu0 %v397
  %v433 = vpop.f32.mrb[0].mxu0
  %v434 = vadd.f32 %v213, %v433
  %v435 = vpop.f32.mrb[0].mxu0
  %v436 = vpop.f32.mrb[0].mxu0
  %v437 = vpop.f32.mrb[0].mxu0
  %438 = vdwg.mxu0
  %v439 = vpack.c.bf16 %v383, %v383
  %v441 = vrot.slane %v439, 3
  %442 = vrot.lane.b32.xlu0 %v441, 96
  %v443 = vpop.permute.xlu0 %442
  %v445 = vsel %vm234, %v443, 0
  %447 = vmatprep.subr.bf16.mxu0 0
  %448 = vmatpush1.bf16.msra.mxu0 %v286
  %449 = vmatprep.subr.bf16.mxu0 0
  %450 = vmatpush1.bf16.msra.mxu0 %v287
  %451 = vmatprep.subr.bf16.mxu0 0
  %452 = vmatpush1.bf16.msra.mxu0 0
  %453 = vmatprep.subr.bf16.mxu0 0
  %454 = vmatpush1.bf16.msra.mxu0 0
  %455 = vmatprep.subr.bf16.mxu0 0
  %456 = vmatpush1.bf16.msra.mxu0 0
  %457 = vmatprep.subr.bf16.mxu0 0
  %458 = vmatpush1.bf16.msra.mxu0 0
  %459 = vmatprep.subr.bf16.mxu0 0
  %460 = vmatpush1.bf16.msra.mxu0 0
  %461 = vmatprep.subr.bf16.mxu0 0
  %462 = vmatpush1.bf16.msra.mxu0 0
  %463 = vmatprep.subr.bf16.mxu0 0
  %464 = vmatpush1.bf16.msra.mxu0 0
  %465 = vmatprep.subr.bf16.mxu0 0
  %466 = vmatpush1.bf16.msra.mxu0 0
  %467 = vmatprep.subr.bf16.mxu0 0
  %468 = vmatpush1.bf16.msra.mxu0 0
  %469 = vmatprep.subr.bf16.mxu0 0
  %470 = vmatpush1.bf16.msra.mxu0 0
  %471 = vmatprep.subr.bf16.mxu0 0
  %472 = vmatpush1.bf16.msra.mxu0 0
  %473 = vmatprep.subr.bf16.mxu0 0
  %474 = vmatpush1.bf16.msra.mxu0 0
  %475 = vmatprep.subr.bf16.mxu0 0
  %476 = vmatpush1.bf16.msra.mxu0 0
  %477 = vmatprep.subr.bf16.mxu0 0
  %478 = vmatpush1.bf16.msra.mxu0 0
  %479 = vmatprep.mubr.bf16.mxu0 0
  %480 = vmatmul.mubr.bf16.gmra.mrb[0].mxu0 %v445
  %v481 = vpop.f32.mrb[0].mxu0
  %v482 = vadd.f32 %v220, %v481
  %v483 = vpop.f32.mrb[0].mxu0
  %v484 = vpop.f32.mrb[0].mxu0
  %v485 = vpop.f32.mrb[0].mxu0
  %486 = vdwg.mxu0
  %v488 = vrot.slane %v434, 6
  %v490 = vadd.f32 %v114, %v488
  %v491 = vxor.u32 %v490, 2147483648
  %v492 = vmul.f32 %v491, 1.442695
  %v493 = vpow.pop %v492
  %v494 = vadd.f32 %v493, 1.0
  %v495 = vrcp.pop %v494
  %v496 = vmul.f32 1.0, %v495
  %497 = vrot.lane.b32.xlu0 %v488, 64
  %v498 = vpop.permute.xlu0 %497
  %v500 = vmul.f32 %v496, %v498
  %502 = vrot.lane.b32.xlu0 %v500, 64
  %v503 = vpop.permute.xlu0 %502
  %v505 = vadd.f32 %v114, %v503
  %v506 = vtanh.pop %v505
  %v507 = vsub.f32 1.0, %v496
  %509 = vrot.lane.b32.xlu0 %v506, 96
  %v510 = vpop.permute.xlu0 %509
  %v512 = vmul.f32 %v507, %v510
  %v513 = vrot.slane %v355, 6
  %v515 = vmul.f32 %v496, %v513
  %v516 = vadd.f32 %v512, %v515
  %v518 = vrot.slane %v482, 4
  %v520 = vadd.f32 %v197, %v518
  %v521 = vxor.u32 %v520, 2147483648
  %v522 = vmul.f32 %v521, 1.442695
  %v523 = vpow.pop %v522
  %v524 = vadd.f32 %v523, 1.0
  %v525 = vrcp.pop %v524
  %v526 = vmul.f32 1.0, %v525
  %527 = vrot.lane.b32.xlu0 %v518, 64
  %v528 = vpop.permute.xlu0 %527
  %v530 = vmul.f32 %v526, %v528
  %532 = vrot.lane.b32.xlu0 %v530, 64
  %v533 = vpop.permute.xlu0 %532
  %v535 = vadd.f32 %v197, %v533
  %v536 = vtanh.pop %v535
  %v537 = vsub.f32 1.0, %v526
  %539 = vrot.lane.b32.xlu0 %v536, 96
  %v540 = vpop.permute.xlu0 %539
  %v542 = vmul.f32 %v537, %v540
  %v544 = vrot.slane %v383, 2
  %v546 = vmul.f32 %v526, %v544
  %v547 = vadd.f32 %v542, %v546
  %549 = vrot.lane.b32.xlu0 %v516, 96
  %v550 = vpop.permute.xlu0 %549
  %vm552 = vcmask 257026
  %553 = vst.msk [vmem:[%s9] sm:$0xc] %vm552, %v550
  %vm554 = vcmask 521476
  %555 = vst.msk [vmem:[%s9 + $0x8] sm:$0x30] %vm554, %v547
  %v556 = vpack.c.bf16 %v516, %v516
  %v558 = vrot.slane %v556, 1
  %559 = vrot.lane.b32.xlu0 %v558, 96
  %v560 = vpop.permute.xlu0 %559
  %v562 = vsel %vm234, %v560, 0
  %564 = vmatprep.subr.bf16.mxu0 0
  %565 = vmatpush1.bf16.msra.mxu0 %v230
  %566 = vmatprep.subr.bf16.mxu0 0
  %567 = vmatpush1.bf16.msra.mxu0 %v231
  %568 = vmatprep.subr.bf16.mxu0 0
  %569 = vmatpush1.bf16.msra.mxu0 0
  %570 = vmatprep.subr.bf16.mxu0 0
  %571 = vmatpush1.bf16.msra.mxu0 0
  %572 = vmatprep.subr.bf16.mxu0 0
  %573 = vmatpush1.bf16.msra.mxu0 0
  %574 = vmatprep.subr.bf16.mxu0 0
  %575 = vmatpush1.bf16.msra.mxu0 0
  %576 = vmatprep.subr.bf16.mxu0 0
  %577 = vmatpush1.bf16.msra.mxu0 0
  %578 = vmatprep.subr.bf16.mxu0 0
  %579 = vmatpush1.bf16.msra.mxu0 0
  %580 = vmatprep.subr.bf16.mxu0 0
  %581 = vmatpush1.bf16.msra.mxu0 0
  %582 = vmatprep.subr.bf16.mxu0 0
  %583 = vmatpush1.bf16.msra.mxu0 0
  %584 = vmatprep.subr.bf16.mxu0 0
  %585 = vmatpush1.bf16.msra.mxu0 0
  %586 = vmatprep.subr.bf16.mxu0 0
  %587 = vmatpush1.bf16.msra.mxu0 0
  %588 = vmatprep.subr.bf16.mxu0 0
  %589 = vmatpush1.bf16.msra.mxu0 0
  %590 = vmatprep.subr.bf16.mxu0 0
  %591 = vmatpush1.bf16.msra.mxu0 0
  %592 = vmatprep.subr.bf16.mxu0 0
  %593 = vmatpush1.bf16.msra.mxu0 0
  %594 = vmatprep.subr.bf16.mxu0 0
  %595 = vmatpush1.bf16.msra.mxu0 0
  %596 = vmatprep.mubr.bf16.mxu0 0
  %597 = vmatmul.mubr.bf16.gmra.mrb[0].mxu0 %v562
  %v598 = vpop.f32.mrb[0].mxu0
  %v599 = vadd.f32 %v213, %v598
  %v600 = vpop.f32.mrb[0].mxu0
  %v601 = vpop.f32.mrb[0].mxu0
  %v602 = vpop.f32.mrb[0].mxu0
  %603 = vdwg.mxu0
  %v604 = vpack.c.bf16 %v547, %v547
  %v606 = vrot.slane %v604, 2
  %607 = vrot.lane.b32.xlu0 %v606, 96
  %v608 = vpop.permute.xlu0 %607
  %v610 = vsel %vm234, %v608, 0
  %612 = vmatprep.subr.bf16.mxu0 0
  %613 = vmatpush1.bf16.msra.mxu0 %v286
  %614 = vmatprep.subr.bf16.mxu0 0
  %615 = vmatpush1.bf16.msra.mxu0 %v287
  %616 = vmatprep.subr.bf16.mxu0 0
  %617 = vmatpush1.bf16.msra.mxu0 0
  %618 = vmatprep.subr.bf16.mxu0 0
  %619 = vmatpush1.bf16.msra.mxu0 0
  %620 = vmatprep.subr.bf16.mxu0 0
  %621 = vmatpush1.bf16.msra.mxu0 0
  %622 = vmatprep.subr.bf16.mxu0 0
  %623 = vmatpush1.bf16.msra.mxu0 0
  %624 = vmatprep.subr.bf16.mxu0 0
  %625 = vmatpush1.bf16.msra.mxu0 0
  %626 = vmatprep.subr.bf16.mxu0 0
  %627 = vmatpush1.bf16.msra.mxu0 0
  %628 = vmatprep.subr.bf16.mxu0 0
  %629 = vmatpush1.bf16.msra.mxu0 0
  %630 = vmatprep.subr.bf16.mxu0 0
  %631 = vmatpush1.bf16.msra.mxu0 0
  %632 = vmatprep.subr.bf16.mxu0 0
  %633 = vmatpush1.bf16.msra.mxu0 0
  %634 = vmatprep.subr.bf16.mxu0 0
  %635 = vmatpush1.bf16.msra.mxu0 0
  %636 = vmatprep.subr.bf16.mxu0 0
  %637 = vmatpush1.bf16.msra.mxu0 0
  %638 = vmatprep.subr.bf16.mxu0 0
  %639 = vmatpush1.bf16.msra.mxu0 0
  %640 = vmatprep.subr.bf16.mxu0 0
  %641 = vmatpush1.bf16.msra.mxu0 0
  %642 = vmatprep.subr.bf16.mxu0 0
  %643 = vmatpush1.bf16.msra.mxu0 0
  %644 = vmatprep.mubr.bf16.mxu0 0
  %645 = vmatmul.mubr.bf16.gmra.mrb[0].mxu0 %v610
  %v646 = vpop.f32.mrb[0].mxu0
  %v647 = vadd.f32 %v220, %v646
  %v648 = vpop.f32.mrb[0].mxu0
  %v649 = vpop.f32.mrb[0].mxu0
  %v650 = vpop.f32.mrb[0].mxu0
  %651 = vdwg.mxu0
  %v653 = vrot.slane %v599, 4
  %v655 = vadd.f32 %v114, %v653
  %v656 = vxor.u32 %v655, 2147483648
  %v657 = vmul.f32 %v656, 1.442695
  %v658 = vpow.pop %v657
  %v659 = vadd.f32 %v658, 1.0
  %v660 = vrcp.pop %v659
  %v661 = vmul.f32 1.0, %v660
  %662 = vrot.lane.b32.xlu0 %v653, 64
  %v663 = vpop.permute.xlu0 %662
  %v665 = vmul.f32 %v661, %v663
  %667 = vrot.lane.b32.xlu0 %v665, 64
  %v668 = vpop.permute.xlu0 %667
  %v670 = vadd.f32 %v114, %v668
  %v671 = vtanh.pop %v670
  %v672 = vsub.f32 1.0, %v661
  %674 = vrot.lane.b32.xlu0 %v671, 96
  %v675 = vpop.permute.xlu0 %674
  %v677 = vmul.f32 %v672, %v675
  %v678 = vrot.slane %v516, 6
  %v680 = vmul.f32 %v661, %v678
  %v681 = vadd.f32 %v677, %v680
  %v683 = vrot.slane %v647, 6
  %v685 = vadd.f32 %v197, %v683
  %v686 = vxor.u32 %v685, 2147483648
  %v687 = vmul.f32 %v686, 1.442695
  %v688 = vpow.pop %v687
  %v689 = vadd.f32 %v688, 1.0
  %v690 = vrcp.pop %v689
  %v691 = vmul.f32 1.0, %v690
  %692 = vrot.lane.b32.xlu0 %v683, 64
  %v693 = vpop.permute.xlu0 %692
  %v695 = vmul.f32 %v691, %v693
  %697 = vrot.lane.b32.xlu0 %v695, 64
  %v698 = vpop.permute.xlu0 %697
  %v700 = vadd.f32 %v197, %v698
  %v701 = vtanh.pop %v700
  %v702 = vsub.f32 1.0, %v691
  %704 = vrot.lane.b32.xlu0 %v701, 96
  %v705 = vpop.permute.xlu0 %704
  %v707 = vmul.f32 %v702, %v705
  %v709 = vrot.slane %v547, 2
  %v711 = vmul.f32 %v691, %v709
  %v712 = vadd.f32 %v707, %v711
  %714 = vrot.lane.b32.xlu0 %v681, 96
  %v715 = vpop.permute.xlu0 %714
  %vm717 = vcmask 259076
  %718 = vst.msk [vmem:[%s9] sm:$0x30] %vm717, %v715
  %vm719 = vcmask 519426
  %720 = vst.msk [vmem:[%s9 + $0x8] sm:$0xc] %vm719, %v712
  %v721 = vpack.c.bf16 %v681, %v681
  %v723 = vrot.slane %v721, 2
  %724 = vrot.lane.b32.xlu0 %v723, 96
  %v725 = vpop.permute.xlu0 %724
  %v727 = vsel %vm234, %v725, 0
  %729 = vmatprep.subr.bf16.mxu0 0
  %730 = vmatpush1.bf16.msra.mxu0 %v230
  %731 = vmatprep.subr.bf16.mxu0 0
  %732 = vmatpush1.bf16.msra.mxu0 %v231
  %733 = vmatprep.subr.bf16.mxu0 0
  %734 = vmatpush1.bf16.msra.mxu0 0
  %735 = vmatprep.subr.bf16.mxu0 0
  %736 = vmatpush1.bf16.msra.mxu0 0
  %737 = vmatprep.subr.bf16.mxu0 0
  %738 = vmatpush1.bf16.msra.mxu0 0
  %739 = vmatprep.subr.bf16.mxu0 0
  %740 = vmatpush1.bf16.msra.mxu0 0
  %741 = vmatprep.subr.bf16.mxu0 0
  %742 = vmatpush1.bf16.msra.mxu0 0
  %743 = vmatprep.subr.bf16.mxu0 0
  %744 = vmatpush1.bf16.msra.mxu0 0
  %745 = vmatprep.subr.bf16.mxu0 0
  %746 = vmatpush1.bf16.msra.mxu0 0
  %747 = vmatprep.subr.bf16.mxu0 0
  %748 = vmatpush1.bf16.msra.mxu0 0
  %749 = vmatprep.subr.bf16.mxu0 0
  %750 = vmatpush1.bf16.msra.mxu0 0
  %751 = vmatprep.subr.bf16.mxu0 0
  %752 = vmatpush1.bf16.msra.mxu0 0
  %753 = vmatprep.subr.bf16.mxu0 0
  %754 = vmatpush1.bf16.msra.mxu0 0
  %755 = vmatprep.subr.bf16.mxu0 0
  %756 = vmatpush1.bf16.msra.mxu0 0
  %757 = vmatprep.subr.bf16.mxu0 0
  %758 = vmatpush1.bf16.msra.mxu0 0
  %759 = vmatprep.subr.bf16.mxu0 0
  %760 = vmatpush1.bf16.msra.mxu0 0
  %761 = vmatprep.mubr.bf16.mxu0 0
  %762 = vmatmul.mubr.bf16.gmra.mrb[0].mxu0 %v727
  %v763 = vpop.f32.mrb[0].mxu0
  %v764 = vadd.f32 %v213, %v763
  %v765 = vpop.f32.mrb[0].mxu0
  %v766 = vpop.f32.mrb[0].mxu0
  %v767 = vpop.f32.mrb[0].mxu0
  %768 = vdwg.mxu0
  %v769 = vpack.c.bf16 %v712, %v712
  %v771 = vrot.slane %v769, 1
  %772 = vrot.lane.b32.xlu0 %v771, 96
  %v773 = vpop.permute.xlu0 %772
  %v775 = vsel %vm234, %v773, 0
  %777 = vmatprep.subr.bf16.mxu0 0
  %778 = vmatpush1.bf16.msra.mxu0 %v286
  %779 = vmatprep.subr.bf16.mxu0 0
  %780 = vmatpush1.bf16.msra.mxu0 %v287
  %781 = vmatprep.subr.bf16.mxu0 0
  %782 = vmatpush1.bf16.msra.mxu0 0
  %783 = vmatprep.subr.bf16.mxu0 0
  %784 = vmatpush1.bf16.msra.mxu0 0
  %785 = vmatprep.subr.bf16.mxu0 0
  %786 = vmatpush1.bf16.msra.mxu0 0
  %787 = vmatprep.subr.bf16.mxu0 0
  %788 = vmatpush1.bf16.msra.mxu0 0
  %789 = vmatprep.subr.bf16.mxu0 0
  %790 = vmatpush1.bf16.msra.mxu0 0
  %791 = vmatprep.subr.bf16.mxu0 0
  %792 = vmatpush1.bf16.msra.mxu0 0
  %793 = vmatprep.subr.bf16.mxu0 0
  %794 = vmatpush1.bf16.msra.mxu0 0
  %795 = vmatprep.subr.bf16.mxu0 0
  %796 = vmatpush1.bf16.msra.mxu0 0
  %797 = vmatprep.subr.bf16.mxu0 0
  %798 = vmatpush1.bf16.msra.mxu0 0
  %799 = vmatprep.subr.bf16.mxu0 0
  %800 = vmatpush1.bf16.msra.mxu0 0
  %801 = vmatprep.subr.bf16.mxu0 0
  %802 = vmatpush1.bf16.msra.mxu0 0
  %803 = vmatprep.subr.bf16.mxu0 0
  %804 = vmatpush1.bf16.msra.mxu0 0
  %805 = vmatprep.subr.bf16.mxu0 0
  %806 = vmatpush1.bf16.msra.mxu0 0
  %807 = vmatprep.subr.bf16.mxu0 0
  %808 = vmatpush1.bf16.msra.mxu0 0
  %809 = vmatprep.mubr.bf16.mxu0 0
  %810 = vmatmul.mubr.bf16.gmra.mrb[0].mxu0 %v775
  %v811 = vpop.f32.mrb[0].mxu0
  %v812 = vadd.f32 %v220, %v811
  %v813 = vpop.f32.mrb[0].mxu0
  %v814 = vpop.f32.mrb[0].mxu0
  %v815 = vpop.f32.mrb[0].mxu0
  %816 = vdwg.mxu0
  %v818 = vrot.slane %v764, 2
  %v820 = vadd.f32 %v114, %v818
  %v821 = vxor.u32 %v820, 2147483648
  %v822 = vmul.f32 %v821, 1.442695
  %v823 = vpow.pop %v822
  %v824 = vadd.f32 %v823, 1.0
  %v825 = vrcp.pop %v824
  %v826 = vmul.f32 1.0, %v825
  %827 = vrot.lane.b32.xlu0 %v818, 64
  %v828 = vpop.permute.xlu0 %827
  %v830 = vmul.f32 %v826, %v828
  %832 = vrot.lane.b32.xlu0 %v830, 64
  %v833 = vpop.permute.xlu0 %832
  %v835 = vadd.f32 %v114, %v833
  %v836 = vtanh.pop %v835
  %v837 = vsub.f32 1.0, %v826
  %839 = vrot.lane.b32.xlu0 %v836, 96
  %v840 = vpop.permute.xlu0 %839
  %v842 = vmul.f32 %v837, %v840
  %v843 = vrot.slane %v681, 6
  %v845 = vmul.f32 %v826, %v843
  %v846 = vadd.f32 %v842, %v845
  %v847 = vadd.f32 %v197, %v812
  %v848 = vxor.u32 %v847, 2147483648
  %v849 = vmul.f32 %v848, 1.442695
  %v850 = vpow.pop %v849
  %v851 = vadd.f32 %v850, 1.0
  %v852 = vrcp.pop %v851
  %v853 = vmul.f32 1.0, %v852
  %855 = vrot.lane.b32.xlu0 %v812, 64
  %v856 = vpop.permute.xlu0 %855
  %v858 = vmul.f32 %v853, %v856
  %860 = vrot.lane.b32.xlu0 %v858, 64
  %v861 = vpop.permute.xlu0 %860
  %v863 = vadd.f32 %v197, %v861
  %v864 = vtanh.pop %v863
  %v865 = vsub.f32 1.0, %v853
  %867 = vrot.lane.b32.xlu0 %v864, 96
  %v868 = vpop.permute.xlu0 %867
  %v870 = vmul.f32 %v865, %v868
  %v872 = vrot.slane %v712, 2
  %v874 = vmul.f32 %v853, %v872
  %v875 = vadd.f32 %v870, %v874
  %877 = vrot.lane.b32.xlu0 %v846, 96
  %v878 = vpop.permute.xlu0 %877
  %vm880 = vcmask 261126
  %881 = vst.msk [vmem:[%s9] sm:$0xc0] %vm880, %v878
  %vm882 = vcmask 517376
  %883 = vst.msk [vmem:[%s9 + $0x8] sm:$0x3] %vm882, %v875
  %v884 = vpack.c.bf16 %v846, %v846
  %v886 = vrot.slane %v884, 3
  %887 = vrot.lane.b32.xlu0 %v886, 96
  %v888 = vpop.permute.xlu0 %887
  %v890 = vsel %vm234, %v888, 0
  %892 = vmatprep.subr.bf16.mxu0 0
  %893 = vmatpush1.bf16.msra.mxu0 %v230
  %894 = vmatprep.subr.bf16.mxu0 0
  %895 = vmatpush1.bf16.msra.mxu0 %v231
  %896 = vmatprep.subr.bf16.mxu0 0
  %897 = vmatpush1.bf16.msra.mxu0 0
  %898 = vmatprep.subr.bf16.mxu0 0
  %899 = vmatpush1.bf16.msra.mxu0 0
  %900 = vmatprep.subr.bf16.mxu0 0
  %901 = vmatpush1.bf16.msra.mxu0 0
  %902 = vmatprep.subr.bf16.mxu0 0
  %903 = vmatpush1.bf16.msra.mxu0 0
  %904 = vmatprep.subr.bf16.mxu0 0
  %905 = vmatpush1.bf16.msra.mxu0 0
  %906 = vmatprep.subr.bf16.mxu0 0
  %907 = vmatpush1.bf16.msra.mxu0 0
  %908 = vmatprep.subr.bf16.mxu0 0
  %909 = vmatpush1.bf16.msra.mxu0 0
  %910 = vmatprep.subr.bf16.mxu0 0
  %911 = vmatpush1.bf16.msra.mxu0 0
  %912 = vmatprep.subr.bf16.mxu0 0
  %913 = vmatpush1.bf16.msra.mxu0 0
  %914 = vmatprep.subr.bf16.mxu0 0
  %915 = vmatpush1.bf16.msra.mxu0 0
  %916 = vmatprep.subr.bf16.mxu0 0
  %917 = vmatpush1.bf16.msra.mxu0 0
  %918 = vmatprep.subr.bf16.mxu0 0
  %919 = vmatpush1.bf16.msra.mxu0 0
  %920 = vmatprep.subr.bf16.mxu0 0
  %921 = vmatpush1.bf16.msra.mxu0 0
  %922 = vmatprep.subr.bf16.mxu0 0
  %923 = vmatpush1.bf16.msra.mxu0 0
  %924 = vmatprep.mubr.bf16.mxu0 0
  %925 = vmatmul.mubr.bf16.gmra.mrb[0].mxu0 %v890
  %v926 = vpop.f32.mrb[0].mxu0
  %v927 = vadd.f32 %v213, %v926
  %v928 = vpop.f32.mrb[0].mxu0
  %v929 = vpop.f32.mrb[0].mxu0
  %v930 = vpop.f32.mrb[0].mxu0
  %931 = vdwg.mxu0
  %v932 = vpack.c.bf16 %v875, %v875
  %934 = vrot.lane.b32.xlu0 %v932, 96
  %v935 = vpop.permute.xlu0 %934
  %v937 = vsel %vm234, %v935, 0
  %939 = vmatprep.subr.bf16.mxu0 0
  %940 = vmatpush1.bf16.msra.mxu0 %v286
  %941 = vmatprep.subr.bf16.mxu0 0
  %942 = vmatpush1.bf16.msra.mxu0 %v287
  %943 = vmatprep.subr.bf16.mxu0 0
  %944 = vmatpush1.bf16.msra.mxu0 0
  %945 = vmatprep.subr.bf16.mxu0 0
  %946 = vmatpush1.bf16.msra.mxu0 0
  %947 = vmatprep.subr.bf16.mxu0 0
  %948 = vmatpush1.bf16.msra.mxu0 0
  %949 = vmatprep.subr.bf16.mxu0 0
  %950 = vmatpush1.bf16.msra.mxu0 0
  %951 = vmatprep.subr.bf16.mxu0 0
  %952 = vmatpush1.bf16.msra.mxu0 0
  %953 = vmatprep.subr.bf16.mxu0 0
  %954 = vmatpush1.bf16.msra.mxu0 0
  %955 = vmatprep.subr.bf16.mxu0 0
  %956 = vmatpush1.bf16.msra.mxu0 0
  %957 = vmatprep.subr.bf16.mxu0 0
  %958 = vmatpush1.bf16.msra.mxu0 0
  %959 = vmatprep.subr.bf16.mxu0 0
  %960 = vmatpush1.bf16.msra.mxu0 0
  %961 = vmatprep.subr.bf16.mxu0 0
  %962 = vmatpush1.bf16.msra.mxu0 0
  %963 = vmatprep.subr.bf16.mxu0 0
  %964 = vmatpush1.bf16.msra.mxu0 0
  %965 = vmatprep.subr.bf16.mxu0 0
  %966 = vmatpush1.bf16.msra.mxu0 0
  %967 = vmatprep.subr.bf16.mxu0 0
  %968 = vmatpush1.bf16.msra.mxu0 0
  %969 = vmatprep.subr.bf16.mxu0 0
  %970 = vmatpush1.bf16.msra.mxu0 0
  %971 = vmatprep.mubr.bf16.mxu0 0
  %972 = vmatmul.mubr.bf16.gmra.mrb[0].mxu0 %v937
  %v973 = vpop.f32.mrb[0].mxu0
  %v974 = vadd.f32 %v220, %v973
  %v975 = vpop.f32.mrb[0].mxu0
  %v976 = vpop.f32.mrb[0].mxu0
  %v977 = vpop.f32.mrb[0].mxu0
  %978 = vdwg.mxu0
  %v979 = vadd.f32 %v117, %v927
  %v980 = vxor.u32 %v979, 2147483648
  %v981 = vmul.f32 %v980, 1.442695
  %v982 = vpow.pop %v981
  %v983 = vadd.f32 %v982, 1.0
  %v984 = vrcp.pop %v983
  %v985 = vmul.f32 1.0, %v984
  %987 = vrot.lane.b32.xlu0 %v927, 64
  %v988 = vpop.permute.xlu0 %987
  %v990 = vmul.f32 %v985, %v988
  %992 = vrot.lane.b32.xlu0 %v990, 64
  %v993 = vpop.permute.xlu0 %992
  %v995 = vadd.f32 %v117, %v993
  %v996 = vtanh.pop %v995
  %v997 = vsub.f32 1.0, %v985
  %999 = vrot.lane.b32.xlu0 %v996, 96
  %v1000 = vpop.permute.xlu0 %999
  %v1002 = vmul.f32 %v997, %v1000
  %v1003 = vrot.slane %v846, 6
  %v1005 = vmul.f32 %v985, %v1003
  %v1006 = vadd.f32 %v1002, %v1005
  %v1008 = vrot.slane %v974, 2
  %v1010 = vadd.f32 %v194, %v1008
  %v1011 = vxor.u32 %v1010, 2147483648
  %v1012 = vmul.f32 %v1011, 1.442695
  %v1013 = vpow.pop %v1012
  %v1014 = vadd.f32 %v1013, 1.0
  %v1015 = vrcp.pop %v1014
  %v1016 = vmul.f32 1.0, %v1015
  %1017 = vrot.lane.b32.xlu0 %v1008, 64
  %v1018 = vpop.permute.xlu0 %1017
  %v1020 = vmul.f32 %v1016, %v1018
  %1022 = vrot.lane.b32.xlu0 %v1020, 64
  %v1023 = vpop.permute.xlu0 %1022
  %v1025 = vadd.f32 %v194, %v1023
  %v1026 = vtanh.pop %v1025
  %v1027 = vsub.f32 1.0, %v1016
  %1029 = vrot.lane.b32.xlu0 %v1026, 96
  %v1030 = vpop.permute.xlu0 %1029
  %v1032 = vmul.f32 %v1027, %v1030
  %v1034 = vrot.slane %v875, 2
  %v1036 = vmul.f32 %v1016, %v1034
  %v1037 = vadd.f32 %v1032, %v1036
  %1039 = vrot.lane.b32.xlu0 %v1006, 96
  %v1040 = vpop.permute.xlu0 %1039
  %1042 = vst.msk [vmem:[%s9 + $0x8] sm:$0x3] %vm388, %v1040
  %1043 = vst.msk [vmem:[%s9] sm:$0xc0] %vm390, %v1037
  %v1044 = vpack.c.bf16 %v1006, %v1006
  %1046 = vrot.lane.b32.xlu0 %v1044, 96
  %v1047 = vpop.permute.xlu0 %1046
  %v1049 = vsel %vm234, %v1047, 0
  %1051 = vmatprep.subr.bf16.mxu0 0
  %1052 = vmatpush1.bf16.msra.mxu0 %v230
  %1053 = vmatprep.subr.bf16.mxu0 0
  %1054 = vmatpush1.bf16.msra.mxu0 %v231
  %1055 = vmatprep.subr.bf16.mxu0 0
  %1056 = vmatpush1.bf16.msra.mxu0 0
  %1057 = vmatprep.subr.bf16.mxu0 0
  %1058 = vmatpush1.bf16.msra.mxu0 0
  %1059 = vmatprep.subr.bf16.mxu0 0
  %1060 = vmatpush1.bf16.msra.mxu0 0
  %1061 = vmatprep.subr.bf16.mxu0 0
  %1062 = vmatpush1.bf16.msra.mxu0 0
  %1063 = vmatprep.subr.bf16.mxu0 0
  %1064 = vmatpush1.bf16.msra.mxu0 0
  %1065 = vmatprep.subr.bf16.mxu0 0
  %1066 = vmatpush1.bf16.msra.mxu0 0
  %1067 = vmatprep.subr.bf16.mxu0 0
  %1068 = vmatpush1.bf16.msra.mxu0 0
  %1069 = vmatprep.subr.bf16.mxu0 0
  %1070 = vmatpush1.bf16.msra.mxu0 0
  %1071 = vmatprep.subr.bf16.mxu0 0
  %1072 = vmatpush1.bf16.msra.mxu0 0
  %1073 = vmatprep.subr.bf16.mxu0 0
  %1074 = vmatpush1.bf16.msra.mxu0 0
  %1075 = vmatprep.subr.bf16.mxu0 0
  %1076 = vmatpush1.bf16.msra.mxu0 0
  %1077 = vmatprep.subr.bf16.mxu0 0
  %1078 = vmatpush1.bf16.msra.mxu0 0
  %1079 = vmatprep.subr.bf16.mxu0 0
  %1080 = vmatpush1.bf16.msra.mxu0 0
  %1081 = vmatprep.subr.bf16.mxu0 0
  %1082 = vmatpush1.bf16.msra.mxu0 0
  %1083 = vmatprep.mubr.bf16.mxu0 0
  %1084 = vmatmul.mubr.bf16.gmra.mrb[0].mxu0 %v1049
  %v1085 = vpop.f32.mrb[0].mxu0
  %v1086 = vadd.f32 %v213, %v1085
  %v1087 = vpop.f32.mrb[0].mxu0
  %v1088 = vpop.f32.mrb[0].mxu0
  %v1089 = vpop.f32.mrb[0].mxu0
  %1090 = vdwg.mxu0
  %v1091 = vpack.c.bf16 %v1037, %v1037
  %v1093 = vrot.slane %v1091, 3
  %1094 = vrot.lane.b32.xlu0 %v1093, 96
  %v1095 = vpop.permute.xlu0 %1094
  %v1097 = vsel %vm234, %v1095, 0
  %1099 = vmatprep.subr.bf16.mxu0 0
  %1100 = vmatpush1.bf16.msra.mxu0 %v286
  %1101 = vmatprep.subr.bf16.mxu0 0
  %1102 = vmatpush1.bf16.msra.mxu0 %v287
  %1103 = vmatprep.subr.bf16.mxu0 0
  %1104 = vmatpush1.bf16.msra.mxu0 0
  %1105 = vmatprep.subr.bf16.mxu0 0
  %1106 = vmatpush1.bf16.msra.mxu0 0
  %1107 = vmatprep.subr.bf16.mxu0 0
  %1108 = vmatpush1.bf16.msra.mxu0 0
  %1109 = vmatprep.subr.bf16.mxu0 0
  %1110 = vmatpush1.bf16.msra.mxu0 0
  %1111 = vmatprep.subr.bf16.mxu0 0
  %1112 = vmatpush1.bf16.msra.mxu0 0
  %1113 = vmatprep.subr.bf16.mxu0 0
  %1114 = vmatpush1.bf16.msra.mxu0 0
  %1115 = vmatprep.subr.bf16.mxu0 0
  %1116 = vmatpush1.bf16.msra.mxu0 0
  %1117 = vmatprep.subr.bf16.mxu0 0
  %1118 = vmatpush1.bf16.msra.mxu0 0
  %1119 = vmatprep.subr.bf16.mxu0 0
  %1120 = vmatpush1.bf16.msra.mxu0 0
  %1121 = vmatprep.subr.bf16.mxu0 0
  %1122 = vmatpush1.bf16.msra.mxu0 0
  %1123 = vmatprep.subr.bf16.mxu0 0
  %1124 = vmatpush1.bf16.msra.mxu0 0
  %1125 = vmatprep.subr.bf16.mxu0 0
  %1126 = vmatpush1.bf16.msra.mxu0 0
  %1127 = vmatprep.subr.bf16.mxu0 0
  %1128 = vmatpush1.bf16.msra.mxu0 0
  %1129 = vmatprep.subr.bf16.mxu0 0
  %1130 = vmatpush1.bf16.msra.mxu0 0
  %1131 = vmatprep.mubr.bf16.mxu0 0
  %1132 = vmatmul.mubr.bf16.gmra.mrb[0].mxu0 %v1097
  %v1133 = vpop.f32.mrb[0].mxu0
  %v1134 = vadd.f32 %v220, %v1133
  %v1135 = vpop.f32.mrb[0].mxu0
  %v1136 = vpop.f32.mrb[0].mxu0
  %v1137 = vpop.f32.mrb[0].mxu0
  %1138 = vdwg.mxu0
  %v1140 = vrot.slane %v1086, 6
  %v1142 = vadd.f32 %v117, %v1140
  %v1143 = vxor.u32 %v1142, 2147483648
  %v1144 = vmul.f32 %v1143, 1.442695
  %v1145 = vpow.pop %v1144
  %v1146 = vadd.f32 %v1145, 1.0
  %v1147 = vrcp.pop %v1146
  %v1148 = vmul.f32 1.0, %v1147
  %1149 = vrot.lane.b32.xlu0 %v1140, 64
  %v1150 = vpop.permute.xlu0 %1149
  %v1152 = vmul.f32 %v1148, %v1150
  %1154 = vrot.lane.b32.xlu0 %v1152, 64
  %v1155 = vpop.permute.xlu0 %1154
  %v1157 = vadd.f32 %v117, %v1155
  %v1158 = vtanh.pop %v1157
  %v1159 = vsub.f32 1.0, %v1148
  %1161 = vrot.lane.b32.xlu0 %v1158, 96
  %v1162 = vpop.permute.xlu0 %1161
  %v1164 = vmul.f32 %v1159, %v1162
  %v1165 = vrot.slane %v1006, 6
  %v1167 = vmul.f32 %v1148, %v1165
  %v1168 = vadd.f32 %v1164, %v1167
  %v1170 = vrot.slane %v1134, 4
  %v1172 = vadd.f32 %v194, %v1170
  %v1173 = vxor.u32 %v1172, 2147483648
  %v1174 = vmul.f32 %v1173, 1.442695
  %v1175 = vpow.pop %v1174
  %v1176 = vadd.f32 %v1175, 1.0
  %v1177 = vrcp.pop %v1176
  %v1178 = vmul.f32 1.0, %v1177
  %1179 = vrot.lane.b32.xlu0 %v1170, 64
  %v1180 = vpop.permute.xlu0 %1179
  %v1182 = vmul.f32 %v1178, %v1180
  %1184 = vrot.lane.b32.xlu0 %v1182, 64
  %v1185 = vpop.permute.xlu0 %1184
  %v1187 = vadd.f32 %v194, %v1185
  %v1188 = vtanh.pop %v1187
  %v1189 = vsub.f32 1.0, %v1178
  %1191 = vrot.lane.b32.xlu0 %v1188, 96
  %v1192 = vpop.permute.xlu0 %1191
  %v1194 = vmul.f32 %v1189, %v1192
  %v1196 = vrot.slane %v1037, 2
  %v1198 = vmul.f32 %v1178, %v1196
  %v1199 = vadd.f32 %v1194, %v1198
  %1201 = vrot.lane.b32.xlu0 %v1168, 96
  %v1202 = vpop.permute.xlu0 %1201
  %1204 = vst.msk [vmem:[%s9 + $0x8] sm:$0xc] %vm552, %v1202
  %1205 = vst.msk [vmem:[%s9] sm:$0x30] %vm554, %v1199
  %v1206 = vpack.c.bf16 %v1168, %v1168
  %v1208 = vrot.slane %v1206, 1
  %1209 = vrot.lane.b32.xlu0 %v1208, 96
  %v1210 = vpop.permute.xlu0 %1209
  %v1212 = vsel %vm234, %v1210, 0
  %1214 = vmatprep.subr.bf16.mxu0 0
  %1215 = vmatpush1.bf16.msra.mxu0 %v230
  %1216 = vmatprep.subr.bf16.mxu0 0
  %1217 = vmatpush1.bf16.msra.mxu0 %v231
  %1218 = vmatprep.subr.bf16.mxu0 0
  %1219 = vmatpush1.bf16.msra.mxu0 0
  %1220 = vmatprep.subr.bf16.mxu0 0
  %1221 = vmatpush1.bf16.msra.mxu0 0
  %1222 = vmatprep.subr.bf16.mxu0 0
  %1223 = vmatpush1.bf16.msra.mxu0 0
  %1224 = vmatprep.subr.bf16.mxu0 0
  %1225 = vmatpush1.bf16.msra.mxu0 0
  %1226 = vmatprep.subr.bf16.mxu0 0
  %1227 = vmatpush1.bf16.msra.mxu0 0
  %1228 = vmatprep.subr.bf16.mxu0 0
  %1229 = vmatpush1.bf16.msra.mxu0 0
  %1230 = vmatprep.subr.bf16.mxu0 0
  %1231 = vmatpush1.bf16.msra.mxu0 0
  %1232 = vmatprep.subr.bf16.mxu0 0
  %1233 = vmatpush1.bf16.msra.mxu0 0
  %1234 = vmatprep.subr.bf16.mxu0 0
  %1235 = vmatpush1.bf16.msra.mxu0 0
  %1236 = vmatprep.subr.bf16.mxu0 0
  %1237 = vmatpush1.bf16.msra.mxu0 0
  %1238 = vmatprep.subr.bf16.mxu0 0
  %1239 = vmatpush1.bf16.msra.mxu0 0
  %1240 = vmatprep.subr.bf16.mxu0 0
  %1241 = vmatpush1.bf16.msra.mxu0 0
  %1242 = vmatprep.subr.bf16.mxu0 0
  %1243 = vmatpush1.bf16.msra.mxu0 0
  %1244 = vmatprep.subr.bf16.mxu0 0
  %1245 = vmatpush1.bf16.msra.mxu0 0
  %1246 = vmatprep.mubr.bf16.mxu0 0
  %1247 = vmatmul.mubr.bf16.gmra.mrb[0].mxu0 %v1212
  %v1248 = vpop.f32.mrb[0].mxu0
  %v1249 = vadd.f32 %v213, %v1248
  %v1250 = vpop.f32.mrb[0].mxu0
  %v1251 = vpop.f32.mrb[0].mxu0
  %v1252 = vpop.f32.mrb[0].mxu0
  %1253 = vdwg.mxu0
  %v1254 = vpack.c.bf16 %v1199, %v1199
  %v1256 = vrot.slane %v1254, 2
  %1257 = vrot.lane.b32.xlu0 %v1256, 96
  %v1258 = vpop.permute.xlu0 %1257
  %v1260 = vsel %vm234, %v1258, 0
  %1262 = vmatprep.subr.bf16.mxu0 0
  %1263 = vmatpush1.bf16.msra.mxu0 %v286
  %1264 = vmatprep.subr.bf16.mxu0 0
  %1265 = vmatpush1.bf16.msra.mxu0 %v287
  %1266 = vmatprep.subr.bf16.mxu0 0
  %1267 = vmatpush1.bf16.msra.mxu0 0
  %1268 = vmatprep.subr.bf16.mxu0 0
  %1269 = vmatpush1.bf16.msra.mxu0 0
  %1270 = vmatprep.subr.bf16.mxu0 0
  %1271 = vmatpush1.bf16.msra.mxu0 0
  %1272 = vmatprep.subr.bf16.mxu0 0
  %1273 = vmatpush1.bf16.msra.mxu0 0
  %1274 = vmatprep.subr.bf16.mxu0 0
  %1275 = vmatpush1.bf16.msra.mxu0 0
  %1276 = vmatprep.subr.bf16.mxu0 0
  %1277 = vmatpush1.bf16.msra.mxu0 0
  %1278 = vmatprep.subr.bf16.mxu0 0
  %1279 = vmatpush1.bf16.msra.mxu0 0
  %1280 = vmatprep.subr.bf16.mxu0 0
  %1281 = vmatpush1.bf16.msra.mxu0 0
  %1282 = vmatprep.subr.bf16.mxu0 0
  %1283 = vmatpush1.bf16.msra.mxu0 0
  %1284 = vmatprep.subr.bf16.mxu0 0
  %1285 = vmatpush1.bf16.msra.mxu0 0
  %1286 = vmatprep.subr.bf16.mxu0 0
  %1287 = vmatpush1.bf16.msra.mxu0 0
  %1288 = vmatprep.subr.bf16.mxu0 0
  %1289 = vmatpush1.bf16.msra.mxu0 0
  %1290 = vmatprep.subr.bf16.mxu0 0
  %1291 = vmatpush1.bf16.msra.mxu0 0
  %1292 = vmatprep.subr.bf16.mxu0 0
  %1293 = vmatpush1.bf16.msra.mxu0 0
  %1294 = vmatprep.mubr.bf16.mxu0 0
  %1295 = vmatmul.mubr.bf16.gmra.mrb[0].mxu0 %v1260
  %v1296 = vpop.f32.mrb[0].mxu0
  %v1297 = vadd.f32 %v220, %v1296
  %v1298 = vpop.f32.mrb[0].mxu0
  %v1299 = vpop.f32.mrb[0].mxu0
  %v1300 = vpop.f32.mrb[0].mxu0
  %1301 = vdwg.mxu0
  %v1303 = vrot.slane %v1249, 4
  %v1305 = vadd.f32 %v117, %v1303
  %v1306 = vxor.u32 %v1305, 2147483648
  %v1307 = vmul.f32 %v1306, 1.442695
  %v1308 = vpow.pop %v1307
  %v1309 = vadd.f32 %v1308, 1.0
  %v1310 = vrcp.pop %v1309
  %v1311 = vmul.f32 1.0, %v1310
  %1312 = vrot.lane.b32.xlu0 %v1303, 64
  %v1313 = vpop.permute.xlu0 %1312
  %v1315 = vmul.f32 %v1311, %v1313
  %1317 = vrot.lane.b32.xlu0 %v1315, 64
  %v1318 = vpop.permute.xlu0 %1317
  %v1320 = vadd.f32 %v117, %v1318
  %v1321 = vtanh.pop %v1320
  %v1322 = vsub.f32 1.0, %v1311
  %1324 = vrot.lane.b32.xlu0 %v1321, 96
  %v1325 = vpop.permute.xlu0 %1324
  %v1327 = vmul.f32 %v1322, %v1325
  %v1328 = vrot.slane %v1168, 6
  %v1330 = vmul.f32 %v1311, %v1328
  %v1331 = vadd.f32 %v1327, %v1330
  %v1333 = vrot.slane %v1297, 6
  %v1335 = vadd.f32 %v194, %v1333
  %v1336 = vxor.u32 %v1335, 2147483648
  %v1337 = vmul.f32 %v1336, 1.442695
  %v1338 = vpow.pop %v1337
  %v1339 = vadd.f32 %v1338, 1.0
  %v1340 = vrcp.pop %v1339
  %v1341 = vmul.f32 1.0, %v1340
  %1342 = vrot.lane.b32.xlu0 %v1333, 64
  %v1343 = vpop.permute.xlu0 %1342
  %v1345 = vmul.f32 %v1341, %v1343
  %1347 = vrot.lane.b32.xlu0 %v1345, 64
  %v1348 = vpop.permute.xlu0 %1347
  %v1350 = vadd.f32 %v194, %v1348
  %v1351 = vtanh.pop %v1350
  %v1352 = vsub.f32 1.0, %v1341
  %1354 = vrot.lane.b32.xlu0 %v1351, 96
  %v1355 = vpop.permute.xlu0 %1354
  %v1357 = vmul.f32 %v1352, %v1355
  %v1359 = vrot.slane %v1199, 2
  %v1361 = vmul.f32 %v1341, %v1359
  %v1362 = vadd.f32 %v1357, %v1361
  %1364 = vrot.lane.b32.xlu0 %v1331, 96
  %v1365 = vpop.permute.xlu0 %1364
  %1367 = vst.msk [vmem:[%s9 + $0x8] sm:$0x30] %vm717, %v1365
  %1368 = vst.msk [vmem:[%s9] sm:$0xc] %vm719, %v1362
  %v1369 = vpack.c.bf16 %v1331, %v1331
  %v1371 = vrot.slane %v1369, 2
  %1372 = vrot.lane.b32.xlu0 %v1371, 96
  %v1373 = vpop.permute.xlu0 %1372
  %v1375 = vsel %vm234, %v1373, 0
  %1377 = vmatprep.subr.bf16.mxu0 0
  %1378 = vmatpush1.bf16.msra.mxu0 %v230
  %1379 = vmatprep.subr.bf16.mxu0 0
  %1380 = vmatpush1.bf16.msra.mxu0 %v231
  %1381 = vmatprep.subr.bf16.mxu0 0
  %1382 = vmatpush1.bf16.msra.mxu0 0
  %1383 = vmatprep.subr.bf16.mxu0 0
  %1384 = vmatpush1.bf16.msra.mxu0 0
  %1385 = vmatprep.subr.bf16.mxu0 0
  %1386 = vmatpush1.bf16.msra.mxu0 0
  %1387 = vmatprep.subr.bf16.mxu0 0
  %1388 = vmatpush1.bf16.msra.mxu0 0
  %1389 = vmatprep.subr.bf16.mxu0 0
  %1390 = vmatpush1.bf16.msra.mxu0 0
  %1391 = vmatprep.subr.bf16.mxu0 0
  %1392 = vmatpush1.bf16.msra.mxu0 0
  %1393 = vmatprep.subr.bf16.mxu0 0
  %1394 = vmatpush1.bf16.msra.mxu0 0
  %1395 = vmatprep.subr.bf16.mxu0 0
  %1396 = vmatpush1.bf16.msra.mxu0 0
  %1397 = vmatprep.subr.bf16.mxu0 0
  %1398 = vmatpush1.bf16.msra.mxu0 0
  %1399 = vmatprep.subr.bf16.mxu0 0
  %1400 = vmatpush1.bf16.msra.mxu0 0
  %1401 = vmatprep.subr.bf16.mxu0 0
  %1402 = vmatpush1.bf16.msra.mxu0 0
  %1403 = vmatprep.subr.bf16.mxu0 0
  %1404 = vmatpush1.bf16.msra.mxu0 0
  %1405 = vmatprep.subr.bf16.mxu0 0
  %1406 = vmatpush1.bf16.msra.mxu0 0
  %1407 = vmatprep.subr.bf16.mxu0 0
  %1408 = vmatpush1.bf16.msra.mxu0 0
  %1409 = vmatprep.mubr.bf16.mxu0 0
  %1410 = vmatmul.mubr.bf16.gmra.mrb[0].mxu0 %v1375
  %v1411 = vpop.f32.mrb[0].mxu0
  %v1412 = vadd.f32 %v213, %v1411
  %v1413 = vpop.f32.mrb[0].mxu0
  %v1414 = vpop.f32.mrb[0].mxu0
  %v1415 = vpop.f32.mrb[0].mxu0
  %1416 = vdwg.mxu0
  %v1417 = vpack.c.bf16 %v1362, %v1362
  %v1419 = vrot.slane %v1417, 1
  %1420 = vrot.lane.b32.xlu0 %v1419, 96
  %v1421 = vpop.permute.xlu0 %1420
  %v1423 = vsel %vm234, %v1421, 0
  %1425 = vmatprep.subr.bf16.mxu0 0
  %1426 = vmatpush1.bf16.msra.mxu0 %v286
  %1427 = vmatprep.subr.bf16.mxu0 0
  %1428 = vmatpush1.bf16.msra.mxu0 %v287
  %1429 = vmatprep.subr.bf16.mxu0 0
  %1430 = vmatpush1.bf16.msra.mxu0 0
  %1431 = vmatprep.subr.bf16.mxu0 0
  %1432 = vmatpush1.bf16.msra.mxu0 0
  %1433 = vmatprep.subr.bf16.mxu0 0
  %1434 = vmatpush1.bf16.msra.mxu0 0
  %1435 = vmatprep.subr.bf16.mxu0 0
  %1436 = vmatpush1.bf16.msra.mxu0 0
  %1437 = vmatprep.subr.bf16.mxu0 0
  %1438 = vmatpush1.bf16.msra.mxu0 0
  %1439 = vmatprep.subr.bf16.mxu0 0
  %1440 = vmatpush1.bf16.msra.mxu0 0
  %1441 = vmatprep.subr.bf16.mxu0 0
  %1442 = vmatpush1.bf16.msra.mxu0 0
  %1443 = vmatprep.subr.bf16.mxu0 0
  %1444 = vmatpush1.bf16.msra.mxu0 0
  %1445 = vmatprep.subr.bf16.mxu0 0
  %1446 = vmatpush1.bf16.msra.mxu0 0
  %1447 = vmatprep.subr.bf16.mxu0 0
  %1448 = vmatpush1.bf16.msra.mxu0 0
  %1449 = vmatprep.subr.bf16.mxu0 0
  %1450 = vmatpush1.bf16.msra.mxu0 0
  %1451 = vmatprep.subr.bf16.mxu0 0
  %1452 = vmatpush1.bf16.msra.mxu0 0
  %1453 = vmatprep.subr.bf16.mxu0 0
  %1454 = vmatpush1.bf16.msra.mxu0 0
  %1455 = vmatprep.subr.bf16.mxu0 0
  %1456 = vmatpush1.bf16.msra.mxu0 0
  %1457 = vmatprep.mubr.bf16.mxu0 0
  %1458 = vmatmul.mubr.bf16.gmra.mrb[0].mxu0 %v1423
  %v1459 = vpop.f32.mrb[0].mxu0
  %v1460 = vadd.f32 %v220, %v1459
  %v1461 = vpop.f32.mrb[0].mxu0
  %v1462 = vpop.f32.mrb[0].mxu0
  %v1463 = vpop.f32.mrb[0].mxu0
  %1464 = vdwg.mxu0
  %v1466 = vrot.slane %v1412, 2
  %v1468 = vadd.f32 %v117, %v1466
  %v1469 = vxor.u32 %v1468, 2147483648
  %v1470 = vmul.f32 %v1469, 1.442695
  %v1471 = vpow.pop %v1470
  %v1472 = vadd.f32 %v1471, 1.0
  %v1473 = vrcp.pop %v1472
  %v1474 = vmul.f32 1.0, %v1473
  %1475 = vrot.lane.b32.xlu0 %v1466, 64
  %v1476 = vpop.permute.xlu0 %1475
  %v1478 = vmul.f32 %v1474, %v1476
  %1480 = vrot.lane.b32.xlu0 %v1478, 64
  %v1481 = vpop.permute.xlu0 %1480
  %v1483 = vadd.f32 %v117, %v1481
  %v1484 = vtanh.pop %v1483
  %v1485 = vsub.f32 1.0, %v1474
  %1487 = vrot.lane.b32.xlu0 %v1484, 96
  %v1488 = vpop.permute.xlu0 %1487
  %v1490 = vmul.f32 %v1485, %v1488
  %v1491 = vrot.slane %v1331, 6
  %v1493 = vmul.f32 %v1474, %v1491
  %v1494 = vadd.f32 %v1490, %v1493
  %v1495 = vadd.f32 %v194, %v1460
  %v1496 = vxor.u32 %v1495, 2147483648
  %v1497 = vmul.f32 %v1496, 1.442695
  %v1498 = vpow.pop %v1497
  %v1499 = vadd.f32 %v1498, 1.0
  %v1500 = vrcp.pop %v1499
  %v1501 = vmul.f32 1.0, %v1500
  %1503 = vrot.lane.b32.xlu0 %v1460, 64
  %v1504 = vpop.permute.xlu0 %1503
  %v1506 = vmul.f32 %v1501, %v1504
  %1508 = vrot.lane.b32.xlu0 %v1506, 64
  %v1509 = vpop.permute.xlu0 %1508
  %v1511 = vadd.f32 %v194, %v1509
  %v1512 = vtanh.pop %v1511
  %v1513 = vsub.f32 1.0, %v1501
  %1515 = vrot.lane.b32.xlu0 %v1512, 96
  %v1516 = vpop.permute.xlu0 %1515
  %v1518 = vmul.f32 %v1513, %v1516
  %v1520 = vrot.slane %v1362, 2
  %v1522 = vmul.f32 %v1501, %v1520
  %v1523 = vadd.f32 %v1518, %v1522
  %1525 = vrot.lane.b32.xlu0 %v1494, 96
  %v1526 = vpop.permute.xlu0 %1525
  %1528 = vst.msk [vmem:[%s9 + $0x8] sm:$0xc0] %vm880, %v1526
  %1529 = vst.msk [vmem:[%s9] sm:$0x3] %vm882, %v1523
  // Predicated region
  $region38: #{rnns_forward.3} parent=0 // pred_check
    _
  $region39: #{rnns_forward.3} parent=0 // pred_check_branch
    %1531 = sbr.rel (0) target = $region41
  $region40: #{rnns_forward.3} parent=0 // pred_region
    _
  $region41: #{rnns_forward.3} parent=0 // pred_fallthru
    _
  // Predicated region
  $region42: #{rnns_forward.3} parent=0 // pred_check
    _
  $region43: #{rnns_forward.3} parent=0 // pred_check_branch
    %1533 = sbr.rel (0) target = $region45
  $region44: #{rnns_forward.3} parent=0 // pred_region
    _
  $region45: #{rnns_forward.3} parent=0 // pred_fallthru
    _

</llo_original>
